<compile_context>
chip_gen: v7x
topology: tpu7x:2x2x1
jax: 0.10.0
libtpu: 0.0.40
codegen_flags: <defaults>
</compile_context>

<pallas_src>
import jax
import jax.numpy as jnp
import numpy as np
from jax import lax
from jax.experimental import pallas as pl
from jax.experimental.pallas import tpu as pltpu


# ------------------------------ stage 1 kernel -------------------------------

def _conv1_pool_kernel(x_ref, w_ref, b_ref, o_ref):
    """conv1 (3x3 'same', tap-packed K=27->32) + bias + 2x2 maxpool.

    x_ref: (1, th, W, 32)  bf16  tap-packed input rows (halo folded by packing).
    w_ref: (32, 64)        bf16  tap-packed conv1 weights.
    b_ref: (1, 64)         f32
    o_ref: (1, th//2, W//2 + 2, 64) bf16  (W zero-padded for conv2's halo)
    """
    th, W = x_ref.shape[1], x_ref.shape[2]
    th2, W2 = th // 2, W // 2

    x = x_ref[0].reshape(th * W, 32)                       # bf16, straight to MXU
    acc = jnp.dot(x, w_ref[...], preferred_element_type=jnp.float32)
    acc = acc + b_ref[...]                                  # (th*W, 64) f32

    # 2x2 max pool on the value (no scratch round trip).
    a = acc.reshape(th2, 2, W, 64)                          # row (H) pool
    rp = jnp.maximum(a[:, 0], a[:, 1])                      # (th2, W, 64)
    c = rp.reshape(th2, W2, 2, 64)                          # column (W) pool
    pooled = jnp.maximum(c[:, :, 0], c[:, :, 1]).astype(o_ref.dtype)

    zcol = jnp.zeros((th2, 1, 64), o_ref.dtype)
    o_ref[0, :, 0:1, :] = zcol                              # conv2 left halo col
    o_ref[0, :, 1:1 + W2, :] = pooled
    o_ref[0, :, 1 + W2:2 + W2, :] = zcol                    # conv2 right halo col


# ------------------------------ stage 2 kernel -------------------------------

def _conv2_pool_conv3_kernel(top_ref, body_ref, bot_ref, w_ref, b_ref,
                             w3_ref, b3_ref, o_ref):
    """conv2 (3x3 'same', dh taps folded -> K=192) + bias + 2x2 maxpool + conv3.

    top_ref/bot_ref: (1, 1, W2+2, 64)   bf16  row-halo lines (zeroed at edges)
    body_ref:        (1, th2, W2+2, 64) bf16
    w_ref:           (3, 192, 128)      bf16  dw-major, lane index = dh*64 + cin
    b_ref:           (1, 128) f32 ; w3_ref: (1, 128) f32 ; b3_ref: (1,) f32 SMEM
    o_ref:           (1, th2//2, W2//2) f32
    """
    r, nr = pl.program_id(1), pl.num_programs(1)
    th2, W2p = body_ref.shape[1], body_ref.shape[2]
    W2 = W2p - 2
    th4, W4 = th2 // 2, W2 // 2

    body = body_ref[0]                                      # (th2, W2p, 64) bf16
    # Zero the halo rows at the top / bottom image edge (tiny single rows).
    top_scale = jnp.minimum(r, 1).astype(jnp.float32)
    bot_scale = jnp.minimum(nr - 1 - r, 1).astype(jnp.float32)
    top = (top_ref[0].astype(jnp.float32) * top_scale).astype(body.dtype)
    bot = (bot_ref[0].astype(jnp.float32) * bot_scale).astype(body.dtype)
    stripe = jnp.concatenate([top, body, bot], axis=0)      # (th2+2, W2p, 64)

    # Fold the three dh (row) taps into the contraction (lane) dim: K = 192.
    y = jnp.concatenate([stripe[0:th2], stripe[1:th2 + 1], stripe[2:th2 + 2]],
                        axis=-1)                            # (th2, W2p, 192) bf16

    acc = jnp.zeros((th2 * W2, 128), jnp.float32)
    for dw in range(3):                                     # only 3 sublane shifts
        xs = y[:, dw:dw + W2, :].reshape(th2 * W2, 192)     # bf16
        acc = acc + jnp.dot(xs, w_ref[dw], preferred_element_type=jnp.float32)
    acc = acc + b_ref[...]                                  # (th2*W2, 128) f32

    a = acc.reshape(th4, 2, W2, 128)                        # row pool
    rp = jnp.maximum(a[:, 0], a[:, 1])                      # (th4, W2, 128)
    c = rp.reshape(th4, W4, 2, 128)                         # column pool
    pooled = jnp.maximum(c[:, :, 0], c[:, :, 1])            # (th4, W4, 128) f32

    # conv3 (128 -> 1) as a VPU multiply + lane (channel) reduction.
    depth = jnp.sum(pooled * w3_ref[...], axis=-1) + b3_ref[0]   # (th4, W4)
    o_ref[0] = depth.astype(o_ref.dtype)


# ------------------------------- model forward -------------------------------

def _pick_tile_h4(H4, W4):
    """Largest divisor of H4 giving ~<=1-2k quarter-res pixels per grid step,
    respecting the (8,128) rule on the stage-2 output block."""
    target = max(8, 1024 // max(W4, 1))
    divs = [d for d in range(1, H4 + 1)
            if H4 % d == 0 and (d % 8 == 0 or d == H4)]
    under = [d for d in divs if d <= target]
    return max(under) if under else min(divs)


def stereo_depth_prediction(x_nchw, params):
    B, Cin, H, W = x_nchw.shape
    assert Cin == 3
    assert H % 4 == 0 and W % 16 == 0, "kernels assume H % 4 == 0 and W % 16 == 0"
    H2, W2, H4, W4 = H // 2, W // 2, H // 4, W // 4
    W2p = W2 + 2
    bf16, f32 = jnp.bfloat16, jnp.float32

    tile_h4 = _pick_tile_h4(H4, W4)
    nblk = H4 // tile_h4
    tile_h2, tile_h = 2 * tile_h4, 4 * tile_h4

    # conv1 input: tap-pack the tiny 3-channel image (9 taps * 3 ch -> 27 -> 32
    # lanes) so conv1 becomes a single K=32 matmul and stage 1 needs no halo.
    x = jnp.transpose(x_nchw, (0, 2, 3, 1))                        # (B,H,W,3) f32
    xp = jnp.pad(x, ((0, 0), (1, 1), (1, 1), (0, 0)))
    taps = [xp[:, dh:dh + H, dw:dw + W, :] for dh in range(3) for dw in range(3)]
    x_packed = jnp.concatenate(taps, axis=-1)                      # (B,H,W,27)
    x_packed = jnp.pad(x_packed, ((0, 0), (0, 0), (0, 0), (0, 5))).astype(bf16)

    # Weights: conv1 tap-packed (32,64); conv2 dw-major with dh folded into K.
    w1p = jnp.transpose(params["w1"], (2, 3, 1, 0)).reshape(27, 64)
    w1p = jnp.pad(w1p, ((0, 5), (0, 0))).astype(bf16)              # (32, 64)
    b1 = params["b1"].reshape(1, 64).astype(f32)
    w2p = jnp.transpose(params["w2"], (3, 2, 1, 0)).reshape(3, 192, 128).astype(bf16)
    b2 = params["b2"].reshape(1, 128).astype(f32)
    w3 = params["w3"].reshape(1, 128).astype(f32)
    b3 = params["b3"].reshape(1).astype(f32)

    cparams = pltpu.CompilerParams(
        dimension_semantics=("parallel", "parallel"),   # batch x row-blocks
        vmem_limit_bytes=48 * 1024 * 1024,              # <= physical on v7x too
    )

    # Stage 1: conv1 + bias + 2x2 maxpool, row-blocked -> (B, H2, W2+2, 64) bf16
    pooled1 = pl.pallas_call(
        _conv1_pool_kernel,
        out_shape=jax.ShapeDtypeStruct((B, H2, W2p, 64), bf16),
        grid_spec=pltpu.PrefetchScalarGridSpec(
            num_scalar_prefetch=0,
            grid=(B, nblk),
            in_specs=[
                pl.BlockSpec((1, tile_h, W, 32), lambda b, r: (b, r, 0, 0)),
                pl.BlockSpec((32, 64), lambda b, r: (0, 0)),
                pl.BlockSpec((1, 64), lambda b, r: (0, 0)),
            ],
            out_specs=pl.BlockSpec((1, tile_h2, W2p, 64), lambda b, r: (b, r, 0, 0)),
        ),
        compiler_params=cparams,
    )(x_packed, w1p, b1)

    # Row-halo lines for conv2: single-row BlockSpecs on the same array (block
    # size 1 along H2 => block index == row index), clamped at the image edges
    # and zeroed inside the kernel.
    def top_map(b, r):
        return (b, jnp.maximum(r * tile_h2 - 1, 0), 0, 0)

    def bot_map(b, r):
        return (b, jnp.minimum((r + 1) * tile_h2, H2 - 1), 0, 0)

    # Stage 2: conv2 + bias + 2x2 maxpool + fused conv3 -> (B, H4, W4) f32
    depth = pl.pallas_call(
        _conv2_pool_conv3_kernel,
        out_shape=jax.ShapeDtypeStruct((B, H4, W4), f32),
        grid_spec=pltpu.PrefetchScalarGridSpec(
            num_scalar_prefetch=0,
            grid=(B, nblk),
            in_specs=[
                pl.BlockSpec((1, 1, W2p, 64), top_map),
                pl.BlockSpec((1, tile_h2, W2p, 64), lambda b, r: (b, r, 0, 0)),
                pl.BlockSpec((1, 1, W2p, 64), bot_map),
                pl.BlockSpec((3, 192, 128), lambda b, r: (0, 0, 0)),
                pl.BlockSpec((1, 128), lambda b, r: (0, 0)),
                pl.BlockSpec((1, 128), lambda b, r: (0, 0)),
                pl.BlockSpec(memory_space=pltpu.MemorySpace.SMEM),
            ],
            out_specs=pl.BlockSpec((1, tile_h4, W4), lambda b, r: (b, r, 0)),
        ),
        compiler_params=cparams,
    )(pooled1, pooled1, pooled1, w2p, b2, w3, b3)

    return depth.reshape(B, 1, H4, W4)


def init_params(key):
    ks = jax.random.split(key, 6)

    def w_init(k, shape):
        fan_in = shape[1] * shape[2] * shape[3]
        return jax.random.normal(k, shape, jnp.float32) / jnp.sqrt(jnp.float32(fan_in))

    return {
        "w1": w_init(ks[0], (64, 3, 3, 3)),
        "b1": 0.01 * jax.random.normal(ks[1], (64,), jnp.float32),
        "w2": w_init(ks[2], (128, 64, 3, 3)),
        "b2": 0.01 * jax.random.normal(ks[3], (128,), jnp.float32),
        "w3": w_init(ks[4], (1, 128, 1, 1)),
        "b3": 0.01 * jax.random.normal(ks[5], (1,), jnp.float32),
    }


# ------------------------------ pure-JAX reference ---------------------------

def reference(x_nchw, params):
    """Mirrors the kernel numerics: bf16 conv1/conv2 operands with f32
    accumulation, f32 bias/pooling, f32 channel reduction for conv3."""
    bf16 = jnp.bfloat16

    def conv3x3(x, w, b):
        y = lax.conv_general_dilated(
            x.astype(bf16), w.astype(bf16), (1, 1), [(1, 1), (1, 1)],
            dimension_numbers=("NCHW", "OIHW", "NCHW"),
            preferred_element_type=jnp.float32)
        return y + b.reshape(1, -1, 1, 1)

    def pool(x):
        return lax.reduce_window(x, -jnp.inf, lax.max,
                                 (1, 1, 2, 2), (1, 1, 2, 2), "VALID")

    x1 = pool(conv3x3(x_nchw, params["w1"], params["b1"])).astype(bf16)
    x2 = pool(conv3x3(x1, params["w2"], params["b2"]))
    w3 = params["w3"].reshape(1, 128, 1, 1)
    return jnp.sum(x2 * w3, axis=1, keepdims=True) + params["b3"].reshape(1, 1, 1, 1)


if __name__ == "__main__":
    key = jax.random.PRNGKey(0)
    kx, kp = jax.random.split(key)
    x = jax.random.normal(kx, (2, 3, 16, 16), jnp.float32)   # NCHW like PyTorch
    params = init_params(kp)

    out = jax.jit(stereo_depth_prediction)(x, params)
    out = jax.block_until_ready(out)

    assert out.shape == (2, 1, 4, 4), out.shape
    ref = reference(x, params)
    # Tolerance reflects bf16 matmul operands (reference uses the same numerics).
    np.testing.assert_allclose(np.asarray(out), np.asarray(ref), rtol=2e-2, atol=2e-2)
    print("KERNEL_OK")
</pallas_src>

<mosaic_0001>
module attributes {stable_mosaic.version = 11 : i64} {
  func.func @_conv1_pool_kernel(%arg0: i32, %arg1: i32, %arg2: memref<1x16x16x32xbf16, #tpu.memory_space<vmem>>, %arg3: memref<32x64xbf16, #tpu.memory_space<vmem>>, %arg4: memref<1x64xf32, #tpu.memory_space<vmem>>, %arg5: memref<1x8x10x64xbf16, #tpu.memory_space<vmem>>) attributes {dimension_semantics = [#tpu.dimension_semantics<parallel>, #tpu.dimension_semantics<parallel>], iteration_bounds = array<i64: 2, 1>, scalar_prefetch = 0 : i64, scratch_operands = 0 : i64, tpu.core_type = #tpu.core_type<tc>, window_params = [{transform_indices = @transform_0, window_bounds = array<i64: 1, 16, 16, 32>}, {pipeline_mode = #tpu.pipeline_mode<synchronous>, transform_indices = @transform_1, window_bounds = array<i64: 32, 64>}, {pipeline_mode = #tpu.pipeline_mode<synchronous>, transform_indices = @transform_2, window_bounds = array<i64: 1, 64>}, {transform_indices = @transform_3, window_bounds = array<i64: 1, 8, 10, 64>}]} {
    %c0 = arith.constant 0 : index
    %c0_0 = arith.constant 0 : index
    %c0_1 = arith.constant 0 : index
    %c0_2 = arith.constant 0 : index
    %0 = vector.load %arg2[%c0, %c0_0, %c0_1, %c0_2] : memref<1x16x16x32xbf16, #tpu.memory_space<vmem>>, vector<1x16x16x32xbf16>
    %1 = vector.shape_cast %0 : vector<1x16x16x32xbf16> to vector<16x16x32xbf16>
    %2 = vector.shape_cast %1 : vector<16x16x32xbf16> to vector<256x32xbf16>
    %c0_3 = arith.constant 0 : index
    %c0_4 = arith.constant 0 : index
    %3 = vector.load %arg3[%c0_3, %c0_4] : memref<32x64xbf16, #tpu.memory_space<vmem>>, vector<32x64xbf16>
    %cst = arith.constant dense<0.000000e+00> : vector<256x64xf32>
    %4 = tpu.matmul %2, %3, %cst {dimension_numbers = #tpu.dot_dimension_numbers<[1], [0], [0], [1], [0, 0, 1, 1], [], []>} : vector<256x32xbf16>, vector<32x64xbf16>, vector<256x64xf32> -> vector<256x64xf32>
    %c0_5 = arith.constant 0 : index
    %c0_6 = arith.constant 0 : index
    %5 = vector.load %arg4[%c0_5, %c0_6] : memref<1x64xf32, #tpu.memory_space<vmem>>, vector<1x64xf32>
    %6 = vector.broadcast %5 : vector<1x64xf32> to vector<256x64xf32>
    %7 = arith.addf %4, %6 : vector<256x64xf32>
    %8 = vector.shape_cast %7 : vector<256x64xf32> to vector<8x2x16x64xf32>
    %9 = vector.extract_strided_slice %8 {offsets = [0, 0, 0, 0], sizes = [8, 1, 16, 64], strides = [1, 1, 1, 1]} : vector<8x2x16x64xf32> to vector<8x1x16x64xf32>
    %10 = vector.shape_cast %9 : vector<8x1x16x64xf32> to vector<8x16x64xf32>
    %11 = vector.extract_strided_slice %8 {offsets = [0, 1, 0, 0], sizes = [8, 1, 16, 64], strides = [1, 1, 1, 1]} : vector<8x2x16x64xf32> to vector<8x1x16x64xf32>
    %12 = vector.shape_cast %11 : vector<8x1x16x64xf32> to vector<8x16x64xf32>
    %13 = arith.maximumf %10, %12 : vector<8x16x64xf32>
    %14 = vector.shape_cast %13 : vector<8x16x64xf32> to vector<8x8x2x64xf32>
    %15 = vector.extract_strided_slice %14 {offsets = [0, 0, 0, 0], sizes = [8, 8, 1, 64], strides = [1, 1, 1, 1]} : vector<8x8x2x64xf32> to vector<8x8x1x64xf32>
    %16 = vector.shape_cast %15 : vector<8x8x1x64xf32> to vector<8x8x64xf32>
    %17 = vector.extract_strided_slice %14 {offsets = [0, 0, 1, 0], sizes = [8, 8, 1, 64], strides = [1, 1, 1, 1]} : vector<8x8x2x64xf32> to vector<8x8x1x64xf32>
    %18 = vector.shape_cast %17 : vector<8x8x1x64xf32> to vector<8x8x64xf32>
    %19 = arith.maximumf %16, %18 : vector<8x8x64xf32>
    %20 = arith.truncf %19 : vector<8x8x64xf32> to vector<8x8x64xbf16>
    %cst_7 = arith.constant 0.000000e+00 : bf16
    %21 = vector.broadcast %cst_7 : bf16 to vector<8x1x64xbf16>
    %c0_8 = arith.constant 0 : index
    %c0_9 = arith.constant 0 : index
    %c0_10 = arith.constant 0 : index
    %c0_11 = arith.constant 0 : index
    %22 = vector.load %arg5[%c0_8, %c0_9, %c0_10, %c0_11] : memref<1x8x10x64xbf16, #tpu.memory_space<vmem>>, vector<1x8x1x64xbf16>
    %23 = vector.shape_cast %22 : vector<1x8x1x64xbf16> to vector<8x1x64xbf16>
    %24 = vector.shape_cast %21 : vector<8x1x64xbf16> to vector<1x8x1x64xbf16>
    tpu.vector_store %arg5[%c0_8, %c0_9, %c0_10, %c0_11], %24 {strides = array<i32>} : memref<1x8x10x64xbf16, #tpu.memory_space<vmem>>, vector<1x8x1x64xbf16>,
    %c0_12 = arith.constant 0 : index
    %c0_13 = arith.constant 0 : index
    %c1 = arith.constant 1 : index
    %c0_14 = arith.constant 0 : index
    %25 = vector.load %arg5[%c0_12, %c0_13, %c1, %c0_14] : memref<1x8x10x64xbf16, #tpu.memory_space<vmem>>, vector<1x8x8x64xbf16>
    %26 = vector.shape_cast %25 : vector<1x8x8x64xbf16> to vector<8x8x64xbf16>
    %27 = vector.shape_cast %20 : vector<8x8x64xbf16> to vector<1x8x8x64xbf16>
    tpu.vector_store %arg5[%c0_12, %c0_13, %c1, %c0_14], %27 {strides = array<i32>} : memref<1x8x10x64xbf16, #tpu.memory_space<vmem>>, vector<1x8x8x64xbf16>,
    %c0_15 = arith.constant 0 : index
    %c0_16 = arith.constant 0 : index
    %c9 = arith.constant 9 : index
    %c0_17 = arith.constant 0 : index
    %28 = vector.load %arg5[%c0_15, %c0_16, %c9, %c0_17] : memref<1x8x10x64xbf16, #tpu.memory_space<vmem>>, vector<1x8x1x64xbf16>
    %29 = vector.shape_cast %28 : vector<1x8x1x64xbf16> to vector<8x1x64xbf16>
    %30 = vector.shape_cast %21 : vector<8x1x64xbf16> to vector<1x8x1x64xbf16>
    tpu.vector_store %arg5[%c0_15, %c0_16, %c9, %c0_17], %30 {strides = array<i32>} : memref<1x8x10x64xbf16, #tpu.memory_space<vmem>>, vector<1x8x1x64xbf16>,
    return
  }
  func.func @transform_0(%arg0: i32, %arg1: i32) -> (i32, i32, i32, i32) {
    %c0_i32 = arith.constant 0 : i32
    %c0_i32_0 = arith.constant 0 : i32
    %c0_i32_1 = arith.constant 0 : i32
    return %arg0, %arg1, %c0_i32, %c0_i32_0 : i32, i32, i32, i32
  }
  func.func @transform_1(%arg0: i32, %arg1: i32) -> (i32, i32) {
    %c0_i32 = arith.constant 0 : i32
    %c0_i32_0 = arith.constant 0 : i32
    %c0_i32_1 = arith.constant 0 : i32
    return %c0_i32, %c0_i32_0 : i32, i32
  }
  func.func @transform_2(%arg0: i32, %arg1: i32) -> (i32, i32) {
    %c0_i32 = arith.constant 0 : i32
    %c0_i32_0 = arith.constant 0 : i32
    %c0_i32_1 = arith.constant 0 : i32
    return %c0_i32, %c0_i32_0 : i32, i32
  }
  func.func @transform_3(%arg0: i32, %arg1: i32) -> (i32, i32, i32, i32) {
    %c0_i32 = arith.constant 0 : i32
    %c0_i32_0 = arith.constant 0 : i32
    %c0_i32_1 = arith.constant 0 : i32
    return %arg0, %arg1, %c0_i32, %c0_i32_0 : i32, i32, i32, i32
  }
}

module attributes {stable_mosaic.version = 11 : i64} {
  func.func @_conv2_pool_conv3_kernel(%arg0: i32, %arg1: i32, %arg2: memref<1x1x10x64xbf16, #tpu.memory_space<vmem>>, %arg3: memref<1x8x10x64xbf16, #tpu.memory_space<vmem>>, %arg4: memref<1x1x10x64xbf16, #tpu.memory_space<vmem>>, %arg5: memref<3x192x128xbf16, #tpu.memory_space<vmem>>, %arg6: memref<1x128xf32, #tpu.memory_space<vmem>>, %arg7: memref<1x128xf32, #tpu.memory_space<vmem>>, %arg8: memref<1xf32, #tpu.memory_space<smem>>, %arg9: memref<1x4x4xf32, #tpu.memory_space<vmem>>) attributes {dimension_semantics = [#tpu.dimension_semantics<parallel>, #tpu.dimension_semantics<parallel>], iteration_bounds = array<i64: 2, 1>, scalar_prefetch = 0 : i64, scratch_operands = 0 : i64, tpu.core_type = #tpu.core_type<tc>, window_params = [{transform_indices = @transform_0, window_bounds = array<i64: 1, 1, 10, 64>}, {transform_indices = @transform_1, window_bounds = array<i64: 1, 8, 10, 64>}, {transform_indices = @transform_2, window_bounds = array<i64: 1, 1, 10, 64>}, {pipeline_mode = #tpu.pipeline_mode<synchronous>, transform_indices = @transform_3, window_bounds = array<i64: 3, 192, 128>}, {pipeline_mode = #tpu.pipeline_mode<synchronous>, transform_indices = @transform_4, window_bounds = array<i64: 1, 128>}, {pipeline_mode = #tpu.pipeline_mode<synchronous>, transform_indices = @transform_5, window_bounds = array<i64: 1, 128>}, {transform_indices = @transform_6, window_bounds = array<i64: 1>}, {transform_indices = @transform_7, window_bounds = array<i64: 1, 4, 4>}]} {
    %c0 = arith.constant 0 : index
    %c0_0 = arith.constant 0 : index
    %c0_1 = arith.constant 0 : index
    %c0_2 = arith.constant 0 : index
    %0 = vector.load %arg3[%c0, %c0_0, %c0_1, %c0_2] : memref<1x8x10x64xbf16, #tpu.memory_space<vmem>>, vector<1x8x10x64xbf16>
    %1 = vector.shape_cast %0 : vector<1x8x10x64xbf16> to vector<8x10x64xbf16>
    %c1_i32 = arith.constant 1 : i32
    %2 = arith.minsi %arg1, %c1_i32 : i32
    %3 = arith.sitofp %2 : i32 to f32
    %c0_i32 = arith.constant 0 : i32
    %4 = arith.subi %c0_i32, %arg1 : i32
    %c1_i32_3 = arith.constant 1 : i32
    %5 = arith.minsi %4, %c1_i32_3 : i32
    %6 = arith.sitofp %5 : i32 to f32
    %c0_4 = arith.constant 0 : index
    %c0_5 = arith.constant 0 : index
    %c0_6 = arith.constant 0 : index
    %c0_7 = arith.constant 0 : index
    %7 = vector.load %arg2[%c0_4, %c0_5, %c0_6, %c0_7] : memref<1x1x10x64xbf16, #tpu.memory_space<vmem>>, vector<1x1x10x64xbf16>
    %8 = vector.shape_cast %7 : vector<1x1x10x64xbf16> to vector<1x10x64xbf16>
    %9 = arith.extf %8 : vector<1x10x64xbf16> to vector<1x10x64xf32>
    %10 = vector.broadcast %3 : f32 to vector<1x10x64xf32>
    %11 = arith.mulf %9, %10 : vector<1x10x64xf32>
    %12 = arith.truncf %11 : vector<1x10x64xf32> to vector<1x10x64xbf16>
    %c0_8 = arith.constant 0 : index
    %c0_9 = arith.constant 0 : index
    %c0_10 = arith.constant 0 : index
    %c0_11 = arith.constant 0 : index
    %13 = vector.load %arg4[%c0_8, %c0_9, %c0_10, %c0_11] : memref<1x1x10x64xbf16, #tpu.memory_space<vmem>>, vector<1x1x10x64xbf16>
    %14 = vector.shape_cast %13 : vector<1x1x10x64xbf16> to vector<1x10x64xbf16>
    %15 = arith.extf %14 : vector<1x10x64xbf16> to vector<1x10x64xf32>
    %16 = vector.broadcast %6 : f32 to vector<1x10x64xf32>
    %17 = arith.mulf %15, %16 : vector<1x10x64xf32>
    %18 = arith.truncf %17 : vector<1x10x64xf32> to vector<1x10x64xbf16>
    %19 = tpu.concatenate %12, %1, %18 in 0 : vector<1x10x64xbf16>, vector<8x10x64xbf16>, vector<1x10x64xbf16> -> vector<10x10x64xbf16>
    %20 = vector.extract_strided_slice %19 {offsets = [0, 0, 0], sizes = [8, 10, 64], strides = [1, 1, 1]} : vector<10x10x64xbf16> to vector<8x10x64xbf16>
    %21 = vector.extract_strided_slice %19 {offsets = [1, 0, 0], sizes = [8, 10, 64], strides = [1, 1, 1]} : vector<10x10x64xbf16> to vector<8x10x64xbf16>
    %22 = vector.extract_strided_slice %19 {offsets = [2, 0, 0], sizes = [8, 10, 64], strides = [1, 1, 1]} : vector<10x10x64xbf16> to vector<8x10x64xbf16>
    %23 = tpu.concatenate %20, %21, %22 in 2 : vector<8x10x64xbf16>, vector<8x10x64xbf16>, vector<8x10x64xbf16> -> vector<8x10x192xbf16>
    %cst = arith.constant 0.000000e+00 : f32
    %24 = vector.broadcast %cst : f32 to vector<64x128xf32>
    %25 = vector.extract_strided_slice %23 {offsets = [0, 0, 0], sizes = [8, 8, 192], strides = [1, 1, 1]} : vector<8x10x192xbf16> to vector<8x8x192xbf16>
    %26 = vector.shape_cast %25 : vector<8x8x192xbf16> to vector<64x192xbf16>
    %c0_12 = arith.constant 0 : index
    %c0_13 = arith.constant 0 : index
    %c0_14 = arith.constant 0 : index
    %27 = vector.load %arg5[%c0_12, %c0_13, %c0_14] : memref<3x192x128xbf16, #tpu.memory_space<vmem>>, vector<1x192x128xbf16>
    %28 = vector.shape_cast %27 : vector<1x192x128xbf16> to vector<192x128xbf16>
    %cst_15 = arith.constant dense<0.000000e+00> : vector<64x128xf32>
    %29 = tpu.matmul %26, %28, %cst_15 {dimension_numbers = #tpu.dot_dimension_numbers<[1], [0], [0], [1], [0, 0, 1, 1], [], []>} : vector<64x192xbf16>, vector<192x128xbf16>, vector<64x128xf32> -> vector<64x128xf32>
    %30 = arith.addf %24, %29 : vector<64x128xf32>
    %31 = vector.extract_strided_slice %23 {offsets = [0, 1, 0], sizes = [8, 8, 192], strides = [1, 1, 1]} : vector<8x10x192xbf16> to vector<8x8x192xbf16>
    %32 = vector.shape_cast %31 : vector<8x8x192xbf16> to vector<64x192xbf16>
    %c1 = arith.constant 1 : index
    %c0_16 = arith.constant 0 : index
    %c0_17 = arith.constant 0 : index
    %33 = vector.load %arg5[%c1, %c0_16, %c0_17] : memref<3x192x128xbf16, #tpu.memory_space<vmem>>, vector<1x192x128xbf16>
    %34 = vector.shape_cast %33 : vector<1x192x128xbf16> to vector<192x128xbf16>
    %cst_18 = arith.constant dense<0.000000e+00> : vector<64x128xf32>
    %35 = tpu.matmul %32, %34, %cst_18 {dimension_numbers = #tpu.dot_dimension_numbers<[1], [0], [0], [1], [0, 0, 1, 1], [], []>} : vector<64x192xbf16>, vector<192x128xbf16>, vector<64x128xf32> -> vector<64x128xf32>
    %36 = arith.addf %30, %35 : vector<64x128xf32>
    %37 = vector.extract_strided_slice %23 {offsets = [0, 2, 0], sizes = [8, 8, 192], strides = [1, 1, 1]} : vector<8x10x192xbf16> to vector<8x8x192xbf16>
    %38 = vector.shape_cast %37 : vector<8x8x192xbf16> to vector<64x192xbf16>
    %c2 = arith.constant 2 : index
    %c0_19 = arith.constant 0 : index
    %c0_20 = arith.constant 0 : index
    %39 = vector.load %arg5[%c2, %c0_19, %c0_20] : memref<3x192x128xbf16, #tpu.memory_space<vmem>>, vector<1x192x128xbf16>
    %40 = vector.shape_cast %39 : vector<1x192x128xbf16> to vector<192x128xbf16>
    %cst_21 = arith.constant dense<0.000000e+00> : vector<64x128xf32>
    %41 = tpu.matmul %38, %40, %cst_21 {dimension_numbers = #tpu.dot_dimension_numbers<[1], [0], [0], [1], [0, 0, 1, 1], [], []>} : vector<64x192xbf16>, vector<192x128xbf16>, vector<64x128xf32> -> vector<64x128xf32>
    %42 = arith.addf %36, %41 : vector<64x128xf32>
    %c0_22 = arith.constant 0 : index
    %c0_23 = arith.constant 0 : index
    %43 = vector.load %arg6[%c0_22, %c0_23] : memref<1x128xf32, #tpu.memory_space<vmem>>, vector<1x128xf32>
    %44 = vector.broadcast %43 : vector<1x128xf32> to vector<64x128xf32>
    %45 = arith.addf %42, %44 : vector<64x128xf32>
    %46 = vector.shape_cast %45 : vector<64x128xf32> to vector<4x2x8x128xf32>
    %47 = vector.extract_strided_slice %46 {offsets = [0, 0, 0, 0], sizes = [4, 1, 8, 128], strides = [1, 1, 1, 1]} : vector<4x2x8x128xf32> to vector<4x1x8x128xf32>
    %48 = vector.shape_cast %47 : vector<4x1x8x128xf32> to vector<4x8x128xf32>
    %49 = vector.extract_strided_slice %46 {offsets = [0, 1, 0, 0], sizes = [4, 1, 8, 128], strides = [1, 1, 1, 1]} : vector<4x2x8x128xf32> to vector<4x1x8x128xf32>
    %50 = vector.shape_cast %49 : vector<4x1x8x128xf32> to vector<4x8x128xf32>
    %51 = arith.maximumf %48, %50 : vector<4x8x128xf32>
    %52 = vector.shape_cast %51 : vector<4x8x128xf32> to vector<4x4x2x128xf32>
    %53 = vector.extract_strided_slice %52 {offsets = [0, 0, 0, 0], sizes = [4, 4, 1, 128], strides = [1, 1, 1, 1]} : vector<4x4x2x128xf32> to vector<4x4x1x128xf32>
    %54 = vector.shape_cast %53 : vector<4x4x1x128xf32> to vector<4x4x128xf32>
    %55 = vector.extract_strided_slice %52 {offsets = [0, 0, 1, 0], sizes = [4, 4, 1, 128], strides = [1, 1, 1, 1]} : vector<4x4x2x128xf32> to vector<4x4x1x128xf32>
    %56 = vector.shape_cast %55 : vector<4x4x1x128xf32> to vector<4x4x128xf32>
    %57 = arith.maximumf %54, %56 : vector<4x4x128xf32>
    %c0_24 = arith.constant 0 : index
    %c0_25 = arith.constant 0 : index
    %58 = vector.load %arg7[%c0_24, %c0_25] : memref<1x128xf32, #tpu.memory_space<vmem>>, vector<1x128xf32>
    %59 = vector.shape_cast %58 : vector<1x128xf32> to vector<1x1x128xf32>
    %60 = vector.broadcast %59 : vector<1x1x128xf32> to vector<4x4x128xf32>
    %61 = arith.mulf %57, %60 : vector<4x4x128xf32>
    %cst_26 = arith.constant dense<0.000000e+00> : vector<4x4xf32>
    %62 = vector.multi_reduction <add>, %61, %cst_26 [2] : vector<4x4x128xf32> to vector<4x4xf32>
    %c0_27 = arith.constant 0 : index
    %63 = memref.load %arg8[%c0_27] : memref<1xf32, #tpu.memory_space<smem>>
    %64 = vector.broadcast %63 : f32 to vector<4x4xf32>
    %65 = arith.addf %62, %64 : vector<4x4xf32>
    %c0_28 = arith.constant 0 : index
    %c0_29 = arith.constant 0 : index
    %c0_30 = arith.constant 0 : index
    %66 = vector.load %arg9[%c0_28, %c0_29, %c0_30] : memref<1x4x4xf32, #tpu.memory_space<vmem>>, vector<1x4x4xf32>
    %67 = vector.shape_cast %66 : vector<1x4x4xf32> to vector<4x4xf32>
    %68 = vector.shape_cast %65 : vector<4x4xf32> to vector<1x4x4xf32>
    tpu.vector_store %arg9[%c0_28, %c0_29, %c0_30], %68 {strides = array<i32>} : memref<1x4x4xf32, #tpu.memory_space<vmem>>, vector<1x4x4xf32>,
    return
  }
  func.func @transform_0(%arg0: i32, %arg1: i32) -> (i32, i32, i32, i32) {
    %c8_i32 = arith.constant 8 : i32
    %0 = arith.muli %arg1, %c8_i32 : i32
    %c1_i32 = arith.constant 1 : i32
    %1 = arith.subi %0, %c1_i32 : i32
    %c0_i32 = arith.constant 0 : i32
    %2 = arith.maxsi %1, %c0_i32 : i32
    %c0_i32_0 = arith.constant 0 : i32
    %c0_i32_1 = arith.constant 0 : i32
    %c0_i32_2 = arith.constant 0 : i32
    return %arg0, %2, %c0_i32_0, %c0_i32_1 : i32, i32, i32, i32
  }
  func.func @transform_1(%arg0: i32, %arg1: i32) -> (i32, i32, i32, i32) {
    %c0_i32 = arith.constant 0 : i32
    %c0_i32_0 = arith.constant 0 : i32
    %c0_i32_1 = arith.constant 0 : i32
    return %arg0, %arg1, %c0_i32, %c0_i32_0 : i32, i32, i32, i32
  }
  func.func @transform_2(%arg0: i32, %arg1: i32) -> (i32, i32, i32, i32) {
    %c1_i32 = arith.constant 1 : i32
    %0 = arith.addi %arg1, %c1_i32 : i32
    %c8_i32 = arith.constant 8 : i32
    %1 = arith.muli %0, %c8_i32 : i32
    %c7_i32 = arith.constant 7 : i32
    %2 = arith.minsi %1, %c7_i32 : i32
    %c0_i32 = arith.constant 0 : i32
    %c0_i32_0 = arith.constant 0 : i32
    %c0_i32_1 = arith.constant 0 : i32
    return %arg0, %2, %c0_i32, %c0_i32_0 : i32, i32, i32, i32
  }
  func.func @transform_3(%arg0: i32, %arg1: i32) -> (i32, i32, i32) {
    %c0_i32 = arith.constant 0 : i32
    %c0_i32_0 = arith.constant 0 : i32
    %c0_i32_1 = arith.constant 0 : i32
    %c0_i32_2 = arith.constant 0 : i32
    return %c0_i32, %c0_i32_0, %c0_i32_1 : i32, i32, i32
  }
  func.func @transform_4(%arg0: i32, %arg1: i32) -> (i32, i32) {
    %c0_i32 = arith.constant 0 : i32
    %c0_i32_0 = arith.constant 0 : i32
    %c0_i32_1 = arith.constant 0 : i32
    return %c0_i32, %c0_i32_0 : i32, i32
  }
  func.func @transform_5(%arg0: i32, %arg1: i32) -> (i32, i32) {
    %c0_i32 = arith.constant 0 : i32
    %c0_i32_0 = arith.constant 0 : i32
    %c0_i32_1 = arith.constant 0 : i32
    return %c0_i32, %c0_i32_0 : i32, i32
  }
  func.func @transform_6(%arg0: i32, %arg1: i32) -> i32 {
    %c0_i32 = arith.constant 0 : i32
    %c0_i32_0 = arith.constant 0 : i32
    return %c0_i32 : i32
  }
  func.func @transform_7(%arg0: i32, %arg1: i32) -> (i32, i32, i32) {
    %c0_i32 = arith.constant 0 : i32
    %c0_i32_0 = arith.constant 0 : i32
    return %arg0, %arg1, %c0_i32 : i32, i32, i32
  }
}

</mosaic_0001>

<llo_original>
// kernel: stereo_depth_prediction.2
$region0: #{stereo_depth_prediction.2}
  #allocation0 [shape = 'u32[]', space=smem, size = 0x4, offset = 0x4, fixed_abs, tag = 'smem constant byte address 0x4 - core index']
  #allocation1 [shape = 'u32[144,128]{1,0:T(1,128)}', space=vmem, size = 0x12000, scoped, tag = 'internal scratch']
  %s0 = inlined_call_operand.vmem [shape: bf16[2,16,16,32], index: 0, kind: input, shape index: {}]
  %s1 = inlined_call_operand.vmem [shape: bf16[32,64], index: 1, kind: input, shape index: {}]
  %s2 = inlined_call_operand.vmem [shape: f32[1,64], index: 2, kind: input, shape index: {}]
  %s3 = inlined_call_operand.vmem [shape: bf16[2,8,10,64], index: 3, kind: output, shape index: {}]
  %s4 = sld [smem:[#allocation0]]
  $region45: #{stereo_depth_prediction.2} parent=0
    _
  %s6 = ssub.s32 1, %s4
  %s7 = scalar_select 0, %s6, %s4
  loop: start=0, step=1, limit=4
  $region2: #{stereo_depth_prediction.2} parent=0 // loop_pre_header
    _
  $region3: #{stereo_depth_prediction.2} parent=0 // loop_header
    %s9 = sphi 0, %s13
    %p10 = scmp.ge.s32.totalorder %s9, 4
    %s16 = sphi 0, %s28
    %s17 = sphi 0, %s24
    %s18 = sphi 0, %s16
    %s19 = sphi 0, %s17
    %s20 = sphi 0, %s18
    %s21 = sphi 0, %s19
    %s33 = sphi 0, %s35
    %s36 = sphi 0, %s33
    %s37 = sphi 0, %s36
    %s53 = sphi 0, %s37
    %s57 = sphi 0, %s57
    %s59 = sphi 0, %s57
    %s60 = sphi 0, %s59
    %s74 = sphi 0, %s60
    %s78 = sphi 0, %s78
    %s80 = sphi 0, %s78
    %s81 = sphi 0, %s80
    %s95 = sphi 0, %s81
    %s103 = sphi 0, %s105
    %s106 = sphi 0, %s103
    %s107 = sphi 0, %s106
    %s123 = sphi 0, %s107
  $region4: #{stereo_depth_prediction.2} parent=0 // loop_header_branch
    %12 = sbr.rel (%p10) target = $region8
  $region5: #{stereo_depth_prediction.2} parent=0 // loop_body
    %s14 = ssub.s32 %s9, 1
    %s15 = ssub.s32 %s9, 2
    %s22 = sadd.s32 1, %s17
    %p23 = scmp.ge.s32.totalorder %s22, 1
    %s24 = scalar_select %p23, 0, %s22
    %s25 = sadd.s32 1, %s16
    %s26 = scalar_select %p23, %s25, %s16
    %p27 = scmp.ge.s32.totalorder %s26, 2
    %s28 = scalar_select %p27, 0, %s26
    %s29 = ssub.s32 %s16, %s28
    %s30 = ssub.s32 %s17, %s24
    %s31 = sor.u32 %s29, %s30
    %p32 = scmp.eq.s32.totalorder %s31, 0
    %s34 = sadd.s32 %s33, 1
    %s35 = scalar_select %p32, %s33, %s34
    %p38 = pneg %p32
    %p39 = scmp.eq.s32.totalorder %s9, 1
    %p40 = por %p38, %p39
    %p41 = scmp.ne.s32.totalorder %s33, %s36
    %p42 = scmp.eq.s32.totalorder %s9, 0
    %p43 = por %p41, %p42
    %p44 = scmp.ne.s32.totalorder %s33, %s36
    %p45 = scmp.eq.s32.totalorder %s14, 1
    %p46 = por %p44, %p45
    %p47 = scmp.ne.s32.totalorder %s36, %s37
    %p48 = scmp.eq.s32.totalorder %s14, 0
    %p49 = por %p47, %p48
    %p50 = scmp.ne.s32.totalorder %s36, %s37
    %p51 = scmp.eq.s32.totalorder %s15, 1
    %p52 = por %p50, %p51
    %p54 = scmp.ne.s32.totalorder %s37, %s53
    %p55 = scmp.eq.s32.totalorder %s15, 0
    %p56 = por %p54, %p55
    %s58 = sadd.s32 %s57, 1
    %p61 = scmp.eq.s32.totalorder %s9, 1
    %p62 = scmp.ne.s32.totalorder %s57, %s59
    %p63 = scmp.eq.s32.totalorder %s9, 0
    %p64 = por %p62, %p63
    %p65 = scmp.ne.s32.totalorder %s57, %s59
    %p66 = scmp.eq.s32.totalorder %s14, 1
    %p67 = por %p65, %p66
    %p68 = scmp.ne.s32.totalorder %s59, %s60
    %p69 = scmp.eq.s32.totalorder %s14, 0
    %p70 = por %p68, %p69
    %p71 = scmp.ne.s32.totalorder %s59, %s60
    %p72 = scmp.eq.s32.totalorder %s15, 1
    %p73 = por %p71, %p72
    %p75 = scmp.ne.s32.totalorder %s60, %s74
    %p76 = scmp.eq.s32.totalorder %s15, 0
    %p77 = por %p75, %p76
    %s79 = sadd.s32 %s78, 1
    %p82 = scmp.eq.s32.totalorder %s9, 1
    %p83 = scmp.ne.s32.totalorder %s78, %s80
    %p84 = scmp.eq.s32.totalorder %s9, 0
    %p85 = por %p83, %p84
    %p86 = scmp.ne.s32.totalorder %s78, %s80
    %p87 = scmp.eq.s32.totalorder %s14, 1
    %p88 = por %p86, %p87
    %p89 = scmp.ne.s32.totalorder %s80, %s81
    %p90 = scmp.eq.s32.totalorder %s14, 0
    %p91 = por %p89, %p90
    %p92 = scmp.ne.s32.totalorder %s80, %s81
    %p93 = scmp.eq.s32.totalorder %s15, 1
    %p94 = por %p92, %p93
    %p96 = scmp.ne.s32.totalorder %s81, %s95
    %p97 = scmp.eq.s32.totalorder %s15, 0
    %p98 = por %p96, %p97
    %s99 = ssub.s32 %s16, %s28
    %s100 = ssub.s32 %s17, %s24
    %s101 = sor.u32 %s99, %s100
    %p102 = scmp.eq.s32.totalorder %s101, 0
    %s104 = sadd.s32 %s103, 1
    %s105 = scalar_select %p102, %s103, %s104
    %p108 = pneg %p102
    %p109 = scmp.eq.s32.totalorder %s9, 1
    %p110 = por %p108, %p109
    %p111 = scmp.ne.s32.totalorder %s103, %s106
    %p112 = scmp.eq.s32.totalorder %s9, 0
    %p113 = por %p111, %p112
    %p114 = scmp.ne.s32.totalorder %s103, %s106
    %p115 = scmp.eq.s32.totalorder %s14, 1
    %p116 = por %p114, %p115
    %p117 = scmp.ne.s32.totalorder %s106, %s107
    %p118 = scmp.eq.s32.totalorder %s14, 0
    %p119 = por %p117, %p118
    %p120 = scmp.ne.s32.totalorder %s106, %s107
    %p121 = scmp.eq.s32.totalorder %s15, 1
    %p122 = por %p120, %p121
    %p124 = scmp.ne.s32.totalorder %s107, %s123
    %p125 = scmp.eq.s32.totalorder %s15, 0
    %p126 = por %p124, %p125
    %p127 = scmp.le.s32.totalorder 1, %s9
    %p128 = scmp.lt.s32.totalorder %s9, 3
    %p129 = pnand %p127, %p128
    %p130 = pneg %p129
    // Predicated region
    $region9: #{stereo_depth_prediction.2} parent=5 // pred_check
      _
    $region10: #{stereo_depth_prediction.2} parent=5 // pred_check_branch
      %132 = sbr.rel (%p129) target = $region12
    $region11: #{stereo_depth_prediction.2} parent=5 // pred_region
      %s133 = ssub.s32 %s9, 1
      // Predicated region
      $region13: #{stereo_depth_prediction.2} parent=11 // pred_check
        %p134 = pneg %p70
      $region14: #{stereo_depth_prediction.2} parent=11 // pred_check_branch
        %136 = sbr.rel (%p134) target = $region16
      $region15: #{stereo_depth_prediction.2} parent=11 // pred_region
        _
      $region16: #{stereo_depth_prediction.2} parent=11 // pred_fallthru
        _
      // Predicated region
      $region17: #{stereo_depth_prediction.2} parent=11 // pred_check
        %p137 = pneg %p91
      $region18: #{stereo_depth_prediction.2} parent=11 // pred_check_branch
        %139 = sbr.rel (%p137) target = $region20
      $region19: #{stereo_depth_prediction.2} parent=11 // pred_region
        _
      $region20: #{stereo_depth_prediction.2} parent=11 // pred_fallthru
        _
    $region12: #{stereo_depth_prediction.2} parent=5 // pred_fallthru
      _
    %p140 = scmp.lt.s32.totalorder %s9, 2
    // Predicated region
    $region21: #{stereo_depth_prediction.2} parent=5 // pred_check
      %p141 = pneg %p140
    $region22: #{stereo_depth_prediction.2} parent=5 // pred_check_branch
      %143 = sbr.rel (%p141) target = $region24
    $region23: #{stereo_depth_prediction.2} parent=5 // pred_region
      // Predicated region
      $region25: #{stereo_depth_prediction.2} parent=23 // pred_check
        %p144 = pneg %p43
      $region26: #{stereo_depth_prediction.2} parent=23 // pred_check_branch
        %146 = sbr.rel (%p144) target = $region28
      $region27: #{stereo_depth_prediction.2} parent=23 // pred_region
        %s147 = smul.u32 16, %s17
        %p148 = scmp.lt.s32.totalorder %s16, 1
        %s149 = scalar_select %p148, %s16, 1
        %p150 = scmp.lt.s32.totalorder %s147, 15
        %s151 = scalar_select %p150, %s147, 15
        %s152 = smul.addr %s151, 2
        %s153 = smul.addr %s149, 32
        %s154 = sadd.s32 %s152, %s153
        %s155 = smul.addr %s154, 4
        %s156 = scalar_lea.vmem %s0, %s155
        %s157 = smul.u32 16, %s17
      $region28: #{stereo_depth_prediction.2} parent=23 // pred_fallthru
        _
    $region24: #{stereo_depth_prediction.2} parent=5 // pred_fallthru
      _
    %p158 = scmp.le.s32.totalorder 1, %s9
    %p159 = scmp.lt.s32.totalorder %s9, 3
    %p160 = pnand %p158, %p159
    %p161 = pneg %p160
    // Predicated region
    $region29: #{stereo_depth_prediction.2} parent=5 // pred_check
      _
    $region30: #{stereo_depth_prediction.2} parent=5 // pred_check_branch
      %163 = sbr.rel (%p160) target = $region32
    $region31: #{stereo_depth_prediction.2} parent=5 // pred_region
      %s164 = ssub.s32 %s9, 1
      %s165 = smul.u32 16, %s19
      %p166 = scmp.lt.s32.totalorder %s18, 1
      %s167 = scalar_select %p166, %s18, 1
      %p168 = scmp.lt.s32.totalorder %s165, 15
      %s169 = scalar_select %p168, %s165, 15
      %s170 = smul.addr %s169, 2
      %s171 = smul.addr %s167, 32
      %s172 = sadd.s32 %s170, %s171
      %s173 = smul.addr %s172, 4
      %s174 = scalar_lea.vmem %s0, %s173
      %p175 = pneg %p49
      %p176 = pneg %p46
      %p177 = pneg %p70
      %p178 = pneg %p67
      %p179 = pneg %p91
      %p180 = pneg %p88
      %p181 = pneg %p119
      %p182 = pneg %p116
      %s183 = smul.u32 8, %s19
      %p184 = scmp.lt.s32.totalorder %s18, 1
      %s185 = scalar_select %p184, %s18, 1
      %p186 = scmp.lt.s32.totalorder %s183, 7
      %s187 = scalar_select %p186, %s183, 7
      %s188 = smul.addr %s187, 2
      %s189 = smul.addr %s185, 16
      %s190 = sadd.s32 %s188, %s189
      %s191 = smul.addr %s190, 4
      %s192 = scalar_lea.vmem %s3, %s191
      %s193 = smul.u32 16, %s19
      %p194 = scmp.lt.s32.totalorder %s18, 1
      %s195 = scalar_select %p194, %s18, 1
      %p196 = scmp.lt.s32.totalorder %s193, 15
      %s197 = scalar_select %p196, %s193, 15
      %s198 = smul.addr %s197, 2
      %s199 = smul.addr %s195, 32
      %s200 = sadd.s32 %s198, %s199
      %s201 = smul.addr %s200, 4
      %s202 = scalar_lea.vmem %s0, %s201
      %s203 = smul.u32 16, %s19
      %s204 = smul.u32 8, %s19
      %p205 = scmp.lt.s32.totalorder %s18, 1
      %s206 = scalar_select %p205, %s18, 1
      %p207 = scmp.lt.s32.totalorder %s204, 7
      %s208 = scalar_select %p207, %s204, 7
      %s209 = smul.addr %s208, 2
      %s210 = smul.addr %s206, 16
      %s211 = sadd.s32 %s209, %s210
      %s212 = smul.addr %s211, 4
      %s213 = scalar_lea.vmem %s3, %s212
      %s214 = smul.u32 8, %s19
      %v216 = vld [vmem:[%s202] sm:$0xf]
      %v217 = vld [vmem:[%s202 + $0x4] sm:$0xf]
      %v218 = vld [vmem:[%s202 + $0x8] sm:$0xf]
      %v219 = vld [vmem:[%s202 + $0xc] sm:$0xf]
      %v220 = vld [vmem:[%s202 + $0x10] sm:$0xf]
      %v221 = vld [vmem:[%s202 + $0x14] sm:$0xf]
      %v222 = vld [vmem:[%s202 + $0x18] sm:$0xf]
      %v223 = vld [vmem:[%s202 + $0x1c] sm:$0xf]
      %v224 = vld [vmem:[%s202 + $0x20] sm:$0xf]
      %v225 = vld [vmem:[%s202 + $0x24] sm:$0xf]
      %v226 = vld [vmem:[%s202 + $0x28] sm:$0xf]
      %v227 = vld [vmem:[%s202 + $0x2c] sm:$0xf]
      %v228 = vld [vmem:[%s202 + $0x30] sm:$0xf]
      %v229 = vld [vmem:[%s202 + $0x34] sm:$0xf]
      %v230 = vld [vmem:[%s202 + $0x38] sm:$0xf]
      %v231 = vld [vmem:[%s202 + $0x3c] sm:$0xf]
      %v232 = vld [vmem:[%s202 + $0x40] sm:$0xf]
      %v233 = vld [vmem:[%s202 + $0x44] sm:$0xf]
      %v234 = vld [vmem:[%s202 + $0x48] sm:$0xf]
      %v235 = vld [vmem:[%s202 + $0x4c] sm:$0xf]
      %v236 = vld [vmem:[%s202 + $0x50] sm:$0xf]
      %v237 = vld [vmem:[%s202 + $0x54] sm:$0xf]
      %v238 = vld [vmem:[%s202 + $0x58] sm:$0xf]
      %v239 = vld [vmem:[%s202 + $0x5c] sm:$0xf]
      %v240 = vld [vmem:[%s202 + $0x60] sm:$0xf]
      %v241 = vld [vmem:[%s202 + $0x64] sm:$0xf]
      %v242 = vld [vmem:[%s202 + $0x68] sm:$0xf]
      %v243 = vld [vmem:[%s202 + $0x6c] sm:$0xf]
      %v244 = vld [vmem:[%s202 + $0x70] sm:$0xf]
      %v245 = vld [vmem:[%s202 + $0x74] sm:$0xf]
      %v246 = vld [vmem:[%s202 + $0x78] sm:$0xf]
      %v247 = vld [vmem:[%s202 + $0x7c] sm:$0xf]
      %v248 = vld [vmem:[%s1] sm:$0xf]
      %v249 = vld [vmem:[%s1 + $0x4] sm:$0xf]
      %v250 = vld [vmem:[%s1 + $0x8] sm:$0xf]
      %v251 = vld [vmem:[%s1 + $0xc] sm:$0xf]
      %v252 = vld [vmem:[%s2] sm:$0x1]
      %v254 = vlaneseq
      %v255 = vshrl.u32 %v254, 7
      %v256 = vsub.s32 0, %v255
      %v257 = vrot.slane %v252, %v256
      %v291 = vunpack.c.l.b16 %v216
      %v292 = vunpack.c.l.b16 %v217
      %v293 = vunpack.c.l.b16 %v218
      %v294 = vunpack.c.l.b16 %v219
      %v295 = vunpack.c.l.b16 %v220
      %v296 = vunpack.c.l.b16 %v221
      %v297 = vunpack.c.l.b16 %v222
      %v298 = vunpack.c.l.b16 %v223
      %v299 = vunpack.c.l.b16 %v224
      %v300 = vunpack.c.l.b16 %v225
      %v301 = vunpack.c.l.b16 %v226
      %v302 = vunpack.c.l.b16 %v227
      %v303 = vunpack.c.l.b16 %v228
      %v304 = vunpack.c.l.b16 %v229
      %v305 = vunpack.c.l.b16 %v230
      %v306 = vunpack.c.l.b16 %v231
      %v307 = vunpack.c.l.b16 %v232
      %v308 = vunpack.c.l.b16 %v233
      %v309 = vunpack.c.l.b16 %v234
      %v310 = vunpack.c.l.b16 %v235
      %v311 = vunpack.c.l.b16 %v236
      %v312 = vunpack.c.l.b16 %v237
      %v313 = vunpack.c.l.b16 %v238
      %v314 = vunpack.c.l.b16 %v239
      %v315 = vunpack.c.l.b16 %v240
      %v316 = vunpack.c.l.b16 %v241
      %v317 = vunpack.c.l.b16 %v242
      %v318 = vunpack.c.l.b16 %v243
      %v319 = vunpack.c.l.b16 %v244
      %v320 = vunpack.c.l.b16 %v245
      %v321 = vunpack.c.l.b16 %v246
      %v322 = vunpack.c.l.b16 %v247
      %v323 = vpack.c.b16 %v292, %v291
      %v324 = vpack.c.b16 %v294, %v293
      %v325 = vpack.c.b16 %v296, %v295
      %v326 = vpack.c.b16 %v298, %v297
      %v327 = vpack.c.b16 %v300, %v299
      %v328 = vpack.c.b16 %v302, %v301
      %v329 = vpack.c.b16 %v304, %v303
      %v330 = vpack.c.b16 %v306, %v305
      %v331 = vpack.c.b16 %v308, %v307
      %v332 = vpack.c.b16 %v310, %v309
      %v333 = vpack.c.b16 %v312, %v311
      %v334 = vpack.c.b16 %v314, %v313
      %v335 = vpack.c.b16 %v316, %v315
      %v336 = vpack.c.b16 %v318, %v317
      %v337 = vpack.c.b16 %v320, %v319
      %v338 = vpack.c.b16 %v322, %v321
      %v343 = vunpack.c.l.b16 %v248
      %v344 = vunpack.c.l.b16 %v249
      %v345 = vunpack.c.l.b16 %v250
      %v346 = vunpack.c.l.b16 %v251
      %v347 = vpack.c.b16 %v344, %v343
      %v348 = vpack.c.b16 %v346, %v345
      %vm351 = vcmask 261120
      %v353 = vsel %vm351, %v323, 0
      %v356 = vsel %vm351, %v324, 0
      %v359 = vsel %vm351, %v325, 0
      %v362 = vsel %vm351, %v326, 0
      %v365 = vsel %vm351, %v327, 0
      %v368 = vsel %vm351, %v328, 0
      %v371 = vsel %vm351, %v329, 0
      %v374 = vsel %vm351, %v330, 0
      %v377 = vsel %vm351, %v331, 0
      %v380 = vsel %vm351, %v332, 0
      %v383 = vsel %vm351, %v333, 0
      %v386 = vsel %vm351, %v334, 0
      %v389 = vsel %vm351, %v335, 0
      %v392 = vsel %vm351, %v336, 0
      %v395 = vsel %vm351, %v337, 0
      %v398 = vsel %vm351, %v338, 0
      %400 = vmatprep.subr.bf16.mxu0 0
      %401 = vmatpush1.bf16.msra.mxu0 %v347
      %402 = vmatprep.subr.bf16.mxu0 0
      %403 = vmatpush1.bf16.msra.mxu0 %v348
      %404 = vmatprep.subr.bf16.mxu0 0
      %405 = vmatpush1.bf16.msra.mxu0 0
      %406 = vmatprep.subr.bf16.mxu0 0
      %407 = vmatpush1.bf16.msra.mxu0 0
      %408 = vmatprep.subr.bf16.mxu0 0
      %409 = vmatpush1.bf16.msra.mxu0 0
      %410 = vmatprep.subr.bf16.mxu0 0
      %411 = vmatpush1.bf16.msra.mxu0 0
      %412 = vmatprep.subr.bf16.mxu0 0
      %413 = vmatpush1.bf16.msra.mxu0 0
      %414 = vmatprep.subr.bf16.mxu0 0
      %415 = vmatpush1.bf16.msra.mxu0 0
      %416 = vmatprep.subr.bf16.mxu0 0
      %417 = vmatpush1.bf16.msra.mxu0 0
      %418 = vmatprep.subr.bf16.mxu0 0
      %419 = vmatpush1.bf16.msra.mxu0 0
      %420 = vmatprep.subr.bf16.mxu0 0
      %421 = vmatpush1.bf16.msra.mxu0 0
      %422 = vmatprep.subr.bf16.mxu0 0
      %423 = vmatpush1.bf16.msra.mxu0 0
      %424 = vmatprep.subr.bf16.mxu0 0
      %425 = vmatpush1.bf16.msra.mxu0 0
      %426 = vmatprep.subr.bf16.mxu0 0
      %427 = vmatpush1.bf16.msra.mxu0 0
      %428 = vmatprep.subr.bf16.mxu0 0
      %429 = vmatpush1.bf16.msra.mxu0 0
      %430 = vmatprep.subr.bf16.mxu0 0
      %431 = vmatpush1.bf16.msra.mxu0 0
      %432 = vmatprep.mubr.bf16.mxu0 0
      %433 = vmatmul.mubr.bf16.gmra.mrb[0].mxu0 %v353
      %v434 = vpop.f32.mrb[0].mxu0
      %v435 = vadd.f32 %v257, %v434
      %v436 = vpop.f32.mrb[0].mxu0
      %v437 = vpop.f32.mrb[0].mxu0
      %v438 = vadd.f32 %v257, %v437
      %v439 = vpop.f32.mrb[0].mxu0
      %440 = vmatprep.mubr.bf16.mxu0 0
      %441 = vmatmul.mubr.bf16.gmra.mrb[0].mxu0 %v356
      %v442 = vpop.f32.mrb[0].mxu0
      %v443 = vadd.f32 %v257, %v442
      %v444 = vpop.f32.mrb[0].mxu0
      %v445 = vpop.f32.mrb[0].mxu0
      %v446 = vadd.f32 %v257, %v445
      %v447 = vpop.f32.mrb[0].mxu0
      %448 = vmatprep.mubr.bf16.mxu0 0
      %449 = vmatmul.mubr.bf16.gmra.mrb[0].mxu0 %v359
      %v450 = vpop.f32.mrb[0].mxu0
      %v451 = vadd.f32 %v257, %v450
      %v452 = vpop.f32.mrb[0].mxu0
      %v453 = vpop.f32.mrb[0].mxu0
      %v454 = vadd.f32 %v257, %v453
      %v455 = vpop.f32.mrb[0].mxu0
      %456 = vmatprep.mubr.bf16.mxu0 0
      %457 = vmatmul.mubr.bf16.gmra.mrb[0].mxu0 %v362
      %v458 = vpop.f32.mrb[0].mxu0
      %v459 = vadd.f32 %v257, %v458
      %v460 = vpop.f32.mrb[0].mxu0
      %v461 = vpop.f32.mrb[0].mxu0
      %v462 = vadd.f32 %v257, %v461
      %v463 = vpop.f32.mrb[0].mxu0
      %464 = vmatprep.mubr.bf16.mxu0 0
      %465 = vmatmul.mubr.bf16.gmra.mrb[0].mxu0 %v365
      %v466 = vpop.f32.mrb[0].mxu0
      %v467 = vadd.f32 %v257, %v466
      %v468 = vpop.f32.mrb[0].mxu0
      %v469 = vpop.f32.mrb[0].mxu0
      %v470 = vadd.f32 %v257, %v469
      %v471 = vpop.f32.mrb[0].mxu0
      %472 = vmatprep.mubr.bf16.mxu0 0
      %473 = vmatmul.mubr.bf16.gmra.mrb[0].mxu0 %v368
      %v474 = vpop.f32.mrb[0].mxu0
      %v475 = vadd.f32 %v257, %v474
      %v476 = vpop.f32.mrb[0].mxu0
      %v477 = vpop.f32.mrb[0].mxu0
      %v478 = vadd.f32 %v257, %v477
      %v479 = vpop.f32.mrb[0].mxu0
      %480 = vmatprep.mubr.bf16.mxu0 0
      %481 = vmatmul.mubr.bf16.gmra.mrb[0].mxu0 %v371
      %v482 = vpop.f32.mrb[0].mxu0
      %v483 = vadd.f32 %v257, %v482
      %v484 = vpop.f32.mrb[0].mxu0
      %v485 = vpop.f32.mrb[0].mxu0
      %v486 = vadd.f32 %v257, %v485
      %v487 = vpop.f32.mrb[0].mxu0
      %488 = vmatprep.mubr.bf16.mxu0 0
      %489 = vmatmul.mubr.bf16.gmra.mrb[0].mxu0 %v374
      %v490 = vpop.f32.mrb[0].mxu0
      %v491 = vadd.f32 %v257, %v490
      %v492 = vpop.f32.mrb[0].mxu0
      %v493 = vpop.f32.mrb[0].mxu0
      %v494 = vadd.f32 %v257, %v493
      %v495 = vpop.f32.mrb[0].mxu0
      %496 = vmatprep.mubr.bf16.mxu0 0
      %497 = vmatmul.mubr.bf16.gmra.mrb[0].mxu0 %v377
      %v498 = vpop.f32.mrb[0].mxu0
      %v499 = vadd.f32 %v257, %v498
      %v500 = vpop.f32.mrb[0].mxu0
      %v501 = vpop.f32.mrb[0].mxu0
      %v502 = vadd.f32 %v257, %v501
      %v503 = vpop.f32.mrb[0].mxu0
      %504 = vmatprep.mubr.bf16.mxu0 0
      %505 = vmatmul.mubr.bf16.gmra.mrb[0].mxu0 %v380
      %v506 = vpop.f32.mrb[0].mxu0
      %v507 = vadd.f32 %v257, %v506
      %v508 = vpop.f32.mrb[0].mxu0
      %v509 = vpop.f32.mrb[0].mxu0
      %v510 = vadd.f32 %v257, %v509
      %v511 = vpop.f32.mrb[0].mxu0
      %512 = vmatprep.mubr.bf16.mxu0 0
      %513 = vmatmul.mubr.bf16.gmra.mrb[0].mxu0 %v383
      %v514 = vpop.f32.mrb[0].mxu0
      %v515 = vadd.f32 %v257, %v514
      %v516 = vpop.f32.mrb[0].mxu0
      %v517 = vpop.f32.mrb[0].mxu0
      %v518 = vadd.f32 %v257, %v517
      %v519 = vpop.f32.mrb[0].mxu0
      %520 = vmatprep.mubr.bf16.mxu0 0
      %521 = vmatmul.mubr.bf16.gmra.mrb[0].mxu0 %v386
      %v522 = vpop.f32.mrb[0].mxu0
      %v523 = vadd.f32 %v257, %v522
      %v524 = vpop.f32.mrb[0].mxu0
      %v525 = vpop.f32.mrb[0].mxu0
      %v526 = vadd.f32 %v257, %v525
      %v527 = vpop.f32.mrb[0].mxu0
      %528 = vmatprep.mubr.bf16.mxu0 0
      %529 = vmatmul.mubr.bf16.gmra.mrb[0].mxu0 %v389
      %v530 = vpop.f32.mrb[0].mxu0
      %v531 = vadd.f32 %v257, %v530
      %v532 = vpop.f32.mrb[0].mxu0
      %v533 = vpop.f32.mrb[0].mxu0
      %v534 = vadd.f32 %v257, %v533
      %v535 = vpop.f32.mrb[0].mxu0
      %536 = vmatprep.mubr.bf16.mxu0 0
      %537 = vmatmul.mubr.bf16.gmra.mrb[0].mxu0 %v392
      %v538 = vpop.f32.mrb[0].mxu0
      %v539 = vadd.f32 %v257, %v538
      %v540 = vpop.f32.mrb[0].mxu0
      %v541 = vpop.f32.mrb[0].mxu0
      %v542 = vadd.f32 %v257, %v541
      %v543 = vpop.f32.mrb[0].mxu0
      %544 = vmatprep.mubr.bf16.mxu0 0
      %545 = vmatmul.mubr.bf16.gmra.mrb[0].mxu0 %v395
      %v546 = vpop.f32.mrb[0].mxu0
      %v547 = vadd.f32 %v257, %v546
      %v548 = vpop.f32.mrb[0].mxu0
      %v549 = vpop.f32.mrb[0].mxu0
      %v550 = vadd.f32 %v257, %v549
      %v551 = vpop.f32.mrb[0].mxu0
      %552 = vmatprep.mubr.bf16.mxu0 0
      %553 = vmatmul.mubr.bf16.gmra.mrb[0].mxu0 %v398
      %v554 = vpop.f32.mrb[0].mxu0
      %v555 = vadd.f32 %v257, %v554
      %v556 = vpop.f32.mrb[0].mxu0
      %v557 = vpop.f32.mrb[0].mxu0
      %v558 = vadd.f32 %v257, %v557
      %v559 = vpop.f32.mrb[0].mxu0
      %560 = vdwg.mxu0
      %v561 = vmax.f32 %v435, %v443
      %v562 = vmax.f32 %v438, %v446
      %v563 = vmax.f32 %v451, %v459
      %v564 = vmax.f32 %v454, %v462
      %v565 = vmax.f32 %v467, %v475
      %v566 = vmax.f32 %v470, %v478
      %v567 = vmax.f32 %v483, %v491
      %v568 = vmax.f32 %v486, %v494
      %v569 = vmax.f32 %v499, %v507
      %v570 = vmax.f32 %v502, %v510
      %v571 = vmax.f32 %v515, %v523
      %v572 = vmax.f32 %v518, %v526
      %v573 = vmax.f32 %v531, %v539
      %v574 = vmax.f32 %v534, %v542
      %v575 = vmax.f32 %v547, %v555
      %v576 = vmax.f32 %v550, %v558
      %v593 = vcombine.high %v561, %v561
      %v595 = vunpack.c.l.s4 1983009808
      %v596 = vunpack.c.0.s8 %v595
      %v597 = vlaneseq
      %v598 = vshrl.u32 %v597, 7
      %v599 = vsub.s32 %v596, %v598
      %v600 = vrot.slane %v561, %v599
      %v602 = vunpack.c.l.s4 1983009808
      %v603 = vunpack.c.0.s8 %v602
      %v604 = vlaneseq
      %v605 = vshrl.u32 %v604, 7
      %v606 = vsub.s32 %v603, %v605
      %v607 = vrot.slane %v593, %v606
      %v608 = vcombine.high %v600, %v600
      %v609 = vcombine.high %v607, %v607
      %v610 = vcombine.high %v562, %v562
      %v612 = vunpack.c.l.s4 1983009808
      %v613 = vunpack.c.0.s8 %v612
      %v614 = vlaneseq
      %v615 = vshrl.u32 %v614, 7
      %v616 = vsub.s32 %v613, %v615
      %v617 = vrot.slane %v562, %v616
      %v619 = vunpack.c.l.s4 1983009808
      %v620 = vunpack.c.0.s8 %v619
      %v621 = vlaneseq
      %v622 = vshrl.u32 %v621, 7
      %v623 = vsub.s32 %v620, %v622
      %v624 = vrot.slane %v610, %v623
      %v625 = vcombine.high %v617, %v617
      %v626 = vcombine.high %v624, %v624
      %v627 = vcombine.high %v563, %v563
      %v629 = vunpack.c.l.s4 1983009808
      %v630 = vunpack.c.0.s8 %v629
      %v631 = vlaneseq
      %v632 = vshrl.u32 %v631, 7
      %v633 = vsub.s32 %v630, %v632
      %v634 = vrot.slane %v563, %v633
      %v636 = vunpack.c.l.s4 1983009808
      %v637 = vunpack.c.0.s8 %v636
      %v638 = vlaneseq
      %v639 = vshrl.u32 %v638, 7
      %v640 = vsub.s32 %v637, %v639
      %v641 = vrot.slane %v627, %v640
      %v642 = vcombine.high %v634, %v634
      %v643 = vcombine.high %v641, %v641
      %v644 = vcombine.high %v564, %v564
      %v646 = vunpack.c.l.s4 1983009808
      %v647 = vunpack.c.0.s8 %v646
      %v648 = vlaneseq
      %v649 = vshrl.u32 %v648, 7
      %v650 = vsub.s32 %v647, %v649
      %v651 = vrot.slane %v564, %v650
      %v653 = vunpack.c.l.s4 1983009808
      %v654 = vunpack.c.0.s8 %v653
      %v655 = vlaneseq
      %v656 = vshrl.u32 %v655, 7
      %v657 = vsub.s32 %v654, %v656
      %v658 = vrot.slane %v644, %v657
      %v659 = vcombine.high %v651, %v651
      %v660 = vcombine.high %v658, %v658
      %v661 = vcombine.high %v565, %v565
      %v663 = vunpack.c.l.s4 1983009808
      %v664 = vunpack.c.0.s8 %v663
      %v665 = vlaneseq
      %v666 = vshrl.u32 %v665, 7
      %v667 = vsub.s32 %v664, %v666
      %v668 = vrot.slane %v565, %v667
      %v670 = vunpack.c.l.s4 1983009808
      %v671 = vunpack.c.0.s8 %v670
      %v672 = vlaneseq
      %v673 = vshrl.u32 %v672, 7
      %v674 = vsub.s32 %v671, %v673
      %v675 = vrot.slane %v661, %v674
      %v676 = vcombine.high %v668, %v668
      %v677 = vcombine.high %v675, %v675
      %v678 = vcombine.high %v566, %v566
      %v680 = vunpack.c.l.s4 1983009808
      %v681 = vunpack.c.0.s8 %v680
      %v682 = vlaneseq
      %v683 = vshrl.u32 %v682, 7
      %v684 = vsub.s32 %v681, %v683
      %v685 = vrot.slane %v566, %v684
      %v687 = vunpack.c.l.s4 1983009808
      %v688 = vunpack.c.0.s8 %v687
      %v689 = vlaneseq
      %v690 = vshrl.u32 %v689, 7
      %v691 = vsub.s32 %v688, %v690
      %v692 = vrot.slane %v678, %v691
      %v693 = vcombine.high %v685, %v685
      %v694 = vcombine.high %v692, %v692
      %v695 = vcombine.high %v567, %v567
      %v697 = vunpack.c.l.s4 1983009808
      %v698 = vunpack.c.0.s8 %v697
      %v699 = vlaneseq
      %v700 = vshrl.u32 %v699, 7
      %v701 = vsub.s32 %v698, %v700
      %v702 = vrot.slane %v567, %v701
      %v704 = vunpack.c.l.s4 1983009808
      %v705 = vunpack.c.0.s8 %v704
      %v706 = vlaneseq
      %v707 = vshrl.u32 %v706, 7
      %v708 = vsub.s32 %v705, %v707
      %v709 = vrot.slane %v695, %v708
      %v710 = vcombine.high %v702, %v702
      %v711 = vcombine.high %v709, %v709
      %v712 = vcombine.high %v568, %v568
      %v714 = vunpack.c.l.s4 1983009808
      %v715 = vunpack.c.0.s8 %v714
      %v716 = vlaneseq
      %v717 = vshrl.u32 %v716, 7
      %v718 = vsub.s32 %v715, %v717
      %v719 = vrot.slane %v568, %v718
      %v721 = vunpack.c.l.s4 1983009808
      %v722 = vunpack.c.0.s8 %v721
      %v723 = vlaneseq
      %v724 = vshrl.u32 %v723, 7
      %v725 = vsub.s32 %v722, %v724
      %v726 = vrot.slane %v712, %v725
      %v727 = vcombine.high %v719, %v719
      %v728 = vcombine.high %v726, %v726
      %v729 = vcombine.high %v569, %v569
      %v731 = vunpack.c.l.s4 1983009808
      %v732 = vunpack.c.0.s8 %v731
      %v733 = vlaneseq
      %v734 = vshrl.u32 %v733, 7
      %v735 = vsub.s32 %v732, %v734
      %v736 = vrot.slane %v569, %v735
      %v738 = vunpack.c.l.s4 1983009808
      %v739 = vunpack.c.0.s8 %v738
      %v740 = vlaneseq
      %v741 = vshrl.u32 %v740, 7
      %v742 = vsub.s32 %v739, %v741
      %v743 = vrot.slane %v729, %v742
      %v744 = vcombine.high %v736, %v736
      %v745 = vcombine.high %v743, %v743
      %v746 = vcombine.high %v570, %v570
      %v748 = vunpack.c.l.s4 1983009808
      %v749 = vunpack.c.0.s8 %v748
      %v750 = vlaneseq
      %v751 = vshrl.u32 %v750, 7
      %v752 = vsub.s32 %v749, %v751
      %v753 = vrot.slane %v570, %v752
      %v755 = vunpack.c.l.s4 1983009808
      %v756 = vunpack.c.0.s8 %v755
      %v757 = vlaneseq
      %v758 = vshrl.u32 %v757, 7
      %v759 = vsub.s32 %v756, %v758
      %v760 = vrot.slane %v746, %v759
      %v761 = vcombine.high %v753, %v753
      %v762 = vcombine.high %v760, %v760
      %v763 = vcombine.high %v571, %v571
      %v765 = vunpack.c.l.s4 1983009808
      %v766 = vunpack.c.0.s8 %v765
      %v767 = vlaneseq
      %v768 = vshrl.u32 %v767, 7
      %v769 = vsub.s32 %v766, %v768
      %v770 = vrot.slane %v571, %v769
      %v772 = vunpack.c.l.s4 1983009808
      %v773 = vunpack.c.0.s8 %v772
      %v774 = vlaneseq
      %v775 = vshrl.u32 %v774, 7
      %v776 = vsub.s32 %v773, %v775
      %v777 = vrot.slane %v763, %v776
      %v778 = vcombine.high %v770, %v770
      %v779 = vcombine.high %v777, %v777
      %v780 = vcombine.high %v572, %v572
      %v782 = vunpack.c.l.s4 1983009808
      %v783 = vunpack.c.0.s8 %v782
      %v784 = vlaneseq
      %v785 = vshrl.u32 %v784, 7
      %v786 = vsub.s32 %v783, %v785
      %v787 = vrot.slane %v572, %v786
      %v789 = vunpack.c.l.s4 1983009808
      %v790 = vunpack.c.0.s8 %v789
      %v791 = vlaneseq
      %v792 = vshrl.u32 %v791, 7
      %v793 = vsub.s32 %v790, %v792
      %v794 = vrot.slane %v780, %v793
      %v795 = vcombine.high %v787, %v787
      %v796 = vcombine.high %v794, %v794
      %v797 = vcombine.high %v573, %v573
      %v799 = vunpack.c.l.s4 1983009808
      %v800 = vunpack.c.0.s8 %v799
      %v801 = vlaneseq
      %v802 = vshrl.u32 %v801, 7
      %v803 = vsub.s32 %v800, %v802
      %v804 = vrot.slane %v573, %v803
      %v806 = vunpack.c.l.s4 1983009808
      %v807 = vunpack.c.0.s8 %v806
      %v808 = vlaneseq
      %v809 = vshrl.u32 %v808, 7
      %v810 = vsub.s32 %v807, %v809
      %v811 = vrot.slane %v797, %v810
      %v812 = vcombine.high %v804, %v804
      %v813 = vcombine.high %v811, %v811
      %v814 = vcombine.high %v574, %v574
      %v816 = vunpack.c.l.s4 1983009808
      %v817 = vunpack.c.0.s8 %v816
      %v818 = vlaneseq
      %v819 = vshrl.u32 %v818, 7
      %v820 = vsub.s32 %v817, %v819
      %v821 = vrot.slane %v574, %v820
      %v823 = vunpack.c.l.s4 1983009808
      %v824 = vunpack.c.0.s8 %v823
      %v825 = vlaneseq
      %v826 = vshrl.u32 %v825, 7
      %v827 = vsub.s32 %v824, %v826
      %v828 = vrot.slane %v814, %v827
      %v829 = vcombine.high %v821, %v821
      %v830 = vcombine.high %v828, %v828
      %v831 = vcombine.high %v575, %v575
      %v833 = vunpack.c.l.s4 1983009808
      %v834 = vunpack.c.0.s8 %v833
      %v835 = vlaneseq
      %v836 = vshrl.u32 %v835, 7
      %v837 = vsub.s32 %v834, %v836
      %v838 = vrot.slane %v575, %v837
      %v840 = vunpack.c.l.s4 1983009808
      %v841 = vunpack.c.0.s8 %v840
      %v842 = vlaneseq
      %v843 = vshrl.u32 %v842, 7
      %v844 = vsub.s32 %v841, %v843
      %v845 = vrot.slane %v831, %v844
      %v846 = vcombine.high %v838, %v838
      %v847 = vcombine.high %v845, %v845
      %v848 = vcombine.high %v576, %v576
      %v850 = vunpack.c.l.s4 1983009808
      %v851 = vunpack.c.0.s8 %v850
      %v852 = vlaneseq
      %v853 = vshrl.u32 %v852, 7
      %v854 = vsub.s32 %v851, %v853
      %v855 = vrot.slane %v576, %v854
      %v857 = vunpack.c.l.s4 1983009808
      %v858 = vunpack.c.0.s8 %v857
      %v859 = vlaneseq
      %v860 = vshrl.u32 %v859, 7
      %v861 = vsub.s32 %v858, %v860
      %v862 = vrot.slane %v848, %v861
      %v863 = vcombine.high %v855, %v855
      %v864 = vcombine.high %v862, %v862
      %v929 = vrot.slane %v600, 7
      %v930 = vrot.slane %v929, 2
      %v931 = vrot.slane %v608, 7
      %v932 = vrot.slane %v931, 2
      %v933 = vrot.slane %v607, 7
      %v934 = vrot.slane %v933, 2
      %v935 = vrot.slane %v609, 7
      %v936 = vrot.slane %v935, 2
      %v937 = vrot.slane %v617, 7
      %v938 = vrot.slane %v937, 2
      %v939 = vrot.slane %v625, 7
      %v940 = vrot.slane %v939, 2
      %v941 = vrot.slane %v624, 7
      %v942 = vrot.slane %v941, 2
      %v943 = vrot.slane %v626, 7
      %v944 = vrot.slane %v943, 2
      %v945 = vrot.slane %v634, 7
      %v946 = vrot.slane %v945, 2
      %v947 = vrot.slane %v642, 7
      %v948 = vrot.slane %v947, 2
      %v949 = vrot.slane %v641, 7
      %v950 = vrot.slane %v949, 2
      %v951 = vrot.slane %v643, 7
      %v952 = vrot.slane %v951, 2
      %v953 = vrot.slane %v651, 7
      %v954 = vrot.slane %v953, 2
      %v955 = vrot.slane %v659, 7
      %v956 = vrot.slane %v955, 2
      %v957 = vrot.slane %v658, 7
      %v958 = vrot.slane %v957, 2
      %v959 = vrot.slane %v660, 7
      %v960 = vrot.slane %v959, 2
      %v961 = vrot.slane %v668, 7
      %v962 = vrot.slane %v961, 2
      %v963 = vrot.slane %v676, 7
      %v964 = vrot.slane %v963, 2
      %v965 = vrot.slane %v675, 7
      %v966 = vrot.slane %v965, 2
      %v967 = vrot.slane %v677, 7
      %v968 = vrot.slane %v967, 2
      %v969 = vrot.slane %v685, 7
      %v970 = vrot.slane %v969, 2
      %v971 = vrot.slane %v693, 7
      %v972 = vrot.slane %v971, 2
      %v973 = vrot.slane %v692, 7
      %v974 = vrot.slane %v973, 2
      %v975 = vrot.slane %v694, 7
      %v976 = vrot.slane %v975, 2
      %v977 = vrot.slane %v702, 7
      %v978 = vrot.slane %v977, 2
      %v979 = vrot.slane %v710, 7
      %v980 = vrot.slane %v979, 2
      %v981 = vrot.slane %v709, 7
      %v982 = vrot.slane %v981, 2
      %v983 = vrot.slane %v711, 7
      %v984 = vrot.slane %v983, 2
      %v985 = vrot.slane %v719, 7
      %v986 = vrot.slane %v985, 2
      %v987 = vrot.slane %v727, 7
      %v988 = vrot.slane %v987, 2
      %v989 = vrot.slane %v726, 7
      %v990 = vrot.slane %v989, 2
      %v991 = vrot.slane %v728, 7
      %v992 = vrot.slane %v991, 2
      %v993 = vrot.slane %v736, 7
      %v994 = vrot.slane %v993, 2
      %v995 = vrot.slane %v744, 7
      %v996 = vrot.slane %v995, 2
      %v997 = vrot.slane %v743, 7
      %v998 = vrot.slane %v997, 2
      %v999 = vrot.slane %v745, 7
      %v1000 = vrot.slane %v999, 2
      %v1001 = vrot.slane %v753, 7
      %v1002 = vrot.slane %v1001, 2
      %v1003 = vrot.slane %v761, 7
      %v1004 = vrot.slane %v1003, 2
      %v1005 = vrot.slane %v760, 7
      %v1006 = vrot.slane %v1005, 2
      %v1007 = vrot.slane %v762, 7
      %v1008 = vrot.slane %v1007, 2
      %v1009 = vrot.slane %v770, 7
      %v1010 = vrot.slane %v1009, 2
      %v1011 = vrot.slane %v778, 7
      %v1012 = vrot.slane %v1011, 2
      %v1013 = vrot.slane %v777, 7
      %v1014 = vrot.slane %v1013, 2
      %v1015 = vrot.slane %v779, 7
      %v1016 = vrot.slane %v1015, 2
      %v1017 = vrot.slane %v787, 7
      %v1018 = vrot.slane %v1017, 2
      %v1019 = vrot.slane %v795, 7
      %v1020 = vrot.slane %v1019, 2
      %v1021 = vrot.slane %v794, 7
      %v1022 = vrot.slane %v1021, 2
      %v1023 = vrot.slane %v796, 7
      %v1024 = vrot.slane %v1023, 2
      %v1025 = vrot.slane %v804, 7
      %v1026 = vrot.slane %v1025, 2
      %v1027 = vrot.slane %v812, 7
      %v1028 = vrot.slane %v1027, 2
      %v1029 = vrot.slane %v811, 7
      %v1030 = vrot.slane %v1029, 2
      %v1031 = vrot.slane %v813, 7
      %v1032 = vrot.slane %v1031, 2
      %v1033 = vrot.slane %v821, 7
      %v1034 = vrot.slane %v1033, 2
      %v1035 = vrot.slane %v829, 7
      %v1036 = vrot.slane %v1035, 2
      %v1037 = vrot.slane %v828, 7
      %v1038 = vrot.slane %v1037, 2
      %v1039 = vrot.slane %v830, 7
      %v1040 = vrot.slane %v1039, 2
      %v1041 = vrot.slane %v838, 7
      %v1042 = vrot.slane %v1041, 2
      %v1043 = vrot.slane %v846, 7
      %v1044 = vrot.slane %v1043, 2
      %v1045 = vrot.slane %v845, 7
      %v1046 = vrot.slane %v1045, 2
      %v1047 = vrot.slane %v847, 7
      %v1048 = vrot.slane %v1047, 2
      %v1049 = vrot.slane %v855, 7
      %v1050 = vrot.slane %v1049, 2
      %v1051 = vrot.slane %v863, 7
      %v1052 = vrot.slane %v1051, 2
      %v1053 = vrot.slane %v862, 7
      %v1054 = vrot.slane %v1053, 2
      %v1055 = vrot.slane %v864, 7
      %v1056 = vrot.slane %v1055, 2
      %v1121 = vmax.f32 %v600, %v930
      %v1122 = vmax.f32 %v608, %v932
      %v1123 = vmax.f32 %v607, %v934
      %v1124 = vmax.f32 %v609, %v936
      %v1125 = vmax.f32 %v617, %v938
      %v1126 = vmax.f32 %v625, %v940
      %v1127 = vmax.f32 %v624, %v942
      %v1128 = vmax.f32 %v626, %v944
      %v1129 = vmax.f32 %v634, %v946
      %v1130 = vmax.f32 %v642, %v948
      %v1131 = vmax.f32 %v641, %v950
      %v1132 = vmax.f32 %v643, %v952
      %v1133 = vmax.f32 %v651, %v954
      %v1134 = vmax.f32 %v659, %v956
      %v1135 = vmax.f32 %v658, %v958
      %v1136 = vmax.f32 %v660, %v960
      %v1137 = vmax.f32 %v668, %v962
      %v1138 = vmax.f32 %v676, %v964
      %v1139 = vmax.f32 %v675, %v966
      %v1140 = vmax.f32 %v677, %v968
      %v1141 = vmax.f32 %v685, %v970
      %v1142 = vmax.f32 %v693, %v972
      %v1143 = vmax.f32 %v692, %v974
      %v1144 = vmax.f32 %v694, %v976
      %v1145 = vmax.f32 %v702, %v978
      %v1146 = vmax.f32 %v710, %v980
      %v1147 = vmax.f32 %v709, %v982
      %v1148 = vmax.f32 %v711, %v984
      %v1149 = vmax.f32 %v719, %v986
      %v1150 = vmax.f32 %v727, %v988
      %v1151 = vmax.f32 %v726, %v990
      %v1152 = vmax.f32 %v728, %v992
      %v1153 = vmax.f32 %v736, %v994
      %v1154 = vmax.f32 %v744, %v996
      %v1155 = vmax.f32 %v743, %v998
      %v1156 = vmax.f32 %v745, %v1000
      %v1157 = vmax.f32 %v753, %v1002
      %v1158 = vmax.f32 %v761, %v1004
      %v1159 = vmax.f32 %v760, %v1006
      %v1160 = vmax.f32 %v762, %v1008
      %v1161 = vmax.f32 %v770, %v1010
      %v1162 = vmax.f32 %v778, %v1012
      %v1163 = vmax.f32 %v777, %v1014
      %v1164 = vmax.f32 %v779, %v1016
      %v1165 = vmax.f32 %v787, %v1018
      %v1166 = vmax.f32 %v795, %v1020
      %v1167 = vmax.f32 %v794, %v1022
      %v1168 = vmax.f32 %v796, %v1024
      %v1169 = vmax.f32 %v804, %v1026
      %v1170 = vmax.f32 %v812, %v1028
      %v1171 = vmax.f32 %v811, %v1030
      %v1172 = vmax.f32 %v813, %v1032
      %v1173 = vmax.f32 %v821, %v1034
      %v1174 = vmax.f32 %v829, %v1036
      %v1175 = vmax.f32 %v828, %v1038
      %v1176 = vmax.f32 %v830, %v1040
      %v1177 = vmax.f32 %v838, %v1042
      %v1178 = vmax.f32 %v846, %v1044
      %v1179 = vmax.f32 %v845, %v1046
      %v1180 = vmax.f32 %v847, %v1048
      %v1181 = vmax.f32 %v855, %v1050
      %v1182 = vmax.f32 %v863, %v1052
      %v1183 = vmax.f32 %v862, %v1054
      %v1184 = vmax.f32 %v864, %v1056
      %v1185 = vpack.c.bf16 %v1121, %v1121
      %v1186 = vpack.c.bf16 %v1122, %v1122
      %v1187 = vpack.c.bf16 %v1123, %v1123
      %v1188 = vpack.c.bf16 %v1124, %v1124
      %v1189 = vpack.c.bf16 %v1125, %v1125
      %v1190 = vpack.c.bf16 %v1126, %v1126
      %v1191 = vpack.c.bf16 %v1127, %v1127
      %v1192 = vpack.c.bf16 %v1128, %v1128
      %v1193 = vpack.c.bf16 %v1129, %v1129
      %v1194 = vpack.c.bf16 %v1130, %v1130
      %v1195 = vpack.c.bf16 %v1131, %v1131
      %v1196 = vpack.c.bf16 %v1132, %v1132
      %v1197 = vpack.c.bf16 %v1133, %v1133
      %v1198 = vpack.c.bf16 %v1134, %v1134
      %v1199 = vpack.c.bf16 %v1135, %v1135
      %v1200 = vpack.c.bf16 %v1136, %v1136
      %v1201 = vpack.c.bf16 %v1137, %v1137
      %v1202 = vpack.c.bf16 %v1138, %v1138
      %v1203 = vpack.c.bf16 %v1139, %v1139
      %v1204 = vpack.c.bf16 %v1140, %v1140
      %v1205 = vpack.c.bf16 %v1141, %v1141
      %v1206 = vpack.c.bf16 %v1142, %v1142
      %v1207 = vpack.c.bf16 %v1143, %v1143
      %v1208 = vpack.c.bf16 %v1144, %v1144
      %v1209 = vpack.c.bf16 %v1145, %v1145
      %v1210 = vpack.c.bf16 %v1146, %v1146
      %v1211 = vpack.c.bf16 %v1147, %v1147
      %v1212 = vpack.c.bf16 %v1148, %v1148
      %v1213 = vpack.c.bf16 %v1149, %v1149
      %v1214 = vpack.c.bf16 %v1150, %v1150
      %v1215 = vpack.c.bf16 %v1151, %v1151
      %v1216 = vpack.c.bf16 %v1152, %v1152
      %v1217 = vpack.c.bf16 %v1153, %v1153
      %v1218 = vpack.c.bf16 %v1154, %v1154
      %v1219 = vpack.c.bf16 %v1155, %v1155
      %v1220 = vpack.c.bf16 %v1156, %v1156
      %v1221 = vpack.c.bf16 %v1157, %v1157
      %v1222 = vpack.c.bf16 %v1158, %v1158
      %v1223 = vpack.c.bf16 %v1159, %v1159
      %v1224 = vpack.c.bf16 %v1160, %v1160
      %v1225 = vpack.c.bf16 %v1161, %v1161
      %v1226 = vpack.c.bf16 %v1162, %v1162
      %v1227 = vpack.c.bf16 %v1163, %v1163
      %v1228 = vpack.c.bf16 %v1164, %v1164
      %v1229 = vpack.c.bf16 %v1165, %v1165
      %v1230 = vpack.c.bf16 %v1166, %v1166
      %v1231 = vpack.c.bf16 %v1167, %v1167
      %v1232 = vpack.c.bf16 %v1168, %v1168
      %v1233 = vpack.c.bf16 %v1169, %v1169
      %v1234 = vpack.c.bf16 %v1170, %v1170
      %v1235 = vpack.c.bf16 %v1171, %v1171
      %v1236 = vpack.c.bf16 %v1172, %v1172
      %v1237 = vpack.c.bf16 %v1173, %v1173
      %v1238 = vpack.c.bf16 %v1174, %v1174
      %v1239 = vpack.c.bf16 %v1175, %v1175
      %v1240 = vpack.c.bf16 %v1176, %v1176
      %v1241 = vpack.c.bf16 %v1177, %v1177
      %v1242 = vpack.c.bf16 %v1178, %v1178
      %v1243 = vpack.c.bf16 %v1179, %v1179
      %v1244 = vpack.c.bf16 %v1180, %v1180
      %v1245 = vpack.c.bf16 %v1181, %v1181
      %v1246 = vpack.c.bf16 %v1182, %v1182
      %v1247 = vpack.c.bf16 %v1183, %v1183
      %v1248 = vpack.c.bf16 %v1184, %v1184
      %vm1249 = vcmask 516096
      %vm1250 = vsmask.f32 256
      %vm1251 = vmand %vm1249, %vm1250
      %v1252 = vld [vmem:[%s213] sm:$0x1]
      %v1253 = vsel %vm1251, 0, %v1252
      %1254 = vst [vmem:[%s213] sm:$0x1] %v1253
      %v1255 = vld [vmem:[%s213 + $0x8] sm:$0x1]
      %v1256 = vsel %vm1251, 0, %v1255
      %1257 = vst [vmem:[%s213 + $0x8] sm:$0x1] %v1256
      %v1258 = vld [vmem:[%s213 + $0x10] sm:$0x1]
      %v1259 = vsel %vm1251, 0, %v1258
      %1260 = vst [vmem:[%s213 + $0x10] sm:$0x1] %v1259
      %v1261 = vld [vmem:[%s213 + $0x18] sm:$0x1]
      %v1262 = vsel %vm1251, 0, %v1261
      %1263 = vst [vmem:[%s213 + $0x18] sm:$0x1] %v1262
      %v1264 = vld [vmem:[%s213 + $0x20] sm:$0x1]
      %v1265 = vsel %vm1251, 0, %v1264
      %1266 = vst [vmem:[%s213 + $0x20] sm:$0x1] %v1265
      %v1267 = vld [vmem:[%s213 + $0x28] sm:$0x1]
      %v1268 = vsel %vm1251, 0, %v1267
      %1269 = vst [vmem:[%s213 + $0x28] sm:$0x1] %v1268
      %v1270 = vld [vmem:[%s213 + $0x30] sm:$0x1]
      %v1271 = vsel %vm1251, 0, %v1270
      %1272 = vst [vmem:[%s213 + $0x30] sm:$0x1] %v1271
      %v1273 = vld [vmem:[%s213 + $0x38] sm:$0x1]
      %v1274 = vsel %vm1251, 0, %v1273
      %1275 = vst [vmem:[%s213 + $0x38] sm:$0x1] %v1274
      %v1340 = vunpack.c.l.b16 %v1185
      %v1341 = vunpack.c.l.b16 %v1186
      %v1342 = vunpack.c.l.b16 %v1187
      %v1343 = vunpack.c.l.b16 %v1188
      %v1344 = vunpack.c.l.b16 %v1189
      %v1345 = vunpack.c.l.b16 %v1190
      %v1346 = vunpack.c.l.b16 %v1191
      %v1347 = vunpack.c.l.b16 %v1192
      %v1348 = vunpack.c.l.b16 %v1193
      %v1349 = vunpack.c.l.b16 %v1194
      %v1350 = vunpack.c.l.b16 %v1195
      %v1351 = vunpack.c.l.b16 %v1196
      %v1352 = vunpack.c.l.b16 %v1197
      %v1353 = vunpack.c.l.b16 %v1198
      %v1354 = vunpack.c.l.b16 %v1199
      %v1355 = vunpack.c.l.b16 %v1200
      %v1356 = vunpack.c.l.b16 %v1201
      %v1357 = vunpack.c.l.b16 %v1202
      %v1358 = vunpack.c.l.b16 %v1203
      %v1359 = vunpack.c.l.b16 %v1204
      %v1360 = vunpack.c.l.b16 %v1205
      %v1361 = vunpack.c.l.b16 %v1206
      %v1362 = vunpack.c.l.b16 %v1207
      %v1363 = vunpack.c.l.b16 %v1208
      %v1364 = vunpack.c.l.b16 %v1209
      %v1365 = vunpack.c.l.b16 %v1210
      %v1366 = vunpack.c.l.b16 %v1211
      %v1367 = vunpack.c.l.b16 %v1212
      %v1368 = vunpack.c.l.b16 %v1213
      %v1369 = vunpack.c.l.b16 %v1214
      %v1370 = vunpack.c.l.b16 %v1215
      %v1371 = vunpack.c.l.b16 %v1216
      %v1372 = vunpack.c.l.b16 %v1217
      %v1373 = vunpack.c.l.b16 %v1218
      %v1374 = vunpack.c.l.b16 %v1219
      %v1375 = vunpack.c.l.b16 %v1220
      %v1376 = vunpack.c.l.b16 %v1221
      %v1377 = vunpack.c.l.b16 %v1222
      %v1378 = vunpack.c.l.b16 %v1223
      %v1379 = vunpack.c.l.b16 %v1224
      %v1380 = vunpack.c.l.b16 %v1225
      %v1381 = vunpack.c.l.b16 %v1226
      %v1382 = vunpack.c.l.b16 %v1227
      %v1383 = vunpack.c.l.b16 %v1228
      %v1384 = vunpack.c.l.b16 %v1229
      %v1385 = vunpack.c.l.b16 %v1230
      %v1386 = vunpack.c.l.b16 %v1231
      %v1387 = vunpack.c.l.b16 %v1232
      %v1388 = vunpack.c.l.b16 %v1233
      %v1389 = vunpack.c.l.b16 %v1234
      %v1390 = vunpack.c.l.b16 %v1235
      %v1391 = vunpack.c.l.b16 %v1236
      %v1392 = vunpack.c.l.b16 %v1237
      %v1393 = vunpack.c.l.b16 %v1238
      %v1394 = vunpack.c.l.b16 %v1239
      %v1395 = vunpack.c.l.b16 %v1240
      %v1396 = vunpack.c.l.b16 %v1241
      %v1397 = vunpack.c.l.b16 %v1242
      %v1398 = vunpack.c.l.b16 %v1243
      %v1399 = vunpack.c.l.b16 %v1244
      %v1400 = vunpack.c.l.b16 %v1245
      %v1401 = vunpack.c.l.b16 %v1246
      %v1402 = vunpack.c.l.b16 %v1247
      %v1403 = vunpack.c.l.b16 %v1248
      %v1404 = vpack.c.b16 %v1340, %v1340
      %v1405 = vpack.c.b16 %v1341, %v1341
      %v1406 = vpack.c.b16 %v1342, %v1342
      %v1407 = vpack.c.b16 %v1343, %v1343
      %v1408 = vpack.c.b16 %v1344, %v1344
      %v1409 = vpack.c.b16 %v1345, %v1345
      %v1410 = vpack.c.b16 %v1346, %v1346
      %v1411 = vpack.c.b16 %v1347, %v1347
      %v1412 = vpack.c.b16 %v1348, %v1348
      %v1413 = vpack.c.b16 %v1349, %v1349
      %v1414 = vpack.c.b16 %v1350, %v1350
      %v1415 = vpack.c.b16 %v1351, %v1351
      %v1416 = vpack.c.b16 %v1352, %v1352
      %v1417 = vpack.c.b16 %v1353, %v1353
      %v1418 = vpack.c.b16 %v1354, %v1354
      %v1419 = vpack.c.b16 %v1355, %v1355
      %v1420 = vpack.c.b16 %v1356, %v1356
      %v1421 = vpack.c.b16 %v1357, %v1357
      %v1422 = vpack.c.b16 %v1358, %v1358
      %v1423 = vpack.c.b16 %v1359, %v1359
      %v1424 = vpack.c.b16 %v1360, %v1360
      %v1425 = vpack.c.b16 %v1361, %v1361
      %v1426 = vpack.c.b16 %v1362, %v1362
      %v1427 = vpack.c.b16 %v1363, %v1363
      %v1428 = vpack.c.b16 %v1364, %v1364
      %v1429 = vpack.c.b16 %v1365, %v1365
      %v1430 = vpack.c.b16 %v1366, %v1366
      %v1431 = vpack.c.b16 %v1367, %v1367
      %v1432 = vpack.c.b16 %v1368, %v1368
      %v1433 = vpack.c.b16 %v1369, %v1369
      %v1434 = vpack.c.b16 %v1370, %v1370
      %v1435 = vpack.c.b16 %v1371, %v1371
      %v1436 = vpack.c.b16 %v1372, %v1372
      %v1437 = vpack.c.b16 %v1373, %v1373
      %v1438 = vpack.c.b16 %v1374, %v1374
      %v1439 = vpack.c.b16 %v1375, %v1375
      %v1440 = vpack.c.b16 %v1376, %v1376
      %v1441 = vpack.c.b16 %v1377, %v1377
      %v1442 = vpack.c.b16 %v1378, %v1378
      %v1443 = vpack.c.b16 %v1379, %v1379
      %v1444 = vpack.c.b16 %v1380, %v1380
      %v1445 = vpack.c.b16 %v1381, %v1381
      %v1446 = vpack.c.b16 %v1382, %v1382
      %v1447 = vpack.c.b16 %v1383, %v1383
      %v1448 = vpack.c.b16 %v1384, %v1384
      %v1449 = vpack.c.b16 %v1385, %v1385
      %v1450 = vpack.c.b16 %v1386, %v1386
      %v1451 = vpack.c.b16 %v1387, %v1387
      %v1452 = vpack.c.b16 %v1388, %v1388
      %v1453 = vpack.c.b16 %v1389, %v1389
      %v1454 = vpack.c.b16 %v1390, %v1390
      %v1455 = vpack.c.b16 %v1391, %v1391
      %v1456 = vpack.c.b16 %v1392, %v1392
      %v1457 = vpack.c.b16 %v1393, %v1393
      %v1458 = vpack.c.b16 %v1394, %v1394
      %v1459 = vpack.c.b16 %v1395, %v1395
      %v1460 = vpack.c.b16 %v1396, %v1396
      %v1461 = vpack.c.b16 %v1397, %v1397
      %v1462 = vpack.c.b16 %v1398, %v1398
      %v1463 = vpack.c.b16 %v1399, %v1399
      %v1464 = vpack.c.b16 %v1400, %v1400
      %v1465 = vpack.c.b16 %v1401, %v1401
      %v1466 = vpack.c.b16 %v1402, %v1402
      %v1467 = vpack.c.b16 %v1403, %v1403
      %v1468 = vunpack.c.l.b16 %v1404
      %v1469 = vunpack.c.l.b16 %v1405
      %v1470 = vunpack.c.l.b16 %v1406
      %v1471 = vunpack.c.l.b16 %v1407
      %v1472 = vunpack.c.l.b16 %v1408
      %v1473 = vunpack.c.l.b16 %v1409
      %v1474 = vunpack.c.l.b16 %v1410
      %v1475 = vunpack.c.l.b16 %v1411
      %v1476 = vunpack.c.l.b16 %v1412
      %v1477 = vunpack.c.l.b16 %v1413
      %v1478 = vunpack.c.l.b16 %v1414
      %v1479 = vunpack.c.l.b16 %v1415
      %v1480 = vunpack.c.l.b16 %v1416
      %v1481 = vunpack.c.l.b16 %v1417
      %v1482 = vunpack.c.l.b16 %v1418
      %v1483 = vunpack.c.l.b16 %v1419
      %v1484 = vunpack.c.l.b16 %v1420
      %v1485 = vunpack.c.l.b16 %v1421
      %v1486 = vunpack.c.l.b16 %v1422
      %v1487 = vunpack.c.l.b16 %v1423
      %v1488 = vunpack.c.l.b16 %v1424
      %v1489 = vunpack.c.l.b16 %v1425
      %v1490 = vunpack.c.l.b16 %v1426
      %v1491 = vunpack.c.l.b16 %v1427
      %v1492 = vunpack.c.l.b16 %v1428
      %v1493 = vunpack.c.l.b16 %v1429
      %v1494 = vunpack.c.l.b16 %v1430
      %v1495 = vunpack.c.l.b16 %v1431
      %v1496 = vunpack.c.l.b16 %v1432
      %v1497 = vunpack.c.l.b16 %v1433
      %v1498 = vunpack.c.l.b16 %v1434
      %v1499 = vunpack.c.l.b16 %v1435
      %v1500 = vunpack.c.l.b16 %v1436
      %v1501 = vunpack.c.l.b16 %v1437
      %v1502 = vunpack.c.l.b16 %v1438
      %v1503 = vunpack.c.l.b16 %v1439
      %v1504 = vunpack.c.l.b16 %v1440
      %v1505 = vunpack.c.l.b16 %v1441
      %v1506 = vunpack.c.l.b16 %v1442
      %v1507 = vunpack.c.l.b16 %v1443
      %v1508 = vunpack.c.l.b16 %v1444
      %v1509 = vunpack.c.l.b16 %v1445
      %v1510 = vunpack.c.l.b16 %v1446
      %v1511 = vunpack.c.l.b16 %v1447
      %v1512 = vunpack.c.l.b16 %v1448
      %v1513 = vunpack.c.l.b16 %v1449
      %v1514 = vunpack.c.l.b16 %v1450
      %v1515 = vunpack.c.l.b16 %v1451
      %v1516 = vunpack.c.l.b16 %v1452
      %v1517 = vunpack.c.l.b16 %v1453
      %v1518 = vunpack.c.l.b16 %v1454
      %v1519 = vunpack.c.l.b16 %v1455
      %v1520 = vunpack.c.l.b16 %v1456
      %v1521 = vunpack.c.l.b16 %v1457
      %v1522 = vunpack.c.l.b16 %v1458
      %v1523 = vunpack.c.l.b16 %v1459
      %v1524 = vunpack.c.l.b16 %v1460
      %v1525 = vunpack.c.l.b16 %v1461
      %v1526 = vunpack.c.l.b16 %v1462
      %v1527 = vunpack.c.l.b16 %v1463
      %v1528 = vunpack.c.l.b16 %v1464
      %v1529 = vunpack.c.l.b16 %v1465
      %v1530 = vunpack.c.l.b16 %v1466
      %v1531 = vunpack.c.l.b16 %v1467
      %v1532 = vrot.slane %v1468, 7
      %v1533 = vrot.slane %v1469, 6
      %vm1534 = vcmask 1042434
      %v1535 = vsel %vm1534, %v1533, %v1532
      %v1536 = vrot.slane %v1470, 5
      %vm1537 = vcmask 1043459
      %v1538 = vsel %vm1537, %v1536, %v1535
      %v1539 = vrot.slane %v1471, 4
      %vm1540 = vcmask 1044484
      %v1541 = vsel %vm1540, %v1539, %v1538
      %v1542 = vrot.slane %v1472, 3
      %vm1543 = vcmask 1045509
      %v1544 = vsel %vm1543, %v1542, %v1541
      %v1545 = vrot.slane %v1473, 2
      %vm1546 = vcmask 1046534
      %v1547 = vsel %vm1546, %v1545, %v1544
      %v1548 = vrot.slane %v1474, 1
      %vm1549 = vcmask 1047559
      %v1550 = vsel %vm1549, %v1548, %v1547
      %v1551 = vrot.slane %v1476, 7
      %v1552 = vrot.slane %v1477, 6
      %v1553 = vsel %vm1534, %v1552, %v1551
      %v1554 = vrot.slane %v1478, 5
      %v1555 = vsel %vm1537, %v1554, %v1553
      %v1556 = vrot.slane %v1479, 4
      %v1557 = vsel %vm1540, %v1556, %v1555
      %v1558 = vrot.slane %v1480, 3
      %v1559 = vsel %vm1543, %v1558, %v1557
      %v1560 = vrot.slane %v1481, 2
      %v1561 = vsel %vm1546, %v1560, %v1559
      %v1562 = vrot.slane %v1482, 1
      %v1563 = vsel %vm1549, %v1562, %v1561
      %v1564 = vrot.slane %v1484, 7
      %v1565 = vrot.slane %v1485, 6
      %v1566 = vsel %vm1534, %v1565, %v1564
      %v1567 = vrot.slane %v1486, 5
      %v1568 = vsel %vm1537, %v1567, %v1566
      %v1569 = vrot.slane %v1487, 4
      %v1570 = vsel %vm1540, %v1569, %v1568
      %v1571 = vrot.slane %v1488, 3
      %v1572 = vsel %vm1543, %v1571, %v1570
      %v1573 = vrot.slane %v1489, 2
      %v1574 = vsel %vm1546, %v1573, %v1572
      %v1575 = vrot.slane %v1490, 1
      %v1576 = vsel %vm1549, %v1575, %v1574
      %v1577 = vrot.slane %v1492, 7
      %v1578 = vrot.slane %v1493, 6
      %v1579 = vsel %vm1534, %v1578, %v1577
      %v1580 = vrot.slane %v1494, 5
      %v1581 = vsel %vm1537, %v1580, %v1579
      %v1582 = vrot.slane %v1495, 4
      %v1583 = vsel %vm1540, %v1582, %v1581
      %v1584 = vrot.slane %v1496, 3
      %v1585 = vsel %vm1543, %v1584, %v1583
      %v1586 = vrot.slane %v1497, 2
      %v1587 = vsel %vm1546, %v1586, %v1585
      %v1588 = vrot.slane %v1498, 1
      %v1589 = vsel %vm1549, %v1588, %v1587
      %v1590 = vrot.slane %v1500, 7
      %v1591 = vrot.slane %v1501, 6
      %v1592 = vsel %vm1534, %v1591, %v1590
      %v1593 = vrot.slane %v1502, 5
      %v1594 = vsel %vm1537, %v1593, %v1592
      %v1595 = vrot.slane %v1503, 4
      %v1596 = vsel %vm1540, %v1595, %v1594
      %v1597 = vrot.slane %v1504, 3
      %v1598 = vsel %vm1543, %v1597, %v1596
      %v1599 = vrot.slane %v1505, 2
      %v1600 = vsel %vm1546, %v1599, %v1598
      %v1601 = vrot.slane %v1506, 1
      %v1602 = vsel %vm1549, %v1601, %v1600
      %v1603 = vrot.slane %v1508, 7
      %v1604 = vrot.slane %v1509, 6
      %v1605 = vsel %vm1534, %v1604, %v1603
      %v1606 = vrot.slane %v1510, 5
      %v1607 = vsel %vm1537, %v1606, %v1605
      %v1608 = vrot.slane %v1511, 4
      %v1609 = vsel %vm1540, %v1608, %v1607
      %v1610 = vrot.slane %v1512, 3
      %v1611 = vsel %vm1543, %v1610, %v1609
      %v1612 = vrot.slane %v1513, 2
      %v1613 = vsel %vm1546, %v1612, %v1611
      %v1614 = vrot.slane %v1514, 1
      %v1615 = vsel %vm1549, %v1614, %v1613
      %v1616 = vrot.slane %v1516, 7
      %v1617 = vrot.slane %v1517, 6
      %v1618 = vsel %vm1534, %v1617, %v1616
      %v1619 = vrot.slane %v1518, 5
      %v1620 = vsel %vm1537, %v1619, %v1618
      %v1621 = vrot.slane %v1519, 4
      %v1622 = vsel %vm1540, %v1621, %v1620
      %v1623 = vrot.slane %v1520, 3
      %v1624 = vsel %vm1543, %v1623, %v1622
      %v1625 = vrot.slane %v1521, 2
      %v1626 = vsel %vm1546, %v1625, %v1624
      %v1627 = vrot.slane %v1522, 1
      %v1628 = vsel %vm1549, %v1627, %v1626
      %v1629 = vrot.slane %v1524, 7
      %v1630 = vrot.slane %v1525, 6
      %v1631 = vsel %vm1534, %v1630, %v1629
      %v1632 = vrot.slane %v1526, 5
      %v1633 = vsel %vm1537, %v1632, %v1631
      %v1634 = vrot.slane %v1527, 4
      %v1635 = vsel %vm1540, %v1634, %v1633
      %v1636 = vrot.slane %v1528, 3
      %v1637 = vsel %vm1543, %v1636, %v1635
      %v1638 = vrot.slane %v1529, 2
      %v1639 = vsel %vm1546, %v1638, %v1637
      %v1640 = vrot.slane %v1530, 1
      %v1641 = vsel %vm1549, %v1640, %v1639
      %v1642 = vpack.c.b16 %v1550, %v1550
      %v1643 = vpack.c.b16 %v1475, %v1475
      %v1644 = vpack.c.b16 %v1563, %v1563
      %v1645 = vpack.c.b16 %v1483, %v1483
      %v1646 = vpack.c.b16 %v1576, %v1576
      %v1647 = vpack.c.b16 %v1491, %v1491
      %v1648 = vpack.c.b16 %v1589, %v1589
      %v1649 = vpack.c.b16 %v1499, %v1499
      %v1650 = vpack.c.b16 %v1602, %v1602
      %v1651 = vpack.c.b16 %v1507, %v1507
      %v1652 = vpack.c.b16 %v1615, %v1615
      %v1653 = vpack.c.b16 %v1515, %v1515
      %v1654 = vpack.c.b16 %v1628, %v1628
      %v1655 = vpack.c.b16 %v1523, %v1523
      %v1656 = vpack.c.b16 %v1641, %v1641
      %v1657 = vpack.c.b16 %v1531, %v1531
      %vm1674 = vcmask 519168
      %vm1675 = vsmask.f32 7938
      %vm1676 = vmand %vm1674, %vm1675
      %v1677 = vld [vmem:[%s213] sm:$0xf]
      %v1678 = vsel %vm1676, %v1642, %v1677
      %1679 = vst [vmem:[%s213] sm:$0xf] %v1678
      %v1680 = vld [vmem:[%s213 + $0x4] sm:$0x1]
      %v1681 = vsel %vm1251, %v1643, %v1680
      %1682 = vst [vmem:[%s213 + $0x4] sm:$0x1] %v1681
      %v1683 = vld [vmem:[%s213 + $0x8] sm:$0xf]
      %v1684 = vsel %vm1676, %v1644, %v1683
      %1685 = vst [vmem:[%s213 + $0x8] sm:$0xf] %v1684
      %v1686 = vld [vmem:[%s213 + $0xc] sm:$0x1]
      %v1687 = vsel %vm1251, %v1645, %v1686
      %1688 = vst [vmem:[%s213 + $0xc] sm:$0x1] %v1687
      %v1689 = vld [vmem:[%s213 + $0x10] sm:$0xf]
      %v1690 = vsel %vm1676, %v1646, %v1689
      %1691 = vst [vmem:[%s213 + $0x10] sm:$0xf] %v1690
      %v1692 = vld [vmem:[%s213 + $0x14] sm:$0x1]
      %v1693 = vsel %vm1251, %v1647, %v1692
      %1694 = vst [vmem:[%s213 + $0x14] sm:$0x1] %v1693
      %v1695 = vld [vmem:[%s213 + $0x18] sm:$0xf]
      %v1696 = vsel %vm1676, %v1648, %v1695
      %1697 = vst [vmem:[%s213 + $0x18] sm:$0xf] %v1696
      %v1698 = vld [vmem:[%s213 + $0x1c] sm:$0x1]
      %v1699 = vsel %vm1251, %v1649, %v1698
      %1700 = vst [vmem:[%s213 + $0x1c] sm:$0x1] %v1699
      %v1701 = vld [vmem:[%s213 + $0x20] sm:$0xf]
      %v1702 = vsel %vm1676, %v1650, %v1701
      %1703 = vst [vmem:[%s213 + $0x20] sm:$0xf] %v1702
      %v1704 = vld [vmem:[%s213 + $0x24] sm:$0x1]
      %v1705 = vsel %vm1251, %v1651, %v1704
      %1706 = vst [vmem:[%s213 + $0x24] sm:$0x1] %v1705
      %v1707 = vld [vmem:[%s213 + $0x28] sm:$0xf]
      %v1708 = vsel %vm1676, %v1652, %v1707
      %1709 = vst [vmem:[%s213 + $0x28] sm:$0xf] %v1708
      %v1710 = vld [vmem:[%s213 + $0x2c] sm:$0x1]
      %v1711 = vsel %vm1251, %v1653, %v1710
      %1712 = vst [vmem:[%s213 + $0x2c] sm:$0x1] %v1711
      %v1713 = vld [vmem:[%s213 + $0x30] sm:$0xf]
      %v1714 = vsel %vm1676, %v1654, %v1713
      %1715 = vst [vmem:[%s213 + $0x30] sm:$0xf] %v1714
      %v1716 = vld [vmem:[%s213 + $0x34] sm:$0x1]
      %v1717 = vsel %vm1251, %v1655, %v1716
      %1718 = vst [vmem:[%s213 + $0x34] sm:$0x1] %v1717
      %v1719 = vld [vmem:[%s213 + $0x38] sm:$0xf]
      %v1720 = vsel %vm1676, %v1656, %v1719
      %1721 = vst [vmem:[%s213 + $0x38] sm:$0xf] %v1720
      %v1722 = vld [vmem:[%s213 + $0x3c] sm:$0x1]
      %v1723 = vsel %vm1251, %v1657, %v1722
      %1724 = vst [vmem:[%s213 + $0x3c] sm:$0x1] %v1723
      %vm1725 = vmand %vm1249, %vm1675
      %v1726 = vld [vmem:[%s213 + $0x4] sm:$0x1]
      %v1727 = vsel %vm1725, 0, %v1726
      %1728 = vst [vmem:[%s213 + $0x4] sm:$0x1] %v1727
      %v1729 = vld [vmem:[%s213 + $0xc] sm:$0x1]
      %v1730 = vsel %vm1725, 0, %v1729
      %1731 = vst [vmem:[%s213 + $0xc] sm:$0x1] %v1730
      %v1732 = vld [vmem:[%s213 + $0x14] sm:$0x1]
      %v1733 = vsel %vm1725, 0, %v1732
      %1734 = vst [vmem:[%s213 + $0x14] sm:$0x1] %v1733
      %v1735 = vld [vmem:[%s213 + $0x1c] sm:$0x1]
      %v1736 = vsel %vm1725, 0, %v1735
      %1737 = vst [vmem:[%s213 + $0x1c] sm:$0x1] %v1736
      %v1738 = vld [vmem:[%s213 + $0x24] sm:$0x1]
      %v1739 = vsel %vm1725, 0, %v1738
      %1740 = vst [vmem:[%s213 + $0x24] sm:$0x1] %v1739
      %v1741 = vld [vmem:[%s213 + $0x2c] sm:$0x1]
      %v1742 = vsel %vm1725, 0, %v1741
      %1743 = vst [vmem:[%s213 + $0x2c] sm:$0x1] %v1742
      %v1744 = vld [vmem:[%s213 + $0x34] sm:$0x1]
      %v1745 = vsel %vm1725, 0, %v1744
      %1746 = vst [vmem:[%s213 + $0x34] sm:$0x1] %v1745
      %v1747 = vld [vmem:[%s213 + $0x3c] sm:$0x1]
      %v1748 = vsel %vm1725, 0, %v1747
      %1749 = vst [vmem:[%s213 + $0x3c] sm:$0x1] %v1748
      %s1750 = smul.u32 8, %s19
      %p1751 = scmp.lt.s32.totalorder %s18, 1
      %s1752 = scalar_select %p1751, %s18, 1
      %p1753 = scmp.lt.s32.totalorder %s1750, 7
      %s1754 = scalar_select %p1753, %s1750, 7
      %s1755 = smul.addr %s1754, 2
      %s1756 = smul.addr %s1752, 16
      %s1757 = sadd.s32 %s1755, %s1756
      %s1758 = smul.addr %s1757, 4
      %s1759 = scalar_lea.vmem %s3, %s1758
      // Predicated region
      $region33: #{stereo_depth_prediction.2} parent=31 // pred_check
        %p1760 = pneg %p116
      $region34: #{stereo_depth_prediction.2} parent=31 // pred_check_branch
        %1762 = sbr.rel (%p1760) target = $region36
      $region35: #{stereo_depth_prediction.2} parent=31 // pred_region
        %s1763 = smul.u32 8, %s19
      $region36: #{stereo_depth_prediction.2} parent=31 // pred_fallthru
        _
    $region32: #{stereo_depth_prediction.2} parent=5 // pred_fallthru
      _
    %p1764 = scmp.le.s32.totalorder 2, %s9
    // Predicated region
    $region37: #{stereo_depth_prediction.2} parent=5 // pred_check
      %p1765 = pneg %p1764
    $region38: #{stereo_depth_prediction.2} parent=5 // pred_check_branch
      %1767 = sbr.rel (%p1765) target = $region40
    $region39: #{stereo_depth_prediction.2} parent=5 // pred_region
      %s1768 = ssub.s32 %s9, 2
      // Predicated region
      $region41: #{stereo_depth_prediction.2} parent=39 // pred_check
        %p1769 = pneg %p122
      $region42: #{stereo_depth_prediction.2} parent=39 // pred_check_branch
        %1771 = sbr.rel (%p1769) target = $region44
      $region43: #{stereo_depth_prediction.2} parent=39 // pred_region
        %s1772 = smul.u32 8, %s21
        %p1773 = scmp.lt.s32.totalorder %s20, 1
        %s1774 = scalar_select %p1773, %s20, 1
        %p1775 = scmp.lt.s32.totalorder %s1772, 7
        %s1776 = scalar_select %p1775, %s1772, 7
        %s1777 = smul.addr %s1776, 2
        %s1778 = smul.addr %s1774, 16
        %s1779 = sadd.s32 %s1777, %s1778
        %s1780 = smul.addr %s1779, 4
        %s1781 = scalar_lea.vmem %s3, %s1780
      $region44: #{stereo_depth_prediction.2} parent=39 // pred_fallthru
        _
    $region40: #{stereo_depth_prediction.2} parent=5 // pred_fallthru
      _
  $region6: #{stereo_depth_prediction.2} parent=0 // loop_footer
    %s13 = sadd.s32 1, %s9
  $region7: #{stereo_depth_prediction.2} parent=0 // loop_footer_branch
    %8 = sbr.rel target = $region3
  $region8: #{stereo_depth_prediction.2} parent=0 // loop_exit
    _

// kernel: stereo_depth_prediction.3
$region0: #{stereo_depth_prediction.3}
  #allocation0 [shape = 'u32[]', space=smem, size = 0x4, offset = 0x4, fixed_abs, tag = 'smem constant byte address 0x4 - core index']
  #allocation1 [shape = 'u32[144,128]{1,0:T(1,128)}', space=vmem, size = 0x12000, scoped, tag = 'internal scratch']
  #allocation2 [shape = 'f32[1]{0:T(128)S(6)}', space=smem, size = 0x200, scoped, tag = 'scoped memory for stereo_depth_prediction.3']
  %s0 = inlined_call_operand.vmem [shape: bf16[2,8,10,64], index: 0, kind: input, shape index: {}, may-alias: {0,1,2}]
  %s1 = inlined_call_operand.vmem [shape: bf16[2,8,10,64], index: 1, kind: input, shape index: {}, may-alias: {0,1,2}]
  %s2 = inlined_call_operand.vmem [shape: bf16[2,8,10,64], index: 2, kind: input, shape index: {}, may-alias: {0,1,2}]
  %s3 = inlined_call_operand.vmem [shape: bf16[3,192,128], index: 3, kind: input, shape index: {}]
  %s4 = inlined_call_operand.vmem [shape: f32[1,128], index: 4, kind: input, shape index: {}]
  %s5 = inlined_call_operand.vmem [shape: f32[1,128], index: 5, kind: input, shape index: {}]
  %s6 = inlined_call_operand.<no memory space> [shape: f32[1], index: 6, kind: input, shape index: {}]
  %s7 = inlined_call_operand.hbm [shape: f32[2,4,4], index: 7, kind: output, shape index: {}]
  %s8 = sld [smem:[#allocation0]]
  $region61: #{stereo_depth_prediction.3} parent=0
    _
  %s10 = ssub.s32 1, %s8
  %s11 = scalar_select 0, %s10, %s8
  %12 = sst [smem:[#allocation2]] %s6
  $region1: #{stereo_depth_prediction.3} parent=0
    #allocation3 [shape = 'u8[4096]{0}', space=vmem, size = 0x1000, scoped, tag = 'output window, operand 0']
    #allocation4 [shape = 's32[2]{0}', space=sflag, size = 0x8, scoped, tag = 'scoped memory for stereo_depth_prediction.3']
    %13 = vsyncpa [#allocation4], 0
    %s14 = scalar_lea.sflag [#allocation4], 1
    %15 = vsyncpa %s14, 0
    loop: start=0, step=1, limit=4
    $region2: #{stereo_depth_prediction.3} parent=1 // loop_pre_header
      _
    $region3: #{stereo_depth_prediction.3} parent=1 // loop_header
      %s17 = sphi 0, %s21
      %p18 = scmp.ge.s32.totalorder %s17, 4
      %s24 = sphi 0, %s36
      %s25 = sphi 0, %s32
      %s26 = sphi 0, %s24
      %s27 = sphi 0, %s25
      %s28 = sphi 0, %s26
      %s29 = sphi 0, %s27
      %s49 = sphi 0, %s51
      %s52 = sphi 0, %s49
      %s53 = sphi 0, %s52
      %s69 = sphi 0, %s53
      %s77 = sphi 0, %s79
      %s80 = sphi 0, %s77
      %s81 = sphi 0, %s80
      %s97 = sphi 0, %s81
      %s113 = sphi 0, %s115
      %s116 = sphi 0, %s113
      %s117 = sphi 0, %s116
      %s133 = sphi 0, %s117
      %s137 = sphi 0, %s137
      %s139 = sphi 0, %s137
      %s140 = sphi 0, %s139
      %s154 = sphi 0, %s140
      %s158 = sphi 0, %s158
      %s160 = sphi 0, %s158
      %s161 = sphi 0, %s160
      %s175 = sphi 0, %s161
      %s179 = sphi 0, %s179
      %s181 = sphi 0, %s179
      %s182 = sphi 0, %s181
      %s196 = sphi 0, %s182
      %s200 = sphi 0, %s200
      %s202 = sphi 0, %s200
      %s203 = sphi 0, %s202
      %s217 = sphi 0, %s203
      %s225 = sphi 0, %s227
      %s228 = sphi 0, %s225
      %s229 = sphi 0, %s228
      %s245 = sphi 0, %s229
    $region4: #{stereo_depth_prediction.3} parent=1 // loop_header_branch
      %20 = sbr.rel (%p18) target = $region8
    $region5: #{stereo_depth_prediction.3} parent=1 // loop_body
      %s22 = ssub.s32 %s17, 1
      %s23 = ssub.s32 %s17, 2
      %s30 = sadd.s32 1, %s25
      %p31 = scmp.ge.s32.totalorder %s30, 1
      %s32 = scalar_select %p31, 0, %s30
      %s33 = sadd.s32 1, %s24
      %s34 = scalar_select %p31, %s33, %s24
      %p35 = scmp.ge.s32.totalorder %s34, 2
      %s36 = scalar_select %p35, 0, %s34
      %s37 = smul.u32 %s25, 8
      %s38 = ssub.s32 %s37, 1
      %p39 = scmp.gt.s32.totalorder %s38, 0
      %s40 = scalar_select %p39, %s38, 0
      %s41 = smul.u32 %s32, 8
      %s42 = ssub.s32 %s41, 1
      %p43 = scmp.gt.s32.totalorder %s42, 0
      %s44 = scalar_select %p43, %s42, 0
      %s45 = ssub.s32 %s24, %s36
      %s46 = ssub.s32 %s40, %s44
      %s47 = sor.u32 %s45, %s46
      %p48 = scmp.eq.s32.totalorder %s47, 0
      %s50 = sadd.s32 %s49, 1
      %s51 = scalar_select %p48, %s49, %s50
      %p54 = pneg %p48
      %p55 = scmp.eq.s32.totalorder %s17, 1
      %p56 = por %p54, %p55
      %p57 = scmp.ne.s32.totalorder %s49, %s52
      %p58 = scmp.eq.s32.totalorder %s17, 0
      %p59 = por %p57, %p58
      %p60 = scmp.ne.s32.totalorder %s49, %s52
      %p61 = scmp.eq.s32.totalorder %s22, 1
      %p62 = por %p60, %p61
      %p63 = scmp.ne.s32.totalorder %s52, %s53
      %p64 = scmp.eq.s32.totalorder %s22, 0
      %p65 = por %p63, %p64
      %p66 = scmp.ne.s32.totalorder %s52, %s53
      %p67 = scmp.eq.s32.totalorder %s23, 1
      %p68 = por %p66, %p67
      %p70 = scmp.ne.s32.totalorder %s53, %s69
      %p71 = scmp.eq.s32.totalorder %s23, 0
      %p72 = por %p70, %p71
      %s73 = ssub.s32 %s24, %s36
      %s74 = ssub.s32 %s25, %s32
      %s75 = sor.u32 %s73, %s74
      %p76 = scmp.eq.s32.totalorder %s75, 0
      %s78 = sadd.s32 %s77, 1
      %s79 = scalar_select %p76, %s77, %s78
      %p82 = pneg %p76
      %p83 = scmp.eq.s32.totalorder %s17, 1
      %p84 = por %p82, %p83
      %p85 = scmp.ne.s32.totalorder %s77, %s80
      %p86 = scmp.eq.s32.totalorder %s17, 0
      %p87 = por %p85, %p86
      %p88 = scmp.ne.s32.totalorder %s77, %s80
      %p89 = scmp.eq.s32.totalorder %s22, 1
      %p90 = por %p88, %p89
      %p91 = scmp.ne.s32.totalorder %s80, %s81
      %p92 = scmp.eq.s32.totalorder %s22, 0
      %p93 = por %p91, %p92
      %p94 = scmp.ne.s32.totalorder %s80, %s81
      %p95 = scmp.eq.s32.totalorder %s23, 1
      %p96 = por %p94, %p95
      %p98 = scmp.ne.s32.totalorder %s81, %s97
      %p99 = scmp.eq.s32.totalorder %s23, 0
      %p100 = por %p98, %p99
      %s101 = sadd.s32 %s25, 1
      %s102 = smul.u32 %s101, 8
      %p103 = scmp.lt.s32.totalorder %s102, 7
      %s104 = scalar_select %p103, %s102, 7
      %s105 = sadd.s32 %s32, 1
      %s106 = smul.u32 %s105, 8
      %p107 = scmp.lt.s32.totalorder %s106, 7
      %s108 = scalar_select %p107, %s106, 7
      %s109 = ssub.s32 %s24, %s36
      %s110 = ssub.s32 %s104, %s108
      %s111 = sor.u32 %s109, %s110
      %p112 = scmp.eq.s32.totalorder %s111, 0
      %s114 = sadd.s32 %s113, 1
      %s115 = scalar_select %p112, %s113, %s114
      %p118 = pneg %p112
      %p119 = scmp.eq.s32.totalorder %s17, 1
      %p120 = por %p118, %p119
      %p121 = scmp.ne.s32.totalorder %s113, %s116
      %p122 = scmp.eq.s32.totalorder %s17, 0
      %p123 = por %p121, %p122
      %p124 = scmp.ne.s32.totalorder %s113, %s116
      %p125 = scmp.eq.s32.totalorder %s22, 1
      %p126 = por %p124, %p125
      %p127 = scmp.ne.s32.totalorder %s116, %s117
      %p128 = scmp.eq.s32.totalorder %s22, 0
      %p129 = por %p127, %p128
      %p130 = scmp.ne.s32.totalorder %s116, %s117
      %p131 = scmp.eq.s32.totalorder %s23, 1
      %p132 = por %p130, %p131
      %p134 = scmp.ne.s32.totalorder %s117, %s133
      %p135 = scmp.eq.s32.totalorder %s23, 0
      %p136 = por %p134, %p135
      %s138 = sadd.s32 %s137, 1
      %p141 = scmp.eq.s32.totalorder %s17, 1
      %p142 = scmp.ne.s32.totalorder %s137, %s139
      %p143 = scmp.eq.s32.totalorder %s17, 0
      %p144 = por %p142, %p143
      %p145 = scmp.ne.s32.totalorder %s137, %s139
      %p146 = scmp.eq.s32.totalorder %s22, 1
      %p147 = por %p145, %p146
      %p148 = scmp.ne.s32.totalorder %s139, %s140
      %p149 = scmp.eq.s32.totalorder %s22, 0
      %p150 = por %p148, %p149
      %p151 = scmp.ne.s32.totalorder %s139, %s140
      %p152 = scmp.eq.s32.totalorder %s23, 1
      %p153 = por %p151, %p152
      %p155 = scmp.ne.s32.totalorder %s140, %s154
      %p156 = scmp.eq.s32.totalorder %s23, 0
      %p157 = por %p155, %p156
      %s159 = sadd.s32 %s158, 1
      %p162 = scmp.eq.s32.totalorder %s17, 1
      %p163 = scmp.ne.s32.totalorder %s158, %s160
      %p164 = scmp.eq.s32.totalorder %s17, 0
      %p165 = por %p163, %p164
      %p166 = scmp.ne.s32.totalorder %s158, %s160
      %p167 = scmp.eq.s32.totalorder %s22, 1
      %p168 = por %p166, %p167
      %p169 = scmp.ne.s32.totalorder %s160, %s161
      %p170 = scmp.eq.s32.totalorder %s22, 0
      %p171 = por %p169, %p170
      %p172 = scmp.ne.s32.totalorder %s160, %s161
      %p173 = scmp.eq.s32.totalorder %s23, 1
      %p174 = por %p172, %p173
      %p176 = scmp.ne.s32.totalorder %s161, %s175
      %p177 = scmp.eq.s32.totalorder %s23, 0
      %p178 = por %p176, %p177
      %s180 = sadd.s32 %s179, 1
      %p183 = scmp.eq.s32.totalorder %s17, 1
      %p184 = scmp.ne.s32.totalorder %s179, %s181
      %p185 = scmp.eq.s32.totalorder %s17, 0
      %p186 = por %p184, %p185
      %p187 = scmp.ne.s32.totalorder %s179, %s181
      %p188 = scmp.eq.s32.totalorder %s22, 1
      %p189 = por %p187, %p188
      %p190 = scmp.ne.s32.totalorder %s181, %s182
      %p191 = scmp.eq.s32.totalorder %s22, 0
      %p192 = por %p190, %p191
      %p193 = scmp.ne.s32.totalorder %s181, %s182
      %p194 = scmp.eq.s32.totalorder %s23, 1
      %p195 = por %p193, %p194
      %p197 = scmp.ne.s32.totalorder %s182, %s196
      %p198 = scmp.eq.s32.totalorder %s23, 0
      %p199 = por %p197, %p198
      %s201 = sadd.s32 %s200, 1
      %p204 = scmp.eq.s32.totalorder %s17, 1
      %p205 = scmp.ne.s32.totalorder %s200, %s202
      %p206 = scmp.eq.s32.totalorder %s17, 0
      %p207 = por %p205, %p206
      %p208 = scmp.ne.s32.totalorder %s200, %s202
      %p209 = scmp.eq.s32.totalorder %s22, 1
      %p210 = por %p208, %p209
      %p211 = scmp.ne.s32.totalorder %s202, %s203
      %p212 = scmp.eq.s32.totalorder %s22, 0
      %p213 = por %p211, %p212
      %p214 = scmp.ne.s32.totalorder %s202, %s203
      %p215 = scmp.eq.s32.totalorder %s23, 1
      %p216 = por %p214, %p215
      %p218 = scmp.ne.s32.totalorder %s203, %s217
      %p219 = scmp.eq.s32.totalorder %s23, 0
      %p220 = por %p218, %p219
      %s221 = ssub.s32 %s24, %s36
      %s222 = ssub.s32 %s25, %s32
      %s223 = sor.u32 %s221, %s222
      %p224 = scmp.eq.s32.totalorder %s223, 0
      %s226 = sadd.s32 %s225, 1
      %s227 = scalar_select %p224, %s225, %s226
      %p230 = pneg %p224
      %p231 = scmp.eq.s32.totalorder %s17, 1
      %p232 = por %p230, %p231
      %p233 = scmp.ne.s32.totalorder %s225, %s228
      %p234 = scmp.eq.s32.totalorder %s17, 0
      %p235 = por %p233, %p234
      %p236 = scmp.ne.s32.totalorder %s225, %s228
      %p237 = scmp.eq.s32.totalorder %s22, 1
      %p238 = por %p236, %p237
      %p239 = scmp.ne.s32.totalorder %s228, %s229
      %p240 = scmp.eq.s32.totalorder %s22, 0
      %p241 = por %p239, %p240
      %p242 = scmp.ne.s32.totalorder %s228, %s229
      %p243 = scmp.eq.s32.totalorder %s23, 1
      %p244 = por %p242, %p243
      %p246 = scmp.ne.s32.totalorder %s229, %s245
      %p247 = scmp.eq.s32.totalorder %s23, 0
      %p248 = por %p246, %p247
      %p249 = scmp.le.s32.totalorder 1, %s17
      %p250 = scmp.lt.s32.totalorder %s17, 3
      %p251 = pnand %p249, %p250
      %p252 = pneg %p251
      // Predicated region
      $region9: #{stereo_depth_prediction.3} parent=5 // pred_check
        _
      $region10: #{stereo_depth_prediction.3} parent=5 // pred_check_branch
        %254 = sbr.rel (%p251) target = $region12
      $region11: #{stereo_depth_prediction.3} parent=5 // pred_region
        %s255 = ssub.s32 %s17, 1
        // Predicated region
        $region13: #{stereo_depth_prediction.3} parent=11 // pred_check
          %p256 = pneg %p150
        $region14: #{stereo_depth_prediction.3} parent=11 // pred_check_branch
          %258 = sbr.rel (%p256) target = $region16
        $region15: #{stereo_depth_prediction.3} parent=11 // pred_region
          _
        $region16: #{stereo_depth_prediction.3} parent=11 // pred_fallthru
          _
        // Predicated region
        $region17: #{stereo_depth_prediction.3} parent=11 // pred_check
          %p259 = pneg %p171
        $region18: #{stereo_depth_prediction.3} parent=11 // pred_check_branch
          %261 = sbr.rel (%p259) target = $region20
        $region19: #{stereo_depth_prediction.3} parent=11 // pred_region
          _
        $region20: #{stereo_depth_prediction.3} parent=11 // pred_fallthru
          _
        // Predicated region
        $region21: #{stereo_depth_prediction.3} parent=11 // pred_check
          %p262 = pneg %p192
        $region22: #{stereo_depth_prediction.3} parent=11 // pred_check_branch
          %264 = sbr.rel (%p262) target = $region24
        $region23: #{stereo_depth_prediction.3} parent=11 // pred_region
          _
        $region24: #{stereo_depth_prediction.3} parent=11 // pred_fallthru
          _
        // Predicated region
        $region25: #{stereo_depth_prediction.3} parent=11 // pred_check
          %p265 = pneg %p213
        $region26: #{stereo_depth_prediction.3} parent=11 // pred_check_branch
          %267 = sbr.rel (%p265) target = $region28
        $region27: #{stereo_depth_prediction.3} parent=11 // pred_region
          _
        $region28: #{stereo_depth_prediction.3} parent=11 // pred_fallthru
          _
      $region12: #{stereo_depth_prediction.3} parent=5 // pred_fallthru
        _
      %p268 = scmp.lt.s32.totalorder %s17, 2
      // Predicated region
      $region29: #{stereo_depth_prediction.3} parent=5 // pred_check
        %p269 = pneg %p268
      $region30: #{stereo_depth_prediction.3} parent=5 // pred_check_branch
        %271 = sbr.rel (%p269) target = $region32
      $region31: #{stereo_depth_prediction.3} parent=5 // pred_region
        // Predicated region
        $region33: #{stereo_depth_prediction.3} parent=31 // pred_check
          %p272 = pneg %p59
        $region34: #{stereo_depth_prediction.3} parent=31 // pred_check_branch
          %274 = sbr.rel (%p272) target = $region36
        $region35: #{stereo_depth_prediction.3} parent=31 // pred_region
          %s275 = smul.u32 %s25, 8
          %s276 = ssub.s32 %s275, 1
          %p277 = scmp.gt.s32.totalorder %s276, 0
          %s278 = scalar_select %p277, %s276, 0
          %p279 = scmp.lt.s32.totalorder %s24, 1
          %s280 = scalar_select %p279, %s24, 1
          %p281 = scmp.lt.s32.totalorder %s278, 7
          %s282 = scalar_select %p281, %s278, 7
          %s283 = smul.addr %s282, 2
          %s284 = smul.addr %s280, 16
          %s285 = sadd.s32 %s283, %s284
          %s286 = smul.addr %s285, 4
          %s287 = scalar_lea.vmem %s0, %s286
          %s288 = smul.u32 %s25, 8
          %s289 = ssub.s32 %s288, 1
          %p290 = scmp.gt.s32.totalorder %s289, 0
          %s291 = scalar_select %p290, %s289, 0
        $region36: #{stereo_depth_prediction.3} parent=31 // pred_fallthru
          _
        // Predicated region
        $region37: #{stereo_depth_prediction.3} parent=31 // pred_check
          %p292 = pneg %p87
        $region38: #{stereo_depth_prediction.3} parent=31 // pred_check_branch
          %294 = sbr.rel (%p292) target = $region40
        $region39: #{stereo_depth_prediction.3} parent=31 // pred_region
          %s295 = smul.u32 8, %s25
          %p296 = scmp.lt.s32.totalorder %s24, 1
          %s297 = scalar_select %p296, %s24, 1
          %p298 = scmp.lt.s32.totalorder %s295, 7
          %s299 = scalar_select %p298, %s295, 7
          %s300 = smul.addr %s299, 2
          %s301 = smul.addr %s297, 16
          %s302 = sadd.s32 %s300, %s301
          %s303 = smul.addr %s302, 4
          %s304 = scalar_lea.vmem %s1, %s303
          %s305 = smul.u32 8, %s25
        $region40: #{stereo_depth_prediction.3} parent=31 // pred_fallthru
          _
        // Predicated region
        $region41: #{stereo_depth_prediction.3} parent=31 // pred_check
          %p306 = pneg %p123
        $region42: #{stereo_depth_prediction.3} parent=31 // pred_check_branch
          %308 = sbr.rel (%p306) target = $region44
        $region43: #{stereo_depth_prediction.3} parent=31 // pred_region
          %s309 = sadd.s32 %s25, 1
          %s310 = smul.u32 %s309, 8
          %p311 = scmp.lt.s32.totalorder %s310, 7
          %s312 = scalar_select %p311, %s310, 7
          %p313 = scmp.lt.s32.totalorder %s24, 1
          %s314 = scalar_select %p313, %s24, 1
          %p315 = scmp.lt.s32.totalorder %s312, 7
          %s316 = scalar_select %p315, %s312, 7
          %s317 = smul.addr %s316, 2
          %s318 = smul.addr %s314, 16
          %s319 = sadd.s32 %s317, %s318
          %s320 = smul.addr %s319, 4
          %s321 = scalar_lea.vmem %s2, %s320
          %s322 = sadd.s32 %s25, 1
          %s323 = smul.u32 %s322, 8
          %p324 = scmp.lt.s32.totalorder %s323, 7
          %s325 = scalar_select %p324, %s323, 7
        $region44: #{stereo_depth_prediction.3} parent=31 // pred_fallthru
          _
      $region32: #{stereo_depth_prediction.3} parent=5 // pred_fallthru
        _
      %p326 = scmp.le.s32.totalorder 1, %s17
      %p327 = scmp.lt.s32.totalorder %s17, 3
      %p328 = pnand %p326, %p327
      %p329 = pneg %p328
      // Predicated region
      $region45: #{stereo_depth_prediction.3} parent=5 // pred_check
        _
      $region46: #{stereo_depth_prediction.3} parent=5 // pred_check_branch
        %331 = sbr.rel (%p328) target = $region48
      $region47: #{stereo_depth_prediction.3} parent=5 // pred_region
        %s332 = ssub.s32 %s17, 1
        %s333 = smul.u32 %s27, 8
        %s334 = ssub.s32 %s333, 1
        %p335 = scmp.gt.s32.totalorder %s334, 0
        %s336 = scalar_select %p335, %s334, 0
        %p337 = scmp.lt.s32.totalorder %s26, 1
        %s338 = scalar_select %p337, %s26, 1
        %p339 = scmp.lt.s32.totalorder %s336, 7
        %s340 = scalar_select %p339, %s336, 7
        %s341 = smul.addr %s340, 2
        %s342 = smul.addr %s338, 16
        %s343 = sadd.s32 %s341, %s342
        %s344 = smul.addr %s343, 4
        %s345 = scalar_lea.vmem %s0, %s344
        %p346 = pneg %p65
        %p347 = pneg %p62
        %s348 = smul.u32 8, %s27
        %p349 = scmp.lt.s32.totalorder %s26, 1
        %s350 = scalar_select %p349, %s26, 1
        %p351 = scmp.lt.s32.totalorder %s348, 7
        %s352 = scalar_select %p351, %s348, 7
        %s353 = smul.addr %s352, 2
        %s354 = smul.addr %s350, 16
        %s355 = sadd.s32 %s353, %s354
        %s356 = smul.addr %s355, 4
        %s357 = scalar_lea.vmem %s1, %s356
        %p358 = pneg %p93
        %p359 = pneg %p90
        %s360 = sadd.s32 %s27, 1
        %s361 = smul.u32 %s360, 8
        %p362 = scmp.lt.s32.totalorder %s361, 7
        %s363 = scalar_select %p362, %s361, 7
        %p364 = scmp.lt.s32.totalorder %s26, 1
        %s365 = scalar_select %p364, %s26, 1
        %p366 = scmp.lt.s32.totalorder %s363, 7
        %s367 = scalar_select %p366, %s363, 7
        %s368 = smul.addr %s367, 2
        %s369 = smul.addr %s365, 16
        %s370 = sadd.s32 %s368, %s369
        %s371 = smul.addr %s370, 4
        %s372 = scalar_lea.vmem %s2, %s371
        %p373 = pneg %p129
        %p374 = pneg %p126
        %p375 = pneg %p150
        %p376 = pneg %p147
        %p377 = pneg %p171
        %p378 = pneg %p168
        %p379 = pneg %p192
        %p380 = pneg %p189
        %p381 = pneg %p213
        %p382 = pneg %p210
        %p383 = pneg %p241
        %p384 = pneg %p238
        %s385 = sand.u32 %s228, 1
        %s386 = scalar_lea.sflag [#allocation4], %s385
        %s387 = sand.u32 %s228, 1
        %s388 = smul.addr %s387, 4
        %s389 = scalar_lea.vmem [#allocation3], %s388
        %s390 = smul.u32 %s27, 8
        %s391 = ssub.s32 %s390, 1
        %p392 = scmp.gt.s32.totalorder %s391, 0
        %s393 = scalar_select %p392, %s391, 0
        %p394 = scmp.lt.s32.totalorder %s26, 1
        %s395 = scalar_select %p394, %s26, 1
        %p396 = scmp.lt.s32.totalorder %s393, 7
        %s397 = scalar_select %p396, %s393, 7
        %s398 = smul.addr %s397, 2
        %s399 = smul.addr %s395, 16
        %s400 = sadd.s32 %s398, %s399
        %s401 = smul.addr %s400, 4
        %s402 = scalar_lea.vmem %s0, %s401
        %s403 = smul.u32 %s27, 8
        %s404 = ssub.s32 %s403, 1
        %p405 = scmp.gt.s32.totalorder %s404, 0
        %s406 = scalar_select %p405, %s404, 0
        %s407 = smul.u32 8, %s27
        %p408 = scmp.lt.s32.totalorder %s26, 1
        %s409 = scalar_select %p408, %s26, 1
        %p410 = scmp.lt.s32.totalorder %s407, 7
        %s411 = scalar_select %p410, %s407, 7
        %s412 = smul.addr %s411, 2
        %s413 = smul.addr %s409, 16
        %s414 = sadd.s32 %s412, %s413
        %s415 = smul.addr %s414, 4
        %s416 = scalar_lea.vmem %s1, %s415
        %s417 = smul.u32 8, %s27
        %s418 = sadd.s32 %s27, 1
        %s419 = smul.u32 %s418, 8
        %p420 = scmp.lt.s32.totalorder %s419, 7
        %s421 = scalar_select %p420, %s419, 7
        %p422 = scmp.lt.s32.totalorder %s26, 1
        %s423 = scalar_select %p422, %s26, 1
        %p424 = scmp.lt.s32.totalorder %s421, 7
        %s425 = scalar_select %p424, %s421, 7
        %s426 = smul.addr %s425, 2
        %s427 = smul.addr %s423, 16
        %s428 = sadd.s32 %s426, %s427
        %s429 = smul.addr %s428, 4
        %s430 = scalar_lea.vmem %s2, %s429
        %s431 = sadd.s32 %s27, 1
        %s432 = smul.u32 %s431, 8
        %p433 = scmp.lt.s32.totalorder %s432, 7
        %s434 = scalar_select %p433, %s432, 7
        %v436 = vld [vmem:[%s416] sm:$0xf]
        %v437 = vld [vmem:[%s416 + $0x4] sm:$0x1]
        %v438 = vld [vmem:[%s416 + $0x8] sm:$0xf]
        %v439 = vld [vmem:[%s416 + $0xc] sm:$0x1]
        %v440 = vld [vmem:[%s416 + $0x10] sm:$0xf]
        %v441 = vld [vmem:[%s416 + $0x14] sm:$0x1]
        %v442 = vld [vmem:[%s416 + $0x18] sm:$0xf]
        %v443 = vld [vmem:[%s416 + $0x1c] sm:$0x1]
        %v444 = vld [vmem:[%s416 + $0x20] sm:$0xf]
        %v445 = vld [vmem:[%s416 + $0x24] sm:$0x1]
        %v446 = vld [vmem:[%s416 + $0x28] sm:$0xf]
        %v447 = vld [vmem:[%s416 + $0x2c] sm:$0x1]
        %v448 = vld [vmem:[%s416 + $0x30] sm:$0xf]
        %v449 = vld [vmem:[%s416 + $0x34] sm:$0x1]
        %v450 = vld [vmem:[%s416 + $0x38] sm:$0xf]
        %v451 = vld [vmem:[%s416 + $0x3c] sm:$0x1]
        %p452 = scmp.lt.s32.totalorder %s27, 1
        %s453 = scalar_select %p452, %s27, 1
        %s454 = scvt.s32.f32 %s453
        %s455 = ssub.s32 0, %s27
        %p456 = scmp.lt.s32.totalorder %s455, 1
        %s457 = scalar_select %p456, %s455, 1
        %s458 = scvt.s32.f32 %s457
        %v459 = vld [vmem:[%s402] sm:$0xf]
        %v460 = vld [vmem:[%s402 + $0x4] sm:$0x1]
        %v461 = vunpack.c.l.bf16 %v459
        %v462 = vunpack.c.l.bf16 %v460
        %v463 = vstv %s454
        %v464 = vmul.f32 %v461, %v463
        %v465 = vmul.f32 %v462, %v463
        %v466 = vpack.c.bf16 %v465, %v464
        %v467 = vld [vmem:[%s430] sm:$0xf]
        %v468 = vld [vmem:[%s430 + $0x4] sm:$0x1]
        %v469 = vunpack.c.l.bf16 %v467
        %v470 = vunpack.c.l.bf16 %v468
        %v471 = vstv %s458
        %v472 = vmul.f32 %v469, %v471
        %v473 = vmul.f32 %v470, %v471
        %v474 = vpack.c.bf16 %v473, %v472
        %v491 = vunpack.c.l.b16 %v436
        %v492 = vunpack.c.l.b16 %v437
        %v493 = vunpack.c.l.b16 %v438
        %v494 = vunpack.c.l.b16 %v439
        %v495 = vunpack.c.l.b16 %v440
        %v496 = vunpack.c.l.b16 %v441
        %v497 = vunpack.c.l.b16 %v442
        %v498 = vunpack.c.l.b16 %v443
        %v499 = vunpack.c.l.b16 %v444
        %v500 = vunpack.c.l.b16 %v445
        %v501 = vunpack.c.l.b16 %v446
        %v502 = vunpack.c.l.b16 %v447
        %v503 = vunpack.c.l.b16 %v448
        %v504 = vunpack.c.l.b16 %v449
        %v505 = vunpack.c.l.b16 %v450
        %v506 = vunpack.c.l.b16 %v451
        %v507 = vpack.c.b16 %v492, %v491
        %v508 = vpack.c.b16 %v494, %v493
        %v509 = vpack.c.b16 %v496, %v495
        %v510 = vpack.c.b16 %v498, %v497
        %v511 = vpack.c.b16 %v500, %v499
        %v512 = vpack.c.b16 %v502, %v501
        %v513 = vpack.c.b16 %v504, %v503
        %v514 = vpack.c.b16 %v506, %v505
        %515 = vrot.lane.b32.xlu0 %v507, 64
        %v516 = vpop.permute.xlu0 %515
        %517 = vrot.lane.b32.xlu0 %v508, 64
        %v518 = vpop.permute.xlu0 %517
        %519 = vrot.lane.b32.xlu0 %v509, 64
        %v520 = vpop.permute.xlu0 %519
        %521 = vrot.lane.b32.xlu0 %v510, 64
        %v522 = vpop.permute.xlu0 %521
        %523 = vrot.lane.b32.xlu0 %v511, 64
        %v524 = vpop.permute.xlu0 %523
        %525 = vrot.lane.b32.xlu0 %v512, 64
        %v526 = vpop.permute.xlu0 %525
        %527 = vrot.lane.b32.xlu0 %v513, 64
        %v528 = vpop.permute.xlu0 %527
        %529 = vrot.lane.b32.xlu0 %v514, 64
        %v530 = vpop.permute.xlu0 %529
        %vm531 = vcmask 523264
        %v534 = vsel %vm531, %v466, %v516
        %v537 = vsel %vm531, %v507, %v518
        %v540 = vsel %vm531, %v508, %v520
        %v543 = vsel %vm531, %v509, %v522
        %v546 = vsel %vm531, %v510, %v524
        %v549 = vsel %vm531, %v511, %v526
        %v552 = vsel %vm531, %v512, %v528
        %v555 = vsel %vm531, %v513, %v530
        %v565 = vunpack.c.l.b16 %v534
        %v566 = vunpack.c.l.b16 %v537
        %v567 = vunpack.c.l.b16 %v540
        %v568 = vunpack.c.l.b16 %v543
        %v569 = vunpack.c.l.b16 %v546
        %v570 = vunpack.c.l.b16 %v549
        %v571 = vunpack.c.l.b16 %v552
        %v572 = vunpack.c.l.b16 %v555
        %v573 = vunpack.c.l.b16 %v474
        %v574 = vld [vmem:[%s3] sm:$0xf]
        %v575 = vld [vmem:[%s3 + $0x4] sm:$0xf]
        %v576 = vld [vmem:[%s3 + $0x8] sm:$0xf]
        %v577 = vld [vmem:[%s3 + $0xc] sm:$0xf]
        %v578 = vld [vmem:[%s3 + $0x10] sm:$0xf]
        %v579 = vld [vmem:[%s3 + $0x14] sm:$0xf]
        %v580 = vld [vmem:[%s3 + $0x18] sm:$0xf]
        %v581 = vld [vmem:[%s3 + $0x1c] sm:$0xf]
        %v582 = vld [vmem:[%s3 + $0x20] sm:$0xf]
        %v583 = vld [vmem:[%s3 + $0x24] sm:$0xf]
        %v584 = vld [vmem:[%s3 + $0x28] sm:$0xf]
        %v585 = vld [vmem:[%s3 + $0x2c] sm:$0xf]
        %v586 = vld [vmem:[%s3 + $0x30] sm:$0xf]
        %v587 = vld [vmem:[%s3 + $0x34] sm:$0xf]
        %v588 = vld [vmem:[%s3 + $0x38] sm:$0xf]
        %v589 = vld [vmem:[%s3 + $0x3c] sm:$0xf]
        %v590 = vld [vmem:[%s3 + $0x40] sm:$0xf]
        %v591 = vld [vmem:[%s3 + $0x44] sm:$0xf]
        %v592 = vld [vmem:[%s3 + $0x48] sm:$0xf]
        %v593 = vld [vmem:[%s3 + $0x4c] sm:$0xf]
        %v594 = vld [vmem:[%s3 + $0x50] sm:$0xf]
        %v595 = vld [vmem:[%s3 + $0x54] sm:$0xf]
        %v596 = vld [vmem:[%s3 + $0x58] sm:$0xf]
        %v597 = vld [vmem:[%s3 + $0x5c] sm:$0xf]
        %v598 = vunpack.c.h.b16 %v534
        %v599 = vunpack.c.h.b16 %v537
        %v600 = vunpack.c.h.b16 %v540
        %v601 = vunpack.c.h.b16 %v543
        %v602 = vunpack.c.h.b16 %v546
        %v603 = vunpack.c.h.b16 %v549
        %v604 = vunpack.c.h.b16 %v552
        %v605 = vunpack.c.h.b16 %v555
        %v606 = vunpack.c.h.b16 %v474
        %v607 = vpack.c.b16 %v493, %v565
        %v608 = vpack.c.b16 %v494, %v598
        %v609 = vpack.c.b16 %v495, %v566
        %v610 = vpack.c.b16 %v496, %v599
        %v611 = vpack.c.b16 %v497, %v567
        %v612 = vpack.c.b16 %v498, %v600
        %v613 = vpack.c.b16 %v499, %v568
        %v614 = vpack.c.b16 %v500, %v601
        %v615 = vpack.c.b16 %v501, %v569
        %v616 = vpack.c.b16 %v502, %v602
        %v617 = vpack.c.b16 %v503, %v570
        %v618 = vpack.c.b16 %v504, %v603
        %v619 = vpack.c.b16 %v505, %v571
        %v620 = vpack.c.b16 %v506, %v604
        %v621 = vpack.c.b16 %v573, %v572
        %v622 = vpack.c.b16 %v606, %v605
        %vm623 = vsmask.f32 3328
        %vm624 = vsmask.f32 7440
        %vm625 = vmor %vm623, %vm624
        %v627 = vshrl.u32 %v607, 16
        %v629 = vrot.slane %v627, 4
        %v630 = vshll.u32 %v607, 16
        %v632 = vrot.slane %v630, 5
        %v633 = vor.u32 %v629, %v632
        %v634 = vrot.slane %v633, 4
        %v636 = vshll.u32 %v608, 16
        %v638 = vrot.slane %v636, 5
        %v639 = vsel %vm625, %v634, %v638
        %v641 = vshrl.u32 %v609, 16
        %v643 = vrot.slane %v641, 4
        %v644 = vshll.u32 %v609, 16
        %v646 = vrot.slane %v644, 5
        %v647 = vor.u32 %v643, %v646
        %v648 = vrot.slane %v647, 4
        %v650 = vshll.u32 %v610, 16
        %v652 = vrot.slane %v650, 5
        %v653 = vsel %vm625, %v648, %v652
        %v655 = vshrl.u32 %v611, 16
        %v657 = vrot.slane %v655, 4
        %v658 = vshll.u32 %v611, 16
        %v660 = vrot.slane %v658, 5
        %v661 = vor.u32 %v657, %v660
        %v662 = vrot.slane %v661, 4
        %v664 = vshll.u32 %v612, 16
        %v666 = vrot.slane %v664, 5
        %v667 = vsel %vm625, %v662, %v666
        %v669 = vshrl.u32 %v613, 16
        %v671 = vrot.slane %v669, 4
        %v672 = vshll.u32 %v613, 16
        %v674 = vrot.slane %v672, 5
        %v675 = vor.u32 %v671, %v674
        %v676 = vrot.slane %v675, 4
        %v678 = vshll.u32 %v614, 16
        %v680 = vrot.slane %v678, 5
        %v681 = vsel %vm625, %v676, %v680
        %v683 = vshrl.u32 %v615, 16
        %v685 = vrot.slane %v683, 4
        %v686 = vshll.u32 %v615, 16
        %v688 = vrot.slane %v686, 5
        %v689 = vor.u32 %v685, %v688
        %v690 = vrot.slane %v689, 4
        %v692 = vshll.u32 %v616, 16
        %v694 = vrot.slane %v692, 5
        %v695 = vsel %vm625, %v690, %v694
        %v697 = vshrl.u32 %v617, 16
        %v699 = vrot.slane %v697, 4
        %v700 = vshll.u32 %v617, 16
        %v702 = vrot.slane %v700, 5
        %v703 = vor.u32 %v699, %v702
        %v704 = vrot.slane %v703, 4
        %v706 = vshll.u32 %v618, 16
        %v708 = vrot.slane %v706, 5
        %v709 = vsel %vm625, %v704, %v708
        %v711 = vshrl.u32 %v619, 16
        %v713 = vrot.slane %v711, 4
        %v714 = vshll.u32 %v619, 16
        %v716 = vrot.slane %v714, 5
        %v717 = vor.u32 %v713, %v716
        %v718 = vrot.slane %v717, 4
        %v720 = vshll.u32 %v620, 16
        %v722 = vrot.slane %v720, 5
        %v723 = vsel %vm625, %v718, %v722
        %v725 = vshrl.u32 %v621, 16
        %v727 = vrot.slane %v725, 4
        %v728 = vshll.u32 %v621, 16
        %v730 = vrot.slane %v728, 5
        %v731 = vor.u32 %v727, %v730
        %v732 = vrot.slane %v731, 4
        %v734 = vshll.u32 %v622, 16
        %v736 = vrot.slane %v734, 5
        %v737 = vsel %vm625, %v732, %v736
        %s738 = scalar_lea.vmem %s3, 96
        %v739 = vld [vmem:[%s738] sm:$0xf]
        %v740 = vld [vmem:[%s738 + $0x4] sm:$0xf]
        %v741 = vld [vmem:[%s738 + $0x8] sm:$0xf]
        %v742 = vld [vmem:[%s738 + $0xc] sm:$0xf]
        %v743 = vld [vmem:[%s738 + $0x10] sm:$0xf]
        %v744 = vld [vmem:[%s738 + $0x14] sm:$0xf]
        %v745 = vld [vmem:[%s738 + $0x18] sm:$0xf]
        %v746 = vld [vmem:[%s738 + $0x1c] sm:$0xf]
        %v747 = vld [vmem:[%s738 + $0x20] sm:$0xf]
        %v748 = vld [vmem:[%s738 + $0x24] sm:$0xf]
        %v749 = vld [vmem:[%s738 + $0x28] sm:$0xf]
        %v750 = vld [vmem:[%s738 + $0x2c] sm:$0xf]
        %v751 = vld [vmem:[%s738 + $0x30] sm:$0xf]
        %v752 = vld [vmem:[%s738 + $0x34] sm:$0xf]
        %v753 = vld [vmem:[%s738 + $0x38] sm:$0xf]
        %v754 = vld [vmem:[%s738 + $0x3c] sm:$0xf]
        %v755 = vld [vmem:[%s738 + $0x40] sm:$0xf]
        %v756 = vld [vmem:[%s738 + $0x44] sm:$0xf]
        %v757 = vld [vmem:[%s738 + $0x48] sm:$0xf]
        %v758 = vld [vmem:[%s738 + $0x4c] sm:$0xf]
        %v759 = vld [vmem:[%s738 + $0x50] sm:$0xf]
        %v760 = vld [vmem:[%s738 + $0x54] sm:$0xf]
        %v761 = vld [vmem:[%s738 + $0x58] sm:$0xf]
        %v762 = vld [vmem:[%s738 + $0x5c] sm:$0xf]
        %v763 = vunpack.c.l.b16 %v639
        %v764 = vunpack.c.h.b16 %v639
        %v765 = vunpack.c.l.b16 %v653
        %v766 = vunpack.c.h.b16 %v653
        %v767 = vunpack.c.l.b16 %v667
        %v768 = vunpack.c.h.b16 %v667
        %v769 = vunpack.c.l.b16 %v681
        %v770 = vunpack.c.h.b16 %v681
        %v771 = vunpack.c.l.b16 %v695
        %v772 = vunpack.c.h.b16 %v695
        %v773 = vunpack.c.l.b16 %v709
        %v774 = vunpack.c.h.b16 %v709
        %v775 = vunpack.c.l.b16 %v723
        %v776 = vunpack.c.h.b16 %v723
        %v777 = vunpack.c.l.b16 %v737
        %v778 = vunpack.c.h.b16 %v737
        %v779 = vpack.c.b16 %v765, %v763
        %v780 = vpack.c.b16 %v766, %v764
        %v781 = vpack.c.b16 %v769, %v767
        %v782 = vpack.c.b16 %v770, %v768
        %v783 = vpack.c.b16 %v773, %v771
        %v784 = vpack.c.b16 %v774, %v772
        %v785 = vpack.c.b16 %v777, %v775
        %v786 = vpack.c.b16 %v778, %v776
        %v815 = vunpack.c.l.b16 %v739
        %v816 = vunpack.c.l.b16 %v740
        %v817 = vunpack.c.l.b16 %v741
        %v818 = vunpack.c.l.b16 %v742
        %v819 = vunpack.c.l.b16 %v743
        %v820 = vunpack.c.l.b16 %v744
        %v821 = vunpack.c.l.b16 %v745
        %v822 = vunpack.c.l.b16 %v746
        %v823 = vunpack.c.l.b16 %v747
        %v824 = vunpack.c.l.b16 %v748
        %v825 = vunpack.c.l.b16 %v749
        %v826 = vunpack.c.l.b16 %v750
        %v827 = vunpack.c.l.b16 %v751
        %v828 = vunpack.c.l.b16 %v752
        %v829 = vunpack.c.l.b16 %v753
        %v830 = vunpack.c.l.b16 %v754
        %v831 = vunpack.c.l.b16 %v755
        %v832 = vunpack.c.l.b16 %v756
        %v833 = vunpack.c.l.b16 %v757
        %v834 = vunpack.c.l.b16 %v758
        %v835 = vunpack.c.l.b16 %v759
        %v836 = vunpack.c.l.b16 %v760
        %v837 = vunpack.c.l.b16 %v761
        %v838 = vunpack.c.l.b16 %v762
        %v839 = vpack.c.b16 %v816, %v815
        %v840 = vpack.c.b16 %v818, %v817
        %v841 = vpack.c.b16 %v820, %v819
        %v842 = vpack.c.b16 %v822, %v821
        %v843 = vpack.c.b16 %v824, %v823
        %v844 = vpack.c.b16 %v826, %v825
        %v845 = vpack.c.b16 %v828, %v827
        %v846 = vpack.c.b16 %v830, %v829
        %v847 = vpack.c.b16 %v832, %v831
        %v848 = vpack.c.b16 %v834, %v833
        %v849 = vpack.c.b16 %v836, %v835
        %v850 = vpack.c.b16 %v838, %v837
        %v864 = vsel %vm531, %v780, 0
        %v867 = vsel %vm531, %v782, 0
        %v870 = vsel %vm531, %v784, 0
        %v873 = vsel %vm531, %v786, 0
        %875 = vmatprep.subr.bf16.mxu0 0
        %876 = vmatpush1.bf16.msra.mxu0 %v839
        %877 = vmatprep.subr.bf16.mxu0 0
        %878 = vmatpush1.bf16.msra.mxu0 %v840
        %879 = vmatprep.subr.bf16.mxu0 0
        %880 = vmatpush1.bf16.msra.mxu0 %v841
        %881 = vmatprep.subr.bf16.mxu0 0
        %882 = vmatpush1.bf16.msra.mxu0 %v842
        %883 = vmatprep.subr.bf16.mxu0 0
        %884 = vmatpush1.bf16.msra.mxu0 %v843
        %885 = vmatprep.subr.bf16.mxu0 0
        %886 = vmatpush1.bf16.msra.mxu0 %v844
        %887 = vmatprep.subr.bf16.mxu0 0
        %888 = vmatpush1.bf16.msra.mxu0 %v845
        %889 = vmatprep.subr.bf16.mxu0 0
        %890 = vmatpush1.bf16.msra.mxu0 %v846
        %891 = vmatprep.subr.bf16.mxu0 0
        %892 = vmatpush1.bf16.msra.mxu0 %v847
        %893 = vmatprep.subr.bf16.mxu0 0
        %894 = vmatpush1.bf16.msra.mxu0 %v848
        %895 = vmatprep.subr.bf16.mxu0 0
        %896 = vmatpush1.bf16.msra.mxu0 %v849
        %897 = vmatprep.subr.bf16.mxu0 0
        %898 = vmatpush1.bf16.msra.mxu0 %v850
        %899 = vmatprep.subr.bf16.mxu0 0
        %900 = vmatpush1.bf16.msra.mxu0 0
        %901 = vmatprep.subr.bf16.mxu0 0
        %902 = vmatpush1.bf16.msra.mxu0 0
        %903 = vmatprep.subr.bf16.mxu0 0
        %904 = vmatpush1.bf16.msra.mxu0 0
        %905 = vmatprep.subr.bf16.mxu0 0
        %906 = vmatpush1.bf16.msra.mxu0 0
        %907 = vmatprep.mubr.bf16.mxu0 %v864
        %908 = vmatmul.mubr.bf16.gmra.mrb[0].mxu0 %v779
        %v909 = vpop.f32.mrb[0].mxu0
        %v910 = vadd.f32 0.0, %v909
        %v911 = vpop.f32.mrb[0].mxu0
        %v912 = vpop.f32.mrb[0].mxu0
        %v913 = vadd.f32 0.0, %v912
        %v914 = vpop.f32.mrb[0].mxu0
        %915 = vmatprep.mubr.bf16.mxu0 %v867
        %916 = vmatmul.mubr.bf16.gmra.mrb[0].mxu0 %v781
        %v917 = vpop.f32.mrb[0].mxu0
        %v918 = vadd.f32 0.0, %v917
        %v919 = vpop.f32.mrb[0].mxu0
        %v920 = vpop.f32.mrb[0].mxu0
        %v921 = vadd.f32 0.0, %v920
        %v922 = vpop.f32.mrb[0].mxu0
        %923 = vmatprep.mubr.bf16.mxu0 %v870
        %924 = vmatmul.mubr.bf16.gmra.mrb[0].mxu0 %v783
        %v925 = vpop.f32.mrb[0].mxu0
        %v926 = vadd.f32 0.0, %v925
        %v927 = vpop.f32.mrb[0].mxu0
        %v928 = vpop.f32.mrb[0].mxu0
        %v929 = vadd.f32 0.0, %v928
        %v930 = vpop.f32.mrb[0].mxu0
        %931 = vmatprep.mubr.bf16.mxu0 %v873
        %932 = vmatmul.mubr.bf16.gmra.mrb[0].mxu0 %v785
        %v933 = vpop.f32.mrb[0].mxu0
        %v934 = vadd.f32 0.0, %v933
        %v935 = vpop.f32.mrb[0].mxu0
        %v936 = vpop.f32.mrb[0].mxu0
        %v937 = vadd.f32 0.0, %v936
        %v938 = vpop.f32.mrb[0].mxu0
        %939 = vdwg.mxu0
        %v940 = vpack.c.b16 %v566, %v565
        %v941 = vpack.c.b16 %v495, %v493
        %v942 = vpack.c.b16 %v568, %v567
        %v943 = vpack.c.b16 %v499, %v497
        %v944 = vpack.c.b16 %v570, %v569
        %v945 = vpack.c.b16 %v503, %v501
        %v946 = vpack.c.b16 %v572, %v571
        %v947 = vpack.c.b16 %v573, %v505
        %v976 = vunpack.c.l.b16 %v574
        %v977 = vunpack.c.l.b16 %v575
        %v978 = vunpack.c.l.b16 %v576
        %v979 = vunpack.c.l.b16 %v577
        %v980 = vunpack.c.l.b16 %v578
        %v981 = vunpack.c.l.b16 %v579
        %v982 = vunpack.c.l.b16 %v580
        %v983 = vunpack.c.l.b16 %v581
        %v984 = vunpack.c.l.b16 %v582
        %v985 = vunpack.c.l.b16 %v583
        %v986 = vunpack.c.l.b16 %v584
        %v987 = vunpack.c.l.b16 %v585
        %v988 = vunpack.c.l.b16 %v586
        %v989 = vunpack.c.l.b16 %v587
        %v990 = vunpack.c.l.b16 %v588
        %v991 = vunpack.c.l.b16 %v589
        %v992 = vunpack.c.l.b16 %v590
        %v993 = vunpack.c.l.b16 %v591
        %v994 = vunpack.c.l.b16 %v592
        %v995 = vunpack.c.l.b16 %v593
        %v996 = vunpack.c.l.b16 %v594
        %v997 = vunpack.c.l.b16 %v595
        %v998 = vunpack.c.l.b16 %v596
        %v999 = vunpack.c.l.b16 %v597
        %v1000 = vpack.c.b16 %v977, %v976
        %v1001 = vpack.c.b16 %v979, %v978
        %v1002 = vpack.c.b16 %v981, %v980
        %v1003 = vpack.c.b16 %v983, %v982
        %v1004 = vpack.c.b16 %v985, %v984
        %v1005 = vpack.c.b16 %v987, %v986
        %v1006 = vpack.c.b16 %v989, %v988
        %v1007 = vpack.c.b16 %v991, %v990
        %v1008 = vpack.c.b16 %v993, %v992
        %v1009 = vpack.c.b16 %v995, %v994
        %v1010 = vpack.c.b16 %v997, %v996
        %v1011 = vpack.c.b16 %v999, %v998
        %v1025 = vsel %vm531, %v941, 0
        %v1028 = vsel %vm531, %v943, 0
        %v1031 = vsel %vm531, %v945, 0
        %v1034 = vsel %vm531, %v947, 0
        %1036 = vmatprep.subr.bf16.mxu0 0
        %1037 = vmatpush1.bf16.msra.mxu0 %v1000
        %1038 = vmatprep.subr.bf16.mxu0 0
        %1039 = vmatpush1.bf16.msra.mxu0 %v1001
        %1040 = vmatprep.subr.bf16.mxu0 0
        %1041 = vmatpush1.bf16.msra.mxu0 %v1002
        %1042 = vmatprep.subr.bf16.mxu0 0
        %1043 = vmatpush1.bf16.msra.mxu0 %v1003
        %1044 = vmatprep.subr.bf16.mxu0 0
        %1045 = vmatpush1.bf16.msra.mxu0 %v1004
        %1046 = vmatprep.subr.bf16.mxu0 0
        %1047 = vmatpush1.bf16.msra.mxu0 %v1005
        %1048 = vmatprep.subr.bf16.mxu0 0
        %1049 = vmatpush1.bf16.msra.mxu0 %v1006
        %1050 = vmatprep.subr.bf16.mxu0 0
        %1051 = vmatpush1.bf16.msra.mxu0 %v1007
        %1052 = vmatprep.subr.bf16.mxu0 0
        %1053 = vmatpush1.bf16.msra.mxu0 %v1008
        %1054 = vmatprep.subr.bf16.mxu0 0
        %1055 = vmatpush1.bf16.msra.mxu0 %v1009
        %1056 = vmatprep.subr.bf16.mxu0 0
        %1057 = vmatpush1.bf16.msra.mxu0 %v1010
        %1058 = vmatprep.subr.bf16.mxu0 0
        %1059 = vmatpush1.bf16.msra.mxu0 %v1011
        %1060 = vmatprep.subr.bf16.mxu0 0
        %1061 = vmatpush1.bf16.msra.mxu0 0
        %1062 = vmatprep.subr.bf16.mxu0 0
        %1063 = vmatpush1.bf16.msra.mxu0 0
        %1064 = vmatprep.subr.bf16.mxu0 0
        %1065 = vmatpush1.bf16.msra.mxu0 0
        %1066 = vmatprep.subr.bf16.mxu0 0
        %1067 = vmatpush1.bf16.msra.mxu0 0
        %1068 = vmatprep.mubr.bf16.mxu0 %v1025
        %1069 = vmatmul.mubr.bf16.gmra.mrb[0].mxu0 %v940
        %v1070 = vpop.f32.mrb[0].mxu0
        %v1071 = vadd.f32 %v910, %v1070
        %v1072 = vpop.f32.mrb[0].mxu0
        %v1073 = vpop.f32.mrb[0].mxu0
        %v1074 = vadd.f32 %v913, %v1073
        %v1075 = vpop.f32.mrb[0].mxu0
        %1076 = vmatprep.mubr.bf16.mxu0 %v1028
        %1077 = vmatmul.mubr.bf16.gmra.mrb[0].mxu0 %v942
        %v1078 = vpop.f32.mrb[0].mxu0
        %v1079 = vadd.f32 %v918, %v1078
        %v1080 = vpop.f32.mrb[0].mxu0
        %v1081 = vpop.f32.mrb[0].mxu0
        %v1082 = vadd.f32 %v921, %v1081
        %v1083 = vpop.f32.mrb[0].mxu0
        %1084 = vmatprep.mubr.bf16.mxu0 %v1031
        %1085 = vmatmul.mubr.bf16.gmra.mrb[0].mxu0 %v944
        %v1086 = vpop.f32.mrb[0].mxu0
        %v1087 = vadd.f32 %v926, %v1086
        %v1088 = vpop.f32.mrb[0].mxu0
        %v1089 = vpop.f32.mrb[0].mxu0
        %v1090 = vadd.f32 %v929, %v1089
        %v1091 = vpop.f32.mrb[0].mxu0
        %1092 = vmatprep.mubr.bf16.mxu0 %v1034
        %1093 = vmatmul.mubr.bf16.gmra.mrb[0].mxu0 %v946
        %v1094 = vpop.f32.mrb[0].mxu0
        %v1095 = vadd.f32 %v934, %v1094
        %v1096 = vpop.f32.mrb[0].mxu0
        %v1097 = vpop.f32.mrb[0].mxu0
        %v1098 = vadd.f32 %v937, %v1097
        %v1099 = vpop.f32.mrb[0].mxu0
        %1100 = vdwg.mxu0
        %vm1101 = vcmask 1042432
        %vm1102 = vcmask 1046532
        %vm1103 = vmor %vm1101, %vm1102
        %v1104 = vrot.slane %v607, 5
        %v1105 = vrot.slane %v1104, 4
        %v1106 = vrot.slane %v608, 5
        %v1107 = vsel %vm1103, %v1105, %v1106
        %v1108 = vrot.slane %v609, 5
        %v1109 = vrot.slane %v1108, 4
        %v1110 = vrot.slane %v610, 5
        %v1111 = vsel %vm1103, %v1109, %v1110
        %v1112 = vrot.slane %v611, 5
        %v1113 = vrot.slane %v1112, 4
        %v1114 = vrot.slane %v612, 5
        %v1115 = vsel %vm1103, %v1113, %v1114
        %v1116 = vrot.slane %v613, 5
        %v1117 = vrot.slane %v1116, 4
        %v1118 = vrot.slane %v614, 5
        %v1119 = vsel %vm1103, %v1117, %v1118
        %v1120 = vrot.slane %v615, 5
        %v1121 = vrot.slane %v1120, 4
        %v1122 = vrot.slane %v616, 5
        %v1123 = vsel %vm1103, %v1121, %v1122
        %v1124 = vrot.slane %v617, 5
        %v1125 = vrot.slane %v1124, 4
        %v1126 = vrot.slane %v618, 5
        %v1127 = vsel %vm1103, %v1125, %v1126
        %v1128 = vrot.slane %v619, 5
        %v1129 = vrot.slane %v1128, 4
        %v1130 = vrot.slane %v620, 5
        %v1131 = vsel %vm1103, %v1129, %v1130
        %v1132 = vrot.slane %v621, 5
        %v1133 = vrot.slane %v1132, 4
        %v1134 = vrot.slane %v622, 5
        %v1135 = vsel %vm1103, %v1133, %v1134
        %s1136 = scalar_lea.vmem %s3, 192
        %v1137 = vld [vmem:[%s1136] sm:$0xf]
        %v1138 = vld [vmem:[%s1136 + $0x4] sm:$0xf]
        %v1139 = vld [vmem:[%s1136 + $0x8] sm:$0xf]
        %v1140 = vld [vmem:[%s1136 + $0xc] sm:$0xf]
        %v1141 = vld [vmem:[%s1136 + $0x10] sm:$0xf]
        %v1142 = vld [vmem:[%s1136 + $0x14] sm:$0xf]
        %v1143 = vld [vmem:[%s1136 + $0x18] sm:$0xf]
        %v1144 = vld [vmem:[%s1136 + $0x1c] sm:$0xf]
        %v1145 = vld [vmem:[%s1136 + $0x20] sm:$0xf]
        %v1146 = vld [vmem:[%s1136 + $0x24] sm:$0xf]
        %v1147 = vld [vmem:[%s1136 + $0x28] sm:$0xf]
        %v1148 = vld [vmem:[%s1136 + $0x2c] sm:$0xf]
        %v1149 = vld [vmem:[%s1136 + $0x30] sm:$0xf]
        %v1150 = vld [vmem:[%s1136 + $0x34] sm:$0xf]
        %v1151 = vld [vmem:[%s1136 + $0x38] sm:$0xf]
        %v1152 = vld [vmem:[%s1136 + $0x3c] sm:$0xf]
        %v1153 = vld [vmem:[%s1136 + $0x40] sm:$0xf]
        %v1154 = vld [vmem:[%s1136 + $0x44] sm:$0xf]
        %v1155 = vld [vmem:[%s1136 + $0x48] sm:$0xf]
        %v1156 = vld [vmem:[%s1136 + $0x4c] sm:$0xf]
        %v1157 = vld [vmem:[%s1136 + $0x50] sm:$0xf]
        %v1158 = vld [vmem:[%s1136 + $0x54] sm:$0xf]
        %v1159 = vld [vmem:[%s1136 + $0x58] sm:$0xf]
        %v1160 = vld [vmem:[%s1136 + $0x5c] sm:$0xf]
        %v1161 = vunpack.c.l.b16 %v1107
        %v1162 = vunpack.c.h.b16 %v1107
        %v1163 = vunpack.c.l.b16 %v1111
        %v1164 = vunpack.c.h.b16 %v1111
        %v1165 = vunpack.c.l.b16 %v1115
        %v1166 = vunpack.c.h.b16 %v1115
        %v1167 = vunpack.c.l.b16 %v1119
        %v1168 = vunpack.c.h.b16 %v1119
        %v1169 = vunpack.c.l.b16 %v1123
        %v1170 = vunpack.c.h.b16 %v1123
        %v1171 = vunpack.c.l.b16 %v1127
        %v1172 = vunpack.c.h.b16 %v1127
        %v1173 = vunpack.c.l.b16 %v1131
        %v1174 = vunpack.c.h.b16 %v1131
        %v1175 = vunpack.c.l.b16 %v1135
        %v1176 = vunpack.c.h.b16 %v1135
        %v1177 = vpack.c.b16 %v1163, %v1161
        %v1178 = vpack.c.b16 %v1164, %v1162
        %v1179 = vpack.c.b16 %v1167, %v1165
        %v1180 = vpack.c.b16 %v1168, %v1166
        %v1181 = vpack.c.b16 %v1171, %v1169
        %v1182 = vpack.c.b16 %v1172, %v1170
        %v1183 = vpack.c.b16 %v1175, %v1173
        %v1184 = vpack.c.b16 %v1176, %v1174
        %v1213 = vunpack.c.l.b16 %v1137
        %v1214 = vunpack.c.l.b16 %v1138
        %v1215 = vunpack.c.l.b16 %v1139
        %v1216 = vunpack.c.l.b16 %v1140
        %v1217 = vunpack.c.l.b16 %v1141
        %v1218 = vunpack.c.l.b16 %v1142
        %v1219 = vunpack.c.l.b16 %v1143
        %v1220 = vunpack.c.l.b16 %v1144
        %v1221 = vunpack.c.l.b16 %v1145
        %v1222 = vunpack.c.l.b16 %v1146
        %v1223 = vunpack.c.l.b16 %v1147
        %v1224 = vunpack.c.l.b16 %v1148
        %v1225 = vunpack.c.l.b16 %v1149
        %v1226 = vunpack.c.l.b16 %v1150
        %v1227 = vunpack.c.l.b16 %v1151
        %v1228 = vunpack.c.l.b16 %v1152
        %v1229 = vunpack.c.l.b16 %v1153
        %v1230 = vunpack.c.l.b16 %v1154
        %v1231 = vunpack.c.l.b16 %v1155
        %v1232 = vunpack.c.l.b16 %v1156
        %v1233 = vunpack.c.l.b16 %v1157
        %v1234 = vunpack.c.l.b16 %v1158
        %v1235 = vunpack.c.l.b16 %v1159
        %v1236 = vunpack.c.l.b16 %v1160
        %v1237 = vpack.c.b16 %v1214, %v1213
        %v1238 = vpack.c.b16 %v1216, %v1215
        %v1239 = vpack.c.b16 %v1218, %v1217
        %v1240 = vpack.c.b16 %v1220, %v1219
        %v1241 = vpack.c.b16 %v1222, %v1221
        %v1242 = vpack.c.b16 %v1224, %v1223
        %v1243 = vpack.c.b16 %v1226, %v1225
        %v1244 = vpack.c.b16 %v1228, %v1227
        %v1245 = vpack.c.b16 %v1230, %v1229
        %v1246 = vpack.c.b16 %v1232, %v1231
        %v1247 = vpack.c.b16 %v1234, %v1233
        %v1248 = vpack.c.b16 %v1236, %v1235
        %v1262 = vsel %vm531, %v1178, 0
        %v1265 = vsel %vm531, %v1180, 0
        %v1268 = vsel %vm531, %v1182, 0
        %v1271 = vsel %vm531, %v1184, 0
        %1273 = vmatprep.subr.bf16.mxu0 0
        %1274 = vmatpush1.bf16.msra.mxu0 %v1237
        %1275 = vmatprep.subr.bf16.mxu0 0
        %1276 = vmatpush1.bf16.msra.mxu0 %v1238
        %1277 = vmatprep.subr.bf16.mxu0 0
        %1278 = vmatpush1.bf16.msra.mxu0 %v1239
        %1279 = vmatprep.subr.bf16.mxu0 0
        %1280 = vmatpush1.bf16.msra.mxu0 %v1240
        %1281 = vmatprep.subr.bf16.mxu0 0
        %1282 = vmatpush1.bf16.msra.mxu0 %v1241
        %1283 = vmatprep.subr.bf16.mxu0 0
        %1284 = vmatpush1.bf16.msra.mxu0 %v1242
        %1285 = vmatprep.subr.bf16.mxu0 0
        %1286 = vmatpush1.bf16.msra.mxu0 %v1243
        %1287 = vmatprep.subr.bf16.mxu0 0
        %1288 = vmatpush1.bf16.msra.mxu0 %v1244
        %1289 = vmatprep.subr.bf16.mxu0 0
        %1290 = vmatpush1.bf16.msra.mxu0 %v1245
        %1291 = vmatprep.subr.bf16.mxu0 0
        %1292 = vmatpush1.bf16.msra.mxu0 %v1246
        %1293 = vmatprep.subr.bf16.mxu0 0
        %1294 = vmatpush1.bf16.msra.mxu0 %v1247
        %1295 = vmatprep.subr.bf16.mxu0 0
        %1296 = vmatpush1.bf16.msra.mxu0 %v1248
        %1297 = vmatprep.subr.bf16.mxu0 0
        %1298 = vmatpush1.bf16.msra.mxu0 0
        %1299 = vmatprep.subr.bf16.mxu0 0
        %1300 = vmatpush1.bf16.msra.mxu0 0
        %1301 = vmatprep.subr.bf16.mxu0 0
        %1302 = vmatpush1.bf16.msra.mxu0 0
        %1303 = vmatprep.subr.bf16.mxu0 0
        %1304 = vmatpush1.bf16.msra.mxu0 0
        %1305 = vmatprep.mubr.bf16.mxu0 %v1262
        %1306 = vmatmul.mubr.bf16.gmra.mrb[0].mxu0 %v1177
        %v1307 = vpop.f32.mrb[0].mxu0
        %v1308 = vadd.f32 0.0, %v1307
        %v1309 = vpop.f32.mrb[0].mxu0
        %v1310 = vpop.f32.mrb[0].mxu0
        %v1311 = vadd.f32 0.0, %v1310
        %v1312 = vpop.f32.mrb[0].mxu0
        %1313 = vmatprep.mubr.bf16.mxu0 %v1265
        %1314 = vmatmul.mubr.bf16.gmra.mrb[0].mxu0 %v1179
        %v1315 = vpop.f32.mrb[0].mxu0
        %v1316 = vadd.f32 0.0, %v1315
        %v1317 = vpop.f32.mrb[0].mxu0
        %v1318 = vpop.f32.mrb[0].mxu0
        %v1319 = vadd.f32 0.0, %v1318
        %v1320 = vpop.f32.mrb[0].mxu0
        %1321 = vmatprep.mubr.bf16.mxu0 %v1268
        %1322 = vmatmul.mubr.bf16.gmra.mrb[0].mxu0 %v1181
        %v1323 = vpop.f32.mrb[0].mxu0
        %v1324 = vadd.f32 0.0, %v1323
        %v1325 = vpop.f32.mrb[0].mxu0
        %v1326 = vpop.f32.mrb[0].mxu0
        %v1327 = vadd.f32 0.0, %v1326
        %v1328 = vpop.f32.mrb[0].mxu0
        %1329 = vmatprep.mubr.bf16.mxu0 %v1271
        %1330 = vmatmul.mubr.bf16.gmra.mrb[0].mxu0 %v1183
        %v1331 = vpop.f32.mrb[0].mxu0
        %v1332 = vadd.f32 0.0, %v1331
        %v1333 = vpop.f32.mrb[0].mxu0
        %v1334 = vpop.f32.mrb[0].mxu0
        %v1335 = vadd.f32 0.0, %v1334
        %v1336 = vpop.f32.mrb[0].mxu0
        %1337 = vdwg.mxu0
        %v1338 = vadd.f32 %v1071, %v1308
        %v1339 = vadd.f32 %v1074, %v1311
        %v1340 = vadd.f32 %v1079, %v1316
        %v1341 = vadd.f32 %v1082, %v1319
        %v1342 = vadd.f32 %v1087, %v1324
        %v1343 = vadd.f32 %v1090, %v1327
        %v1344 = vadd.f32 %v1095, %v1332
        %v1345 = vadd.f32 %v1098, %v1335
        %v1346 = vld [vmem:[%s4] sm:$0x1]
        %v1348 = vlaneseq
        %v1349 = vshrl.u32 %v1348, 7
        %v1350 = vsub.s32 0, %v1349
        %v1351 = vrot.slane %v1346, %v1350
        %v1353 = vadd.f32 %v1338, %v1351
        %v1354 = vadd.f32 %v1339, %v1351
        %v1355 = vadd.f32 %v1340, %v1351
        %v1356 = vadd.f32 %v1341, %v1351
        %v1357 = vadd.f32 %v1342, %v1351
        %v1358 = vadd.f32 %v1343, %v1351
        %v1359 = vadd.f32 %v1344, %v1351
        %v1360 = vadd.f32 %v1345, %v1351
        %v1361 = vmax.f32 %v1353, %v1354
        %v1362 = vmax.f32 %v1355, %v1356
        %v1363 = vmax.f32 %v1357, %v1358
        %v1364 = vmax.f32 %v1359, %v1360
        %v1369 = vcombine.high %v1361, %v1361
        %v1371 = vunpack.c.l.s4 1983009808
        %v1372 = vunpack.c.0.s8 %v1371
        %v1373 = vlaneseq
        %v1374 = vshrl.u32 %v1373, 7
        %v1375 = vsub.s32 %v1372, %v1374
        %v1376 = vrot.slane %v1361, %v1375
        %v1378 = vunpack.c.l.s4 1983009808
        %v1379 = vunpack.c.0.s8 %v1378
        %v1380 = vlaneseq
        %v1381 = vshrl.u32 %v1380, 7
        %v1382 = vsub.s32 %v1379, %v1381
        %v1383 = vrot.slane %v1369, %v1382
        %v1384 = vcombine.high %v1376, %v1376
        %v1385 = vcombine.high %v1383, %v1383
        %v1386 = vcombine.high %v1362, %v1362
        %v1388 = vunpack.c.l.s4 1983009808
        %v1389 = vunpack.c.0.s8 %v1388
        %v1390 = vlaneseq
        %v1391 = vshrl.u32 %v1390, 7
        %v1392 = vsub.s32 %v1389, %v1391
        %v1393 = vrot.slane %v1362, %v1392
        %v1395 = vunpack.c.l.s4 1983009808
        %v1396 = vunpack.c.0.s8 %v1395
        %v1397 = vlaneseq
        %v1398 = vshrl.u32 %v1397, 7
        %v1399 = vsub.s32 %v1396, %v1398
        %v1400 = vrot.slane %v1386, %v1399
        %v1401 = vcombine.high %v1393, %v1393
        %v1402 = vcombine.high %v1400, %v1400
        %v1403 = vcombine.high %v1363, %v1363
        %v1405 = vunpack.c.l.s4 1983009808
        %v1406 = vunpack.c.0.s8 %v1405
        %v1407 = vlaneseq
        %v1408 = vshrl.u32 %v1407, 7
        %v1409 = vsub.s32 %v1406, %v1408
        %v1410 = vrot.slane %v1363, %v1409
        %v1412 = vunpack.c.l.s4 1983009808
        %v1413 = vunpack.c.0.s8 %v1412
        %v1414 = vlaneseq
        %v1415 = vshrl.u32 %v1414, 7
        %v1416 = vsub.s32 %v1413, %v1415
        %v1417 = vrot.slane %v1403, %v1416
        %v1418 = vcombine.high %v1410, %v1410
        %v1419 = vcombine.high %v1417, %v1417
        %v1420 = vcombine.high %v1364, %v1364
        %v1422 = vunpack.c.l.s4 1983009808
        %v1423 = vunpack.c.0.s8 %v1422
        %v1424 = vlaneseq
        %v1425 = vshrl.u32 %v1424, 7
        %v1426 = vsub.s32 %v1423, %v1425
        %v1427 = vrot.slane %v1364, %v1426
        %v1429 = vunpack.c.l.s4 1983009808
        %v1430 = vunpack.c.0.s8 %v1429
        %v1431 = vlaneseq
        %v1432 = vshrl.u32 %v1431, 7
        %v1433 = vsub.s32 %v1430, %v1432
        %v1434 = vrot.slane %v1420, %v1433
        %v1435 = vcombine.high %v1427, %v1427
        %v1436 = vcombine.high %v1434, %v1434
        %v1453 = vrot.slane %v1376, 7
        %v1454 = vrot.slane %v1453, 2
        %v1455 = vrot.slane %v1384, 7
        %v1456 = vrot.slane %v1455, 2
        %v1457 = vrot.slane %v1383, 7
        %v1458 = vrot.slane %v1457, 2
        %v1459 = vrot.slane %v1385, 7
        %v1460 = vrot.slane %v1459, 2
        %v1461 = vrot.slane %v1393, 7
        %v1462 = vrot.slane %v1461, 2
        %v1463 = vrot.slane %v1401, 7
        %v1464 = vrot.slane %v1463, 2
        %v1465 = vrot.slane %v1400, 7
        %v1466 = vrot.slane %v1465, 2
        %v1467 = vrot.slane %v1402, 7
        %v1468 = vrot.slane %v1467, 2
        %v1469 = vrot.slane %v1410, 7
        %v1470 = vrot.slane %v1469, 2
        %v1471 = vrot.slane %v1418, 7
        %v1472 = vrot.slane %v1471, 2
        %v1473 = vrot.slane %v1417, 7
        %v1474 = vrot.slane %v1473, 2
        %v1475 = vrot.slane %v1419, 7
        %v1476 = vrot.slane %v1475, 2
        %v1477 = vrot.slane %v1427, 7
        %v1478 = vrot.slane %v1477, 2
        %v1479 = vrot.slane %v1435, 7
        %v1480 = vrot.slane %v1479, 2
        %v1481 = vrot.slane %v1434, 7
        %v1482 = vrot.slane %v1481, 2
        %v1483 = vrot.slane %v1436, 7
        %v1484 = vrot.slane %v1483, 2
        %v1501 = vmax.f32 %v1376, %v1454
        %v1502 = vmax.f32 %v1384, %v1456
        %v1503 = vmax.f32 %v1383, %v1458
        %v1504 = vmax.f32 %v1385, %v1460
        %v1505 = vmax.f32 %v1393, %v1462
        %v1506 = vmax.f32 %v1401, %v1464
        %v1507 = vmax.f32 %v1400, %v1466
        %v1508 = vmax.f32 %v1402, %v1468
        %v1509 = vmax.f32 %v1410, %v1470
        %v1510 = vmax.f32 %v1418, %v1472
        %v1511 = vmax.f32 %v1417, %v1474
        %v1512 = vmax.f32 %v1419, %v1476
        %v1513 = vmax.f32 %v1427, %v1478
        %v1514 = vmax.f32 %v1435, %v1480
        %v1515 = vmax.f32 %v1434, %v1482
        %v1516 = vmax.f32 %v1436, %v1484
        %v1517 = vld [vmem:[%s5] sm:$0x1]
        %v1519 = vlaneseq
        %v1520 = vshrl.u32 %v1519, 7
        %v1521 = vsub.s32 0, %v1520
        %v1522 = vrot.slane %v1517, %v1521
        %v1524 = vunpack.c.l.s4 1983009808
        %v1525 = vunpack.c.0.s8 %v1524
        %v1526 = vlaneseq
        %v1527 = vshrl.u32 %v1526, 7
        %v1528 = vsub.s32 %v1525, %v1527
        %v1529 = vrot.slane %v1522, %v1528
        %v1530 = vcombine.high %v1529, %v1529
        %v1531 = vrot.slane %v1529, 1
        %v1532 = vrot.slane %v1530, 1
        %v1537 = vmul.f32 %v1501, %v1529
        %v1538 = vmul.f32 %v1502, %v1531
        %v1539 = vmul.f32 %v1503, %v1530
        %v1540 = vmul.f32 %v1504, %v1532
        %v1541 = vmul.f32 %v1505, %v1529
        %v1542 = vmul.f32 %v1506, %v1531
        %v1543 = vmul.f32 %v1507, %v1530
        %v1544 = vmul.f32 %v1508, %v1532
        %v1545 = vmul.f32 %v1509, %v1529
        %v1546 = vmul.f32 %v1510, %v1531
        %v1547 = vmul.f32 %v1511, %v1530
        %v1548 = vmul.f32 %v1512, %v1532
        %v1549 = vmul.f32 %v1513, %v1529
        %v1550 = vmul.f32 %v1514, %v1531
        %v1551 = vmul.f32 %v1515, %v1530
        %v1552 = vmul.f32 %v1516, %v1532
        %v1569 = vlaneseq
        %v1570 = vshrl.u32 %v1569, 7
        %v1571 = vsub.s32 0, %v1570
        %v1572 = vrot.slane %v1537, %v1571
        %v1573 = vlaneseq
        %v1574 = vshrl.u32 %v1573, 7
        %v1575 = vsub.s32 0, %v1574
        %v1576 = vrot.slane %v1538, %v1575
        %v1577 = vlaneseq
        %v1578 = vshrl.u32 %v1577, 7
        %v1579 = vsub.s32 0, %v1578
        %v1580 = vrot.slane %v1539, %v1579
        %v1581 = vlaneseq
        %v1582 = vshrl.u32 %v1581, 7
        %v1583 = vsub.s32 0, %v1582
        %v1584 = vrot.slane %v1540, %v1583
        %v1585 = vlaneseq
        %v1586 = vshrl.u32 %v1585, 7
        %v1587 = vsub.s32 0, %v1586
        %v1588 = vrot.slane %v1541, %v1587
        %v1589 = vlaneseq
        %v1590 = vshrl.u32 %v1589, 7
        %v1591 = vsub.s32 0, %v1590
        %v1592 = vrot.slane %v1542, %v1591
        %v1593 = vlaneseq
        %v1594 = vshrl.u32 %v1593, 7
        %v1595 = vsub.s32 0, %v1594
        %v1596 = vrot.slane %v1543, %v1595
        %v1597 = vlaneseq
        %v1598 = vshrl.u32 %v1597, 7
        %v1599 = vsub.s32 0, %v1598
        %v1600 = vrot.slane %v1544, %v1599
        %v1601 = vlaneseq
        %v1602 = vshrl.u32 %v1601, 7
        %v1603 = vsub.s32 0, %v1602
        %v1604 = vrot.slane %v1545, %v1603
        %v1605 = vlaneseq
        %v1606 = vshrl.u32 %v1605, 7
        %v1607 = vsub.s32 0, %v1606
        %v1608 = vrot.slane %v1546, %v1607
        %v1609 = vlaneseq
        %v1610 = vshrl.u32 %v1609, 7
        %v1611 = vsub.s32 0, %v1610
        %v1612 = vrot.slane %v1547, %v1611
        %v1613 = vlaneseq
        %v1614 = vshrl.u32 %v1613, 7
        %v1615 = vsub.s32 0, %v1614
        %v1616 = vrot.slane %v1548, %v1615
        %v1617 = vlaneseq
        %v1618 = vshrl.u32 %v1617, 7
        %v1619 = vsub.s32 0, %v1618
        %v1620 = vrot.slane %v1549, %v1619
        %v1621 = vlaneseq
        %v1622 = vshrl.u32 %v1621, 7
        %v1623 = vsub.s32 0, %v1622
        %v1624 = vrot.slane %v1550, %v1623
        %v1625 = vlaneseq
        %v1626 = vshrl.u32 %v1625, 7
        %v1627 = vsub.s32 0, %v1626
        %v1628 = vrot.slane %v1551, %v1627
        %v1629 = vlaneseq
        %v1630 = vshrl.u32 %v1629, 7
        %v1631 = vsub.s32 0, %v1630
        %v1632 = vrot.slane %v1552, %v1631
        %vm1633 = vcmask 1041409
        %v1634 = vsel %vm1633, %v1576, %v1572
        %vm1635 = vcmask 1042434
        %v1636 = vsel %vm1635, %v1580, %v1634
        %vm1637 = vcmask 1043459
        %v1638 = vsel %vm1637, %v1584, %v1636
        %v1639 = vsel %vm1633, %v1592, %v1588
        %v1640 = vsel %vm1635, %v1596, %v1639
        %v1641 = vsel %vm1637, %v1600, %v1640
        %v1642 = vsel %vm1633, %v1608, %v1604
        %v1643 = vsel %vm1635, %v1612, %v1642
        %v1644 = vsel %vm1637, %v1616, %v1643
        %v1645 = vsel %vm1633, %v1624, %v1620
        %v1646 = vsel %vm1635, %v1628, %v1645
        %v1647 = vsel %vm1637, %v1632, %v1646
        %vm1652 = vcmask 1043456
        %v1653 = vsel %vm1652, %v1638, 0.0
        %1654 = vadd.xlane.f32.xlu0 %v1653
        %v1655 = vpop.xlane.xlu0 %1654
        %v1656 = vsel %vm1652, %v1641, 0.0
        %1657 = vadd.xlane.f32.xlu0 %v1656
        %v1658 = vpop.xlane.xlu0 %1657
        %v1659 = vsel %vm1652, %v1644, 0.0
        %1660 = vadd.xlane.f32.xlu0 %v1659
        %v1661 = vpop.xlane.xlu0 %1660
        %v1662 = vsel %vm1652, %v1647, 0.0
        %1663 = vadd.xlane.f32.xlu0 %v1662
        %v1664 = vpop.xlane.xlu0 %1663
        %s1665 = sld [smem:[#allocation2]]
        %v1666 = vstv %s1665
        %v1667 = vadd.f32 %v1655, %v1666
        %v1668 = vadd.f32 %v1658, %v1666
        %v1669 = vadd.f32 %v1661, %v1666
        %v1670 = vadd.f32 %v1664, %v1666
        %v1675 = vlaneseq
        %v1676 = vand.u32 %v1675, 127
        %v1677 = vlaneseq
        %v1678 = vshrl.u32 %v1677, 7
        %v1679 = vsub.s32 %v1676, %v1678
        %v1680 = vrot.slane %v1667, %v1679
        %v1681 = vlaneseq
        %v1682 = vshrl.u32 %v1681, 7
        %v1683 = vsub.s32 %v1676, %v1682
        %v1684 = vrot.slane %v1668, %v1683
        %v1685 = vlaneseq
        %v1686 = vshrl.u32 %v1685, 7
        %v1687 = vsub.s32 %v1676, %v1686
        %v1688 = vrot.slane %v1669, %v1687
        %v1689 = vlaneseq
        %v1690 = vshrl.u32 %v1689, 7
        %v1691 = vsub.s32 %v1676, %v1690
        %v1692 = vrot.slane %v1670, %v1691
        %v1693 = vsel %vm1633, %v1684, %v1680
        %v1694 = vsel %vm1635, %v1688, %v1693
        %v1695 = vsel %vm1637, %v1692, %v1694
        %vm1697 = vcmask 27648
        %1698 = vst.msk [vmem:[%s389] sm:$0xf] %vm1697, %v1695
        %s1699 = sand.u32 %s228, 1
        %s1700 = scalar_lea.sflag [#allocation4], %s1699
        %s1701 = sand.u32 %s228, 1
        %s1702 = smul.addr %s1701, 4
        %s1703 = scalar_lea.vmem [#allocation3], %s1702
        // Predicated region
        $region49: #{stereo_depth_prediction.3} parent=47 // pred_check
          %p1704 = pneg %p238
        $region50: #{stereo_depth_prediction.3} parent=47 // pred_check_branch
          %1706 = sbr.rel (%p1704) target = $region52
        $region51: #{stereo_depth_prediction.3} parent=47 // pred_region
          %s1708 = ssub.s32 64, 64
          %1709 = vsyncadd %s1700, %s1708
          %s1710 = sadd.s32 %s27, %s26
          %s1711 = smul.addr %s1710, 64
          %s1712 = scalar_lea.hbm %s7, %s1711
          %s1714 = sshll.u32 %s1703, 4
          %s1715 = int_to_ptr.vmem [resolvable:$true] %s1714
          %1717 = dma.vmem_to_hbm [thread:$0]  %s1715, 64, %s1712, %s1700
        $region52: #{stereo_depth_prediction.3} parent=47 // pred_fallthru
          _
      $region48: #{stereo_depth_prediction.3} parent=5 // pred_fallthru
        _
      %p1718 = scmp.le.s32.totalorder 2, %s17
      // Predicated region
      $region53: #{stereo_depth_prediction.3} parent=5 // pred_check
        %p1719 = pneg %p1718
      $region54: #{stereo_depth_prediction.3} parent=5 // pred_check_branch
        %1721 = sbr.rel (%p1719) target = $region56
      $region55: #{stereo_depth_prediction.3} parent=5 // pred_region
        %s1722 = ssub.s32 %s17, 2
        // Predicated region
        $region57: #{stereo_depth_prediction.3} parent=55 // pred_check
          %p1723 = pneg %p244
        $region58: #{stereo_depth_prediction.3} parent=55 // pred_check_branch
          %1725 = sbr.rel (%p1723) target = $region60
        $region59: #{stereo_depth_prediction.3} parent=55 // pred_region
          %s1726 = sand.u32 %s229, 1
          %s1727 = scalar_lea.sflag [#allocation4], %s1726
          %s1728 = sand.u32 %s229, 1
          %s1729 = smul.addr %s1728, 4
          %s1730 = scalar_lea.vmem [#allocation3], %s1729
          %1731 = dma.done %s1727, 64
        $region60: #{stereo_depth_prediction.3} parent=55 // pred_fallthru
          _
      $region56: #{stereo_depth_prediction.3} parent=5 // pred_fallthru
        _
    $region6: #{stereo_depth_prediction.3} parent=1 // loop_footer
      %s21 = sadd.s32 1, %s17
    $region7: #{stereo_depth_prediction.3} parent=1 // loop_footer_branch
      %16 = sbr.rel target = $region3
    $region8: #{stereo_depth_prediction.3} parent=1 // loop_exit
      _
    %1732 = vsyncpa [#allocation4], 1
    %s1733 = scalar_lea.sflag [#allocation4], 1
    %1734 = vsyncpa %s1733, 1

</llo_original>
